<compile_context>
chip_gen: v5e
topology: v5e:2x2
jax: 0.10.0
libtpu: 0.0.40
codegen_flags: <defaults>
</compile_context>

<pallas_src>
from functools import partial

import jax
import jax.numpy as jnp
import numpy as np
from jax.experimental import pallas as pl
from jax.experimental.pallas import tpu as pltpu


def plastic_rollout_kernel(nsteps_ref, x_ref, yin0_ref, w_hbm, hebb0_hbm,
                           alpha_ref, eta_ref,
                           yout_ref, hebb_out_hbm,
                           w_sc, hebb_sc, y_sc):
    i = pl.program_id(0)
    tb, n = x_ref.shape                      # timesteps per grid step, width
    row_blk = 256 if (n >= 512 and n % 256 == 0) else n

    # Grid step 0: one-shot fetch of the grid-invariant operands into
    # single-buffered VMEM scratch (no pipeline double-buffering for these).
    @pl.when(i == 0)
    def _init():
        pltpu.sync_copy(w_hbm, w_sc)
        pltpu.sync_copy(hebb0_hbm, hebb_sc)
        y_sc[...] = yin0_ref[...]

    alpha = alpha_ref[0]                     # scalar plasticity coefficient (SMEM)
    eta = eta_ref[0]                         # scalar learning rate (SMEM)
    # Number of real (non-padding) timesteps remaining for this time chunk.
    n_valid = nsteps_ref[0] - i * tb

    # Inner recurrence over the TB timesteps of this chunk.  TB is small and
    # static, so the loop is fully unrolled at trace time (all slices static),
    # giving the LLO scheduler full visibility — equivalent to
    # lax.fori_loop(..., unroll=True) but with zero dynamic-indexing risk.
    for j in range(tb):
        @pl.when(j < n_valid)                # skip zero-padded tail steps
        def _step(j=j):
            x = x_ref[j:j + 1, :]            # (1, N) current timestep input
            yin = y_sc[...]                  # (1, N) carried activation
            # pre = yin @ (w + alpha*hebb) == yin@w + alpha*(yin@hebb):
            # two MXU GEMVs, no (N, N) effective-weight temporary.
            pre = (jnp.dot(yin, w_sc[...], preferred_element_type=jnp.float32)
                   + alpha * jnp.dot(yin, hebb_sc[...],
                                     preferred_element_type=jnp.float32))
            # Clamp: wherever the input is nonzero, the output is the input.
            yout = jnp.where(x != 0.0, x, jnp.tanh(pre))       # (1, N)
            yout_ref[j:j + 1, :] = yout
            # Hebbian update (1-eta)*hebb + eta*outer(yin, yout), row-tiled so
            # live ranges stay bounded at large N.  outer as a K=1 MXU
            # contraction (MXU slot otherwise idle).
            for r0 in range(0, n, row_blk):
                outer_blk = jax.lax.dot_general(
                    yin[:, r0:r0 + row_blk], yout, (((0,), (0,)), ((), ())),
                    preferred_element_type=jnp.float32)         # (row_blk, N)
                hebb_sc[r0:r0 + row_blk, :] = (
                    (1.0 - eta) * hebb_sc[r0:r0 + row_blk, :] + eta * outer_blk)
            y_sc[...] = yout

    # Last grid step: write the resident hebb back to HBM exactly once.
    @pl.when(i == pl.num_programs(0) - 1)
    def _finalize():
        pltpu.sync_copy(hebb_sc, hebb_out_hbm)


@partial(jax.jit, static_argnames=("block_t",), donate_argnums=(2,))
def plastic_rollout(x_seq, yin0, hebb0, w, alpha, eta, *, block_t=8):
    """Run T recurrent plastic steps in one fused kernel.

    Args:
      x_seq: (T, N) per-step inputs.
      yin0:  (1, N) initial state.  hebb0: (N, N) initial Hebbian trace
             (donated; its HBM buffer is reused for the returned hebb).
      w: (N, N) weights.  alpha, eta: scalar (homogeneous) parameters.
      block_t: timesteps per grid step (multiple of 8).
    Returns (yout_seq (T, N), final hebb (N, N)).
    """
    T, N = x_seq.shape
    if int(np.prod(jnp.shape(alpha))) != 1:
        raise NotImplementedError("only homogeneous (scalar) alpha is fused")
    TB = int(block_t)
    assert TB % 8 == 0, "block_t must be a multiple of 8 (sublane alignment)"
    num_chunks = -(-T // TB)
    T_pad = num_chunks * TB

    x_pad = jnp.zeros((T_pad, N), jnp.float32).at[:T].set(x_seq.astype(jnp.float32))
    nsteps = jnp.full((1,), T, dtype=jnp.int32)
    alpha_s = jnp.reshape(alpha, (1,)).astype(jnp.float32)
    eta_s = jnp.reshape(eta, (1,)).astype(jnp.float32)

    # VMEM budget: w_sc + hebb_sc (single-buffered scratch) + double-buffered
    # (TB, N) x / yout blocks + small vectors.  Explicit limit so large N also
    # fits v7x's 64 MiB VMEM / clears v5e's 16 MiB default scoped limit.
    vmem_need = 4 * (2 * N * N + 4 * TB * N + 4 * N)
    vmem_limit = int(min(vmem_need + (16 << 20), 127 << 20))

    yout_pad, hebb_final = pl.pallas_call(
        plastic_rollout_kernel,
        out_shape=(
            jax.ShapeDtypeStruct((T_pad, N), jnp.float32),   # per-step yout
            jax.ShapeDtypeStruct((N, N), jnp.float32),       # final hebb
        ),
        grid=(num_chunks,),
        in_specs=[
            pl.BlockSpec(memory_space=pltpu.MemorySpace.SMEM),   # nsteps (T)
            pl.BlockSpec((TB, N), lambda i: (i, 0)),             # x time chunk
            pl.BlockSpec((1, N), lambda i: (0, 0)),              # yin0
            pl.BlockSpec(memory_space=pl.ANY),                   # w (raw HBM)
            pl.BlockSpec(memory_space=pl.ANY),                   # hebb0 (raw HBM)
            pl.BlockSpec(memory_space=pltpu.MemorySpace.SMEM),   # alpha
            pl.BlockSpec(memory_space=pltpu.MemorySpace.SMEM),   # eta
        ],
        out_specs=(
            pl.BlockSpec((TB, N), lambda i: (i, 0)),             # yout time chunk
            pl.BlockSpec(memory_space=pl.ANY),                   # final hebb (HBM)
        ),
        scratch_shapes=[
            pltpu.VMEM((N, N), jnp.float32),   # w, resident / single-buffered
            pltpu.VMEM((N, N), jnp.float32),   # hebb, resident / single-buffered
            pltpu.VMEM((1, N), jnp.float32),   # carried yin
        ],
        input_output_aliases={4: 1},           # hebb0 HBM buffer reused in place
        compiler_params=pltpu.CompilerParams(
            dimension_semantics=("arbitrary",),  # sequential recurrence
            vmem_limit_bytes=vmem_limit),
        cost_estimate=pl.CostEstimate(
            flops=9 * T * N * N,
            transcendentals=T * N,
            bytes_accessed=4 * (3 * N * N + 2 * T * N + N)),
    )(nsteps, x_pad, yin0.astype(jnp.float32), w.astype(jnp.float32),
      hebb0, alpha_s, eta_s)
    return yout_pad[:T], hebb_final


def plastic_forward(x, yin, hebb, w, alpha, eta):
    """Single step (matches Network.forward).  NOTE: `hebb` is donated."""
    yout_seq, new_hebb = plastic_rollout(jnp.reshape(x, (1, -1)), yin, hebb,
                                         w, alpha, eta)
    return yout_seq, new_hebb


def _reference_rollout(x_seq, yin0, hebb0, w, alpha, eta):
    a = jnp.reshape(alpha, (-1,))[0]
    e = jnp.reshape(eta, (-1,))[0]
    yin, hebb = yin0, hebb0
    youts = []
    for t in range(x_seq.shape[0]):
        x = x_seq[t][None, :]
        clamps = (x != 0.0).astype(jnp.float32)
        pre = jnp.dot(yin, w + a * hebb, precision=jax.lax.Precision.HIGHEST)
        yout = jnp.tanh(pre) * (1.0 - clamps) + x * clamps
        hebb = (1.0 - e) * hebb + e * jnp.outer(yin[0], yout[0])
        yin = yout
        youts.append(yout)
    return jnp.concatenate(youts, axis=0), hebb


if __name__ == "__main__":
    params = {"nbneur": 128, "homogenous": 1}
    N = params["nbneur"]
    T = 12   # deliberately not a multiple of block_t=8: exercises padded-step masking

    key = jax.random.PRNGKey(0)
    kw, kin, kmask = jax.random.split(key, 3)

    # Deterministic parameter init mirroring __init__ (homogenous == 1).
    w = 0.01 * jax.random.normal(kw, (N, N), dtype=jnp.float32)
    alpha = 0.01 * jnp.ones((1,), dtype=jnp.float32)
    eta = 0.01 * jnp.ones((1,), dtype=jnp.float32)

    # Sparse per-step inputs (so the clamp path is non-trivial), zero initial
    # state and zero Hebbian trace (initialZeroState / initialZeroHebb).
    mask = (jax.random.uniform(kmask, (T, N)) < 0.25).astype(jnp.float32)
    x_seq = mask * jax.random.normal(kin, (T, N), dtype=jnp.float32)
    yin0 = jnp.zeros((1, N), dtype=jnp.float32)
    hebb0 = jnp.zeros((N, N), dtype=jnp.float32)   # donated to the kernel

    yout_seq, hebb_final = plastic_rollout(x_seq, yin0, hebb0, w, alpha, eta)
    jax.block_until_ready((yout_seq, hebb_final))

    # Cross-check against a pure-JAX per-step reference (fresh hebb buffer,
    # since hebb0 was donated to the kernel).
    ref_y, ref_h = _reference_rollout(x_seq, yin0, jnp.zeros((N, N), jnp.float32),
                                      w, alpha, eta)
    assert np.allclose(np.asarray(yout_seq), np.asarray(ref_y), rtol=1e-5, atol=2e-5)
    assert np.allclose(np.asarray(hebb_final), np.asarray(ref_h), rtol=1e-5, atol=2e-5)

    print("KERNEL_OK")
</pallas_src>

<mosaic_0001>
module attributes {stable_mosaic.version = 11 : i64} {
  func.func @plastic_rollout_kernel(%arg0: i32, %arg1: memref<1xi32, #tpu.memory_space<smem>>, %arg2: memref<8x128xf32, #tpu.memory_space<vmem>>, %arg3: memref<1x128xf32, #tpu.memory_space<vmem>>, %arg4: memref<128x128xf32, #tpu.memory_space<any>>, %arg5: memref<128x128xf32, #tpu.memory_space<any>>, %arg6: memref<1xf32, #tpu.memory_space<smem>>, %arg7: memref<1xf32, #tpu.memory_space<smem>>, %arg8: memref<8x128xf32, #tpu.memory_space<vmem>>, %arg9: memref<128x128xf32, #tpu.memory_space<any>>, %arg10: memref<128x128xf32, #tpu.memory_space<vmem>>, %arg11: memref<128x128xf32, #tpu.memory_space<vmem>>, %arg12: memref<1x128xf32, #tpu.memory_space<vmem>>) attributes {dimension_semantics = [#tpu.dimension_semantics<arbitrary>], iteration_bounds = array<i64: 2>, scalar_prefetch = 0 : i64, scratch_operands = 3 : i64, tpu.core_type = #tpu.core_type<tc>, window_params = [{transform_indices = @transform_0, window_bounds = array<i64: 1>}, {transform_indices = @transform_1, window_bounds = array<i64: 8, 128>}, {pipeline_mode = #tpu.pipeline_mode<synchronous>, transform_indices = @transform_2, window_bounds = array<i64: 1, 128>}, {}, {}, {transform_indices = @transform_5, window_bounds = array<i64: 1>}, {transform_indices = @transform_6, window_bounds = array<i64: 1>}, {transform_indices = @transform_7, window_bounds = array<i64: 8, 128>}, {}]} {
    %c0_i32 = arith.constant 0 : i32
    %0 = arith.cmpi eq, %arg0, %c0_i32 : i32
    %1 = arith.extui %0 : i1 to i32
    %c0_i32_0 = arith.constant 0 : i32
    %2 = arith.cmpi ne, %1, %c0_i32_0 : i32
    scf.if %2 {
      "tpu.region"() ({
        %37 = tpu.sem_alloc : memref<!tpu.dma_semaphore, #tpu.memory_space<semaphore_mem>>
        tpu.enqueue_dma source(%arg4 : memref<128x128xf32, #tpu.memory_space<any>>) target(%arg10 : memref<128x128xf32, #tpu.memory_space<vmem>>) target_semaphore(%37 : memref<!tpu.dma_semaphore, #tpu.memory_space<semaphore_mem>>)
        tpu.wait_dma2 semaphore(%37 : memref<!tpu.dma_semaphore, #tpu.memory_space<semaphore_mem>>) src(%arg4 : memref<128x128xf32, #tpu.memory_space<any>>) dst(%arg10 : memref<128x128xf32, #tpu.memory_space<vmem>>)
        tpu.yield
      }) : () -> ()
      "tpu.region"() ({
        %37 = tpu.sem_alloc : memref<!tpu.dma_semaphore, #tpu.memory_space<semaphore_mem>>
        tpu.enqueue_dma source(%arg5 : memref<128x128xf32, #tpu.memory_space<any>>) target(%arg11 : memref<128x128xf32, #tpu.memory_space<vmem>>) target_semaphore(%37 : memref<!tpu.dma_semaphore, #tpu.memory_space<semaphore_mem>>)
        tpu.wait_dma2 semaphore(%37 : memref<!tpu.dma_semaphore, #tpu.memory_space<semaphore_mem>>) src(%arg5 : memref<128x128xf32, #tpu.memory_space<any>>) dst(%arg11 : memref<128x128xf32, #tpu.memory_space<vmem>>)
        tpu.yield
      }) : () -> ()
      %c0_14 = arith.constant 0 : index
      %c0_15 = arith.constant 0 : index
      %35 = vector.load %arg3[%c0_14, %c0_15] : memref<1x128xf32, #tpu.memory_space<vmem>>, vector<1x128xf32>
      %c0_16 = arith.constant 0 : index
      %c0_17 = arith.constant 0 : index
      %36 = vector.load %arg12[%c0_16, %c0_17] : memref<1x128xf32, #tpu.memory_space<vmem>>, vector<1x128xf32>
      tpu.vector_store %arg12[%c0_16, %c0_17], %35 {strides = array<i32>} : memref<1x128xf32, #tpu.memory_space<vmem>>, vector<1x128xf32>,
    } else {
    }
    %c0 = arith.constant 0 : index
    %3 = memref.load %arg6[%c0] : memref<1xf32, #tpu.memory_space<smem>>
    %c0_1 = arith.constant 0 : index
    %4 = memref.load %arg7[%c0_1] : memref<1xf32, #tpu.memory_space<smem>>
    %c0_2 = arith.constant 0 : index
    %5 = memref.load %arg1[%c0_2] : memref<1xi32, #tpu.memory_space<smem>>
    %c8_i32 = arith.constant 8 : i32
    %6 = arith.muli %arg0, %c8_i32 : i32
    %7 = arith.subi %5, %6 : i32
    %c0_i32_3 = arith.constant 0 : i32
    %8 = arith.cmpi sgt, %7, %c0_i32_3 : i32
    %9 = arith.extui %8 : i1 to i32
    %c0_i32_4 = arith.constant 0 : i32
    %10 = arith.cmpi ne, %9, %c0_i32_4 : i32
    scf.if %10 {
      %c0_14 = arith.constant 0 : index
      %c0_15 = arith.constant 0 : index
      %35 = vector.load %arg2[%c0_14, %c0_15] : memref<8x128xf32, #tpu.memory_space<vmem>>, vector<1x128xf32>
      %c0_16 = arith.constant 0 : index
      %c0_17 = arith.constant 0 : index
      %36 = vector.load %arg12[%c0_16, %c0_17] : memref<1x128xf32, #tpu.memory_space<vmem>>, vector<1x128xf32>
      %c0_18 = arith.constant 0 : index
      %c0_19 = arith.constant 0 : index
      %37 = vector.load %arg10[%c0_18, %c0_19] : memref<128x128xf32, #tpu.memory_space<vmem>>, vector<128x128xf32>
      %cst = arith.constant dense<0.000000e+00> : vector<1x128xf32>
      %38 = tpu.matmul %36, %37, %cst {dimension_numbers = #tpu.dot_dimension_numbers<[1], [0], [0], [1], [0, 0, 1, 1], [], []>} : vector<1x128xf32>, vector<128x128xf32>, vector<1x128xf32> -> vector<1x128xf32>
      %c0_20 = arith.constant 0 : index
      %c0_21 = arith.constant 0 : index
      %39 = vector.load %arg11[%c0_20, %c0_21] : memref<128x128xf32, #tpu.memory_space<vmem>>, vector<128x128xf32>
      %cst_22 = arith.constant dense<0.000000e+00> : vector<1x128xf32>
      %40 = tpu.matmul %36, %39, %cst_22 {dimension_numbers = #tpu.dot_dimension_numbers<[1], [0], [0], [1], [0, 0, 1, 1], [], []>} : vector<1x128xf32>, vector<128x128xf32>, vector<1x128xf32> -> vector<1x128xf32>
      %41 = vector.broadcast %3 : f32 to vector<1x128xf32>
      %42 = arith.mulf %41, %40 : vector<1x128xf32>
      %43 = arith.addf %38, %42 : vector<1x128xf32>
      %cst_23 = arith.constant 0.000000e+00 : f32
      %44 = vector.broadcast %cst_23 : f32 to vector<1x128xf32>
      %45 = arith.cmpf one, %35, %44 : vector<1x128xf32>
      %46 = math.tanh %43 : vector<1x128xf32>
      %47 = arith.select %45, %35, %46 : vector<1x128xi1>, vector<1x128xf32>
      %c0_24 = arith.constant 0 : index
      %c0_25 = arith.constant 0 : index
      %48 = vector.load %arg8[%c0_24, %c0_25] : memref<8x128xf32, #tpu.memory_space<vmem>>, vector<1x128xf32>
      tpu.vector_store %arg8[%c0_24, %c0_25], %47 {strides = array<i32>} : memref<8x128xf32, #tpu.memory_space<vmem>>, vector<1x128xf32>,
      %cst_26 = arith.constant dense<0.000000e+00> : vector<128x128xf32>
      %49 = tpu.matmul %36, %47, %cst_26 {dimension_numbers = #tpu.dot_dimension_numbers<[0], [0], [1], [1], [0, 1, 1, 1], [], []>} : vector<1x128xf32>, vector<1x128xf32>, vector<128x128xf32> -> vector<128x128xf32>
      %cst_27 = arith.constant 1.000000e+00 : f32
      %50 = arith.subf %cst_27, %4 : f32
      %c0_28 = arith.constant 0 : index
      %c0_29 = arith.constant 0 : index
      %51 = vector.load %arg11[%c0_28, %c0_29] : memref<128x128xf32, #tpu.memory_space<vmem>>, vector<128x128xf32>
      %52 = vector.broadcast %50 : f32 to vector<128x128xf32>
      %53 = arith.mulf %52, %51 : vector<128x128xf32>
      %54 = vector.broadcast %4 : f32 to vector<128x128xf32>
      %55 = arith.mulf %54, %49 : vector<128x128xf32>
      %56 = arith.addf %53, %55 : vector<128x128xf32>
      %c0_30 = arith.constant 0 : index
      %c0_31 = arith.constant 0 : index
      %57 = vector.load %arg11[%c0_30, %c0_31] : memref<128x128xf32, #tpu.memory_space<vmem>>, vector<128x128xf32>
      tpu.vector_store %arg11[%c0_30, %c0_31], %56 {strides = array<i32>} : memref<128x128xf32, #tpu.memory_space<vmem>>, vector<128x128xf32>,
      %c0_32 = arith.constant 0 : index
      %c0_33 = arith.constant 0 : index
      %58 = vector.load %arg12[%c0_32, %c0_33] : memref<1x128xf32, #tpu.memory_space<vmem>>, vector<1x128xf32>
      tpu.vector_store %arg12[%c0_32, %c0_33], %47 {strides = array<i32>} : memref<1x128xf32, #tpu.memory_space<vmem>>, vector<1x128xf32>,
    } else {
    }
    %c1_i32 = arith.constant 1 : i32
    %11 = arith.cmpi sgt, %7, %c1_i32 : i32
    %12 = arith.extui %11 : i1 to i32
    %c0_i32_5 = arith.constant 0 : i32
    %13 = arith.cmpi ne, %12, %c0_i32_5 : i32
    scf.if %13 {
      %c1 = arith.constant 1 : index
      %c0_14 = arith.constant 0 : index
      %35 = vector.load %arg2[%c1, %c0_14] : memref<8x128xf32, #tpu.memory_space<vmem>>, vector<1x128xf32>
      %c0_15 = arith.constant 0 : index
      %c0_16 = arith.constant 0 : index
      %36 = vector.load %arg12[%c0_15, %c0_16] : memref<1x128xf32, #tpu.memory_space<vmem>>, vector<1x128xf32>
      %c0_17 = arith.constant 0 : index
      %c0_18 = arith.constant 0 : index
      %37 = vector.load %arg10[%c0_17, %c0_18] : memref<128x128xf32, #tpu.memory_space<vmem>>, vector<128x128xf32>
      %cst = arith.constant dense<0.000000e+00> : vector<1x128xf32>
      %38 = tpu.matmul %36, %37, %cst {dimension_numbers = #tpu.dot_dimension_numbers<[1], [0], [0], [1], [0, 0, 1, 1], [], []>} : vector<1x128xf32>, vector<128x128xf32>, vector<1x128xf32> -> vector<1x128xf32>
      %c0_19 = arith.constant 0 : index
      %c0_20 = arith.constant 0 : index
      %39 = vector.load %arg11[%c0_19, %c0_20] : memref<128x128xf32, #tpu.memory_space<vmem>>, vector<128x128xf32>
      %cst_21 = arith.constant dense<0.000000e+00> : vector<1x128xf32>
      %40 = tpu.matmul %36, %39, %cst_21 {dimension_numbers = #tpu.dot_dimension_numbers<[1], [0], [0], [1], [0, 0, 1, 1], [], []>} : vector<1x128xf32>, vector<128x128xf32>, vector<1x128xf32> -> vector<1x128xf32>
      %41 = vector.broadcast %3 : f32 to vector<1x128xf32>
      %42 = arith.mulf %41, %40 : vector<1x128xf32>
      %43 = arith.addf %38, %42 : vector<1x128xf32>
      %cst_22 = arith.constant 0.000000e+00 : f32
      %44 = vector.broadcast %cst_22 : f32 to vector<1x128xf32>
      %45 = arith.cmpf one, %35, %44 : vector<1x128xf32>
      %46 = math.tanh %43 : vector<1x128xf32>
      %47 = arith.select %45, %35, %46 : vector<1x128xi1>, vector<1x128xf32>
      %c1_23 = arith.constant 1 : index
      %c0_24 = arith.constant 0 : index
      %48 = vector.load %arg8[%c1_23, %c0_24] : memref<8x128xf32, #tpu.memory_space<vmem>>, vector<1x128xf32>
      tpu.vector_store %arg8[%c1_23, %c0_24], %47 {strides = array<i32>} : memref<8x128xf32, #tpu.memory_space<vmem>>, vector<1x128xf32>,
      %cst_25 = arith.constant dense<0.000000e+00> : vector<128x128xf32>
      %49 = tpu.matmul %36, %47, %cst_25 {dimension_numbers = #tpu.dot_dimension_numbers<[0], [0], [1], [1], [0, 1, 1, 1], [], []>} : vector<1x128xf32>, vector<1x128xf32>, vector<128x128xf32> -> vector<128x128xf32>
      %cst_26 = arith.constant 1.000000e+00 : f32
      %50 = arith.subf %cst_26, %4 : f32
      %c0_27 = arith.constant 0 : index
      %c0_28 = arith.constant 0 : index
      %51 = vector.load %arg11[%c0_27, %c0_28] : memref<128x128xf32, #tpu.memory_space<vmem>>, vector<128x128xf32>
      %52 = vector.broadcast %50 : f32 to vector<128x128xf32>
      %53 = arith.mulf %52, %51 : vector<128x128xf32>
      %54 = vector.broadcast %4 : f32 to vector<128x128xf32>
      %55 = arith.mulf %54, %49 : vector<128x128xf32>
      %56 = arith.addf %53, %55 : vector<128x128xf32>
      %c0_29 = arith.constant 0 : index
      %c0_30 = arith.constant 0 : index
      %57 = vector.load %arg11[%c0_29, %c0_30] : memref<128x128xf32, #tpu.memory_space<vmem>>, vector<128x128xf32>
      tpu.vector_store %arg11[%c0_29, %c0_30], %56 {strides = array<i32>} : memref<128x128xf32, #tpu.memory_space<vmem>>, vector<128x128xf32>,
      %c0_31 = arith.constant 0 : index
      %c0_32 = arith.constant 0 : index
      %58 = vector.load %arg12[%c0_31, %c0_32] : memref<1x128xf32, #tpu.memory_space<vmem>>, vector<1x128xf32>
      tpu.vector_store %arg12[%c0_31, %c0_32], %47 {strides = array<i32>} : memref<1x128xf32, #tpu.memory_space<vmem>>, vector<1x128xf32>,
    } else {
    }
    %c2_i32 = arith.constant 2 : i32
    %14 = arith.cmpi sgt, %7, %c2_i32 : i32
    %15 = arith.extui %14 : i1 to i32
    %c0_i32_6 = arith.constant 0 : i32
    %16 = arith.cmpi ne, %15, %c0_i32_6 : i32
    scf.if %16 {
      %c2 = arith.constant 2 : index
      %c0_14 = arith.constant 0 : index
      %35 = vector.load %arg2[%c2, %c0_14] : memref<8x128xf32, #tpu.memory_space<vmem>>, vector<1x128xf32>
      %c0_15 = arith.constant 0 : index
      %c0_16 = arith.constant 0 : index
      %36 = vector.load %arg12[%c0_15, %c0_16] : memref<1x128xf32, #tpu.memory_space<vmem>>, vector<1x128xf32>
      %c0_17 = arith.constant 0 : index
      %c0_18 = arith.constant 0 : index
      %37 = vector.load %arg10[%c0_17, %c0_18] : memref<128x128xf32, #tpu.memory_space<vmem>>, vector<128x128xf32>
      %cst = arith.constant dense<0.000000e+00> : vector<1x128xf32>
      %38 = tpu.matmul %36, %37, %cst {dimension_numbers = #tpu.dot_dimension_numbers<[1], [0], [0], [1], [0, 0, 1, 1], [], []>} : vector<1x128xf32>, vector<128x128xf32>, vector<1x128xf32> -> vector<1x128xf32>
      %c0_19 = arith.constant 0 : index
      %c0_20 = arith.constant 0 : index
      %39 = vector.load %arg11[%c0_19, %c0_20] : memref<128x128xf32, #tpu.memory_space<vmem>>, vector<128x128xf32>
      %cst_21 = arith.constant dense<0.000000e+00> : vector<1x128xf32>
      %40 = tpu.matmul %36, %39, %cst_21 {dimension_numbers = #tpu.dot_dimension_numbers<[1], [0], [0], [1], [0, 0, 1, 1], [], []>} : vector<1x128xf32>, vector<128x128xf32>, vector<1x128xf32> -> vector<1x128xf32>
      %41 = vector.broadcast %3 : f32 to vector<1x128xf32>
      %42 = arith.mulf %41, %40 : vector<1x128xf32>
      %43 = arith.addf %38, %42 : vector<1x128xf32>
      %cst_22 = arith.constant 0.000000e+00 : f32
      %44 = vector.broadcast %cst_22 : f32 to vector<1x128xf32>
      %45 = arith.cmpf one, %35, %44 : vector<1x128xf32>
      %46 = math.tanh %43 : vector<1x128xf32>
      %47 = arith.select %45, %35, %46 : vector<1x128xi1>, vector<1x128xf32>
      %c2_23 = arith.constant 2 : index
      %c0_24 = arith.constant 0 : index
      %48 = vector.load %arg8[%c2_23, %c0_24] : memref<8x128xf32, #tpu.memory_space<vmem>>, vector<1x128xf32>
      tpu.vector_store %arg8[%c2_23, %c0_24], %47 {strides = array<i32>} : memref<8x128xf32, #tpu.memory_space<vmem>>, vector<1x128xf32>,
      %cst_25 = arith.constant dense<0.000000e+00> : vector<128x128xf32>
      %49 = tpu.matmul %36, %47, %cst_25 {dimension_numbers = #tpu.dot_dimension_numbers<[0], [0], [1], [1], [0, 1, 1, 1], [], []>} : vector<1x128xf32>, vector<1x128xf32>, vector<128x128xf32> -> vector<128x128xf32>
      %cst_26 = arith.constant 1.000000e+00 : f32
      %50 = arith.subf %cst_26, %4 : f32
      %c0_27 = arith.constant 0 : index
      %c0_28 = arith.constant 0 : index
      %51 = vector.load %arg11[%c0_27, %c0_28] : memref<128x128xf32, #tpu.memory_space<vmem>>, vector<128x128xf32>
      %52 = vector.broadcast %50 : f32 to vector<128x128xf32>
      %53 = arith.mulf %52, %51 : vector<128x128xf32>
      %54 = vector.broadcast %4 : f32 to vector<128x128xf32>
      %55 = arith.mulf %54, %49 : vector<128x128xf32>
      %56 = arith.addf %53, %55 : vector<128x128xf32>
      %c0_29 = arith.constant 0 : index
      %c0_30 = arith.constant 0 : index
      %57 = vector.load %arg11[%c0_29, %c0_30] : memref<128x128xf32, #tpu.memory_space<vmem>>, vector<128x128xf32>
      tpu.vector_store %arg11[%c0_29, %c0_30], %56 {strides = array<i32>} : memref<128x128xf32, #tpu.memory_space<vmem>>, vector<128x128xf32>,
      %c0_31 = arith.constant 0 : index
      %c0_32 = arith.constant 0 : index
      %58 = vector.load %arg12[%c0_31, %c0_32] : memref<1x128xf32, #tpu.memory_space<vmem>>, vector<1x128xf32>
      tpu.vector_store %arg12[%c0_31, %c0_32], %47 {strides = array<i32>} : memref<1x128xf32, #tpu.memory_space<vmem>>, vector<1x128xf32>,
    } else {
    }
    %c3_i32 = arith.constant 3 : i32
    %17 = arith.cmpi sgt, %7, %c3_i32 : i32
    %18 = arith.extui %17 : i1 to i32
    %c0_i32_7 = arith.constant 0 : i32
    %19 = arith.cmpi ne, %18, %c0_i32_7 : i32
    scf.if %19 {
      %c3 = arith.constant 3 : index
      %c0_14 = arith.constant 0 : index
      %35 = vector.load %arg2[%c3, %c0_14] : memref<8x128xf32, #tpu.memory_space<vmem>>, vector<1x128xf32>
      %c0_15 = arith.constant 0 : index
      %c0_16 = arith.constant 0 : index
      %36 = vector.load %arg12[%c0_15, %c0_16] : memref<1x128xf32, #tpu.memory_space<vmem>>, vector<1x128xf32>
      %c0_17 = arith.constant 0 : index
      %c0_18 = arith.constant 0 : index
      %37 = vector.load %arg10[%c0_17, %c0_18] : memref<128x128xf32, #tpu.memory_space<vmem>>, vector<128x128xf32>
      %cst = arith.constant dense<0.000000e+00> : vector<1x128xf32>
      %38 = tpu.matmul %36, %37, %cst {dimension_numbers = #tpu.dot_dimension_numbers<[1], [0], [0], [1], [0, 0, 1, 1], [], []>} : vector<1x128xf32>, vector<128x128xf32>, vector<1x128xf32> -> vector<1x128xf32>
      %c0_19 = arith.constant 0 : index
      %c0_20 = arith.constant 0 : index
      %39 = vector.load %arg11[%c0_19, %c0_20] : memref<128x128xf32, #tpu.memory_space<vmem>>, vector<128x128xf32>
      %cst_21 = arith.constant dense<0.000000e+00> : vector<1x128xf32>
      %40 = tpu.matmul %36, %39, %cst_21 {dimension_numbers = #tpu.dot_dimension_numbers<[1], [0], [0], [1], [0, 0, 1, 1], [], []>} : vector<1x128xf32>, vector<128x128xf32>, vector<1x128xf32> -> vector<1x128xf32>
      %41 = vector.broadcast %3 : f32 to vector<1x128xf32>
      %42 = arith.mulf %41, %40 : vector<1x128xf32>
      %43 = arith.addf %38, %42 : vector<1x128xf32>
      %cst_22 = arith.constant 0.000000e+00 : f32
      %44 = vector.broadcast %cst_22 : f32 to vector<1x128xf32>
      %45 = arith.cmpf one, %35, %44 : vector<1x128xf32>
      %46 = math.tanh %43 : vector<1x128xf32>
      %47 = arith.select %45, %35, %46 : vector<1x128xi1>, vector<1x128xf32>
      %c3_23 = arith.constant 3 : index
      %c0_24 = arith.constant 0 : index
      %48 = vector.load %arg8[%c3_23, %c0_24] : memref<8x128xf32, #tpu.memory_space<vmem>>, vector<1x128xf32>
      tpu.vector_store %arg8[%c3_23, %c0_24], %47 {strides = array<i32>} : memref<8x128xf32, #tpu.memory_space<vmem>>, vector<1x128xf32>,
      %cst_25 = arith.constant dense<0.000000e+00> : vector<128x128xf32>
      %49 = tpu.matmul %36, %47, %cst_25 {dimension_numbers = #tpu.dot_dimension_numbers<[0], [0], [1], [1], [0, 1, 1, 1], [], []>} : vector<1x128xf32>, vector<1x128xf32>, vector<128x128xf32> -> vector<128x128xf32>
      %cst_26 = arith.constant 1.000000e+00 : f32
      %50 = arith.subf %cst_26, %4 : f32
      %c0_27 = arith.constant 0 : index
      %c0_28 = arith.constant 0 : index
      %51 = vector.load %arg11[%c0_27, %c0_28] : memref<128x128xf32, #tpu.memory_space<vmem>>, vector<128x128xf32>
      %52 = vector.broadcast %50 : f32 to vector<128x128xf32>
      %53 = arith.mulf %52, %51 : vector<128x128xf32>
      %54 = vector.broadcast %4 : f32 to vector<128x128xf32>
      %55 = arith.mulf %54, %49 : vector<128x128xf32>
      %56 = arith.addf %53, %55 : vector<128x128xf32>
      %c0_29 = arith.constant 0 : index
      %c0_30 = arith.constant 0 : index
      %57 = vector.load %arg11[%c0_29, %c0_30] : memref<128x128xf32, #tpu.memory_space<vmem>>, vector<128x128xf32>
      tpu.vector_store %arg11[%c0_29, %c0_30], %56 {strides = array<i32>} : memref<128x128xf32, #tpu.memory_space<vmem>>, vector<128x128xf32>,
      %c0_31 = arith.constant 0 : index
      %c0_32 = arith.constant 0 : index
      %58 = vector.load %arg12[%c0_31, %c0_32] : memref<1x128xf32, #tpu.memory_space<vmem>>, vector<1x128xf32>
      tpu.vector_store %arg12[%c0_31, %c0_32], %47 {strides = array<i32>} : memref<1x128xf32, #tpu.memory_space<vmem>>, vector<1x128xf32>,
    } else {
    }
    %c4_i32 = arith.constant 4 : i32
    %20 = arith.cmpi sgt, %7, %c4_i32 : i32
    %21 = arith.extui %20 : i1 to i32
    %c0_i32_8 = arith.constant 0 : i32
    %22 = arith.cmpi ne, %21, %c0_i32_8 : i32
    scf.if %22 {
      %c4 = arith.constant 4 : index
      %c0_14 = arith.constant 0 : index
      %35 = vector.load %arg2[%c4, %c0_14] : memref<8x128xf32, #tpu.memory_space<vmem>>, vector<1x128xf32>
      %c0_15 = arith.constant 0 : index
      %c0_16 = arith.constant 0 : index
      %36 = vector.load %arg12[%c0_15, %c0_16] : memref<1x128xf32, #tpu.memory_space<vmem>>, vector<1x128xf32>
      %c0_17 = arith.constant 0 : index
      %c0_18 = arith.constant 0 : index
      %37 = vector.load %arg10[%c0_17, %c0_18] : memref<128x128xf32, #tpu.memory_space<vmem>>, vector<128x128xf32>
      %cst = arith.constant dense<0.000000e+00> : vector<1x128xf32>
      %38 = tpu.matmul %36, %37, %cst {dimension_numbers = #tpu.dot_dimension_numbers<[1], [0], [0], [1], [0, 0, 1, 1], [], []>} : vector<1x128xf32>, vector<128x128xf32>, vector<1x128xf32> -> vector<1x128xf32>
      %c0_19 = arith.constant 0 : index
      %c0_20 = arith.constant 0 : index
      %39 = vector.load %arg11[%c0_19, %c0_20] : memref<128x128xf32, #tpu.memory_space<vmem>>, vector<128x128xf32>
      %cst_21 = arith.constant dense<0.000000e+00> : vector<1x128xf32>
      %40 = tpu.matmul %36, %39, %cst_21 {dimension_numbers = #tpu.dot_dimension_numbers<[1], [0], [0], [1], [0, 0, 1, 1], [], []>} : vector<1x128xf32>, vector<128x128xf32>, vector<1x128xf32> -> vector<1x128xf32>
      %41 = vector.broadcast %3 : f32 to vector<1x128xf32>
      %42 = arith.mulf %41, %40 : vector<1x128xf32>
      %43 = arith.addf %38, %42 : vector<1x128xf32>
      %cst_22 = arith.constant 0.000000e+00 : f32
      %44 = vector.broadcast %cst_22 : f32 to vector<1x128xf32>
      %45 = arith.cmpf one, %35, %44 : vector<1x128xf32>
      %46 = math.tanh %43 : vector<1x128xf32>
      %47 = arith.select %45, %35, %46 : vector<1x128xi1>, vector<1x128xf32>
      %c4_23 = arith.constant 4 : index
      %c0_24 = arith.constant 0 : index
      %48 = vector.load %arg8[%c4_23, %c0_24] : memref<8x128xf32, #tpu.memory_space<vmem>>, vector<1x128xf32>
      tpu.vector_store %arg8[%c4_23, %c0_24], %47 {strides = array<i32>} : memref<8x128xf32, #tpu.memory_space<vmem>>, vector<1x128xf32>,
      %cst_25 = arith.constant dense<0.000000e+00> : vector<128x128xf32>
      %49 = tpu.matmul %36, %47, %cst_25 {dimension_numbers = #tpu.dot_dimension_numbers<[0], [0], [1], [1], [0, 1, 1, 1], [], []>} : vector<1x128xf32>, vector<1x128xf32>, vector<128x128xf32> -> vector<128x128xf32>
      %cst_26 = arith.constant 1.000000e+00 : f32
      %50 = arith.subf %cst_26, %4 : f32
      %c0_27 = arith.constant 0 : index
      %c0_28 = arith.constant 0 : index
      %51 = vector.load %arg11[%c0_27, %c0_28] : memref<128x128xf32, #tpu.memory_space<vmem>>, vector<128x128xf32>
      %52 = vector.broadcast %50 : f32 to vector<128x128xf32>
      %53 = arith.mulf %52, %51 : vector<128x128xf32>
      %54 = vector.broadcast %4 : f32 to vector<128x128xf32>
      %55 = arith.mulf %54, %49 : vector<128x128xf32>
      %56 = arith.addf %53, %55 : vector<128x128xf32>
      %c0_29 = arith.constant 0 : index
      %c0_30 = arith.constant 0 : index
      %57 = vector.load %arg11[%c0_29, %c0_30] : memref<128x128xf32, #tpu.memory_space<vmem>>, vector<128x128xf32>
      tpu.vector_store %arg11[%c0_29, %c0_30], %56 {strides = array<i32>} : memref<128x128xf32, #tpu.memory_space<vmem>>, vector<128x128xf32>,
      %c0_31 = arith.constant 0 : index
      %c0_32 = arith.constant 0 : index
      %58 = vector.load %arg12[%c0_31, %c0_32] : memref<1x128xf32, #tpu.memory_space<vmem>>, vector<1x128xf32>
      tpu.vector_store %arg12[%c0_31, %c0_32], %47 {strides = array<i32>} : memref<1x128xf32, #tpu.memory_space<vmem>>, vector<1x128xf32>,
    } else {
    }
    %c5_i32 = arith.constant 5 : i32
    %23 = arith.cmpi sgt, %7, %c5_i32 : i32
    %24 = arith.extui %23 : i1 to i32
    %c0_i32_9 = arith.constant 0 : i32
    %25 = arith.cmpi ne, %24, %c0_i32_9 : i32
    scf.if %25 {
      %c5 = arith.constant 5 : index
      %c0_14 = arith.constant 0 : index
      %35 = vector.load %arg2[%c5, %c0_14] : memref<8x128xf32, #tpu.memory_space<vmem>>, vector<1x128xf32>
      %c0_15 = arith.constant 0 : index
      %c0_16 = arith.constant 0 : index
      %36 = vector.load %arg12[%c0_15, %c0_16] : memref<1x128xf32, #tpu.memory_space<vmem>>, vector<1x128xf32>
      %c0_17 = arith.constant 0 : index
      %c0_18 = arith.constant 0 : index
      %37 = vector.load %arg10[%c0_17, %c0_18] : memref<128x128xf32, #tpu.memory_space<vmem>>, vector<128x128xf32>
      %cst = arith.constant dense<0.000000e+00> : vector<1x128xf32>
      %38 = tpu.matmul %36, %37, %cst {dimension_numbers = #tpu.dot_dimension_numbers<[1], [0], [0], [1], [0, 0, 1, 1], [], []>} : vector<1x128xf32>, vector<128x128xf32>, vector<1x128xf32> -> vector<1x128xf32>
      %c0_19 = arith.constant 0 : index
      %c0_20 = arith.constant 0 : index
      %39 = vector.load %arg11[%c0_19, %c0_20] : memref<128x128xf32, #tpu.memory_space<vmem>>, vector<128x128xf32>
      %cst_21 = arith.constant dense<0.000000e+00> : vector<1x128xf32>
      %40 = tpu.matmul %36, %39, %cst_21 {dimension_numbers = #tpu.dot_dimension_numbers<[1], [0], [0], [1], [0, 0, 1, 1], [], []>} : vector<1x128xf32>, vector<128x128xf32>, vector<1x128xf32> -> vector<1x128xf32>
      %41 = vector.broadcast %3 : f32 to vector<1x128xf32>
      %42 = arith.mulf %41, %40 : vector<1x128xf32>
      %43 = arith.addf %38, %42 : vector<1x128xf32>
      %cst_22 = arith.constant 0.000000e+00 : f32
      %44 = vector.broadcast %cst_22 : f32 to vector<1x128xf32>
      %45 = arith.cmpf one, %35, %44 : vector<1x128xf32>
      %46 = math.tanh %43 : vector<1x128xf32>
      %47 = arith.select %45, %35, %46 : vector<1x128xi1>, vector<1x128xf32>
      %c5_23 = arith.constant 5 : index
      %c0_24 = arith.constant 0 : index
      %48 = vector.load %arg8[%c5_23, %c0_24] : memref<8x128xf32, #tpu.memory_space<vmem>>, vector<1x128xf32>
      tpu.vector_store %arg8[%c5_23, %c0_24], %47 {strides = array<i32>} : memref<8x128xf32, #tpu.memory_space<vmem>>, vector<1x128xf32>,
      %cst_25 = arith.constant dense<0.000000e+00> : vector<128x128xf32>
      %49 = tpu.matmul %36, %47, %cst_25 {dimension_numbers = #tpu.dot_dimension_numbers<[0], [0], [1], [1], [0, 1, 1, 1], [], []>} : vector<1x128xf32>, vector<1x128xf32>, vector<128x128xf32> -> vector<128x128xf32>
      %cst_26 = arith.constant 1.000000e+00 : f32
      %50 = arith.subf %cst_26, %4 : f32
      %c0_27 = arith.constant 0 : index
      %c0_28 = arith.constant 0 : index
      %51 = vector.load %arg11[%c0_27, %c0_28] : memref<128x128xf32, #tpu.memory_space<vmem>>, vector<128x128xf32>
      %52 = vector.broadcast %50 : f32 to vector<128x128xf32>
      %53 = arith.mulf %52, %51 : vector<128x128xf32>
      %54 = vector.broadcast %4 : f32 to vector<128x128xf32>
      %55 = arith.mulf %54, %49 : vector<128x128xf32>
      %56 = arith.addf %53, %55 : vector<128x128xf32>
      %c0_29 = arith.constant 0 : index
      %c0_30 = arith.constant 0 : index
      %57 = vector.load %arg11[%c0_29, %c0_30] : memref<128x128xf32, #tpu.memory_space<vmem>>, vector<128x128xf32>
      tpu.vector_store %arg11[%c0_29, %c0_30], %56 {strides = array<i32>} : memref<128x128xf32, #tpu.memory_space<vmem>>, vector<128x128xf32>,
      %c0_31 = arith.constant 0 : index
      %c0_32 = arith.constant 0 : index
      %58 = vector.load %arg12[%c0_31, %c0_32] : memref<1x128xf32, #tpu.memory_space<vmem>>, vector<1x128xf32>
      tpu.vector_store %arg12[%c0_31, %c0_32], %47 {strides = array<i32>} : memref<1x128xf32, #tpu.memory_space<vmem>>, vector<1x128xf32>,
    } else {
    }
    %c6_i32 = arith.constant 6 : i32
    %26 = arith.cmpi sgt, %7, %c6_i32 : i32
    %27 = arith.extui %26 : i1 to i32
    %c0_i32_10 = arith.constant 0 : i32
    %28 = arith.cmpi ne, %27, %c0_i32_10 : i32
    scf.if %28 {
      %c6 = arith.constant 6 : index
      %c0_14 = arith.constant 0 : index
      %35 = vector.load %arg2[%c6, %c0_14] : memref<8x128xf32, #tpu.memory_space<vmem>>, vector<1x128xf32>
      %c0_15 = arith.constant 0 : index
      %c0_16 = arith.constant 0 : index
      %36 = vector.load %arg12[%c0_15, %c0_16] : memref<1x128xf32, #tpu.memory_space<vmem>>, vector<1x128xf32>
      %c0_17 = arith.constant 0 : index
      %c0_18 = arith.constant 0 : index
      %37 = vector.load %arg10[%c0_17, %c0_18] : memref<128x128xf32, #tpu.memory_space<vmem>>, vector<128x128xf32>
      %cst = arith.constant dense<0.000000e+00> : vector<1x128xf32>
      %38 = tpu.matmul %36, %37, %cst {dimension_numbers = #tpu.dot_dimension_numbers<[1], [0], [0], [1], [0, 0, 1, 1], [], []>} : vector<1x128xf32>, vector<128x128xf32>, vector<1x128xf32> -> vector<1x128xf32>
      %c0_19 = arith.constant 0 : index
      %c0_20 = arith.constant 0 : index
      %39 = vector.load %arg11[%c0_19, %c0_20] : memref<128x128xf32, #tpu.memory_space<vmem>>, vector<128x128xf32>
      %cst_21 = arith.constant dense<0.000000e+00> : vector<1x128xf32>
      %40 = tpu.matmul %36, %39, %cst_21 {dimension_numbers = #tpu.dot_dimension_numbers<[1], [0], [0], [1], [0, 0, 1, 1], [], []>} : vector<1x128xf32>, vector<128x128xf32>, vector<1x128xf32> -> vector<1x128xf32>
      %41 = vector.broadcast %3 : f32 to vector<1x128xf32>
      %42 = arith.mulf %41, %40 : vector<1x128xf32>
      %43 = arith.addf %38, %42 : vector<1x128xf32>
      %cst_22 = arith.constant 0.000000e+00 : f32
      %44 = vector.broadcast %cst_22 : f32 to vector<1x128xf32>
      %45 = arith.cmpf one, %35, %44 : vector<1x128xf32>
      %46 = math.tanh %43 : vector<1x128xf32>
      %47 = arith.select %45, %35, %46 : vector<1x128xi1>, vector<1x128xf32>
      %c6_23 = arith.constant 6 : index
      %c0_24 = arith.constant 0 : index
      %48 = vector.load %arg8[%c6_23, %c0_24] : memref<8x128xf32, #tpu.memory_space<vmem>>, vector<1x128xf32>
      tpu.vector_store %arg8[%c6_23, %c0_24], %47 {strides = array<i32>} : memref<8x128xf32, #tpu.memory_space<vmem>>, vector<1x128xf32>,
      %cst_25 = arith.constant dense<0.000000e+00> : vector<128x128xf32>
      %49 = tpu.matmul %36, %47, %cst_25 {dimension_numbers = #tpu.dot_dimension_numbers<[0], [0], [1], [1], [0, 1, 1, 1], [], []>} : vector<1x128xf32>, vector<1x128xf32>, vector<128x128xf32> -> vector<128x128xf32>
      %cst_26 = arith.constant 1.000000e+00 : f32
      %50 = arith.subf %cst_26, %4 : f32
      %c0_27 = arith.constant 0 : index
      %c0_28 = arith.constant 0 : index
      %51 = vector.load %arg11[%c0_27, %c0_28] : memref<128x128xf32, #tpu.memory_space<vmem>>, vector<128x128xf32>
      %52 = vector.broadcast %50 : f32 to vector<128x128xf32>
      %53 = arith.mulf %52, %51 : vector<128x128xf32>
      %54 = vector.broadcast %4 : f32 to vector<128x128xf32>
      %55 = arith.mulf %54, %49 : vector<128x128xf32>
      %56 = arith.addf %53, %55 : vector<128x128xf32>
      %c0_29 = arith.constant 0 : index
      %c0_30 = arith.constant 0 : index
      %57 = vector.load %arg11[%c0_29, %c0_30] : memref<128x128xf32, #tpu.memory_space<vmem>>, vector<128x128xf32>
      tpu.vector_store %arg11[%c0_29, %c0_30], %56 {strides = array<i32>} : memref<128x128xf32, #tpu.memory_space<vmem>>, vector<128x128xf32>,
      %c0_31 = arith.constant 0 : index
      %c0_32 = arith.constant 0 : index
      %58 = vector.load %arg12[%c0_31, %c0_32] : memref<1x128xf32, #tpu.memory_space<vmem>>, vector<1x128xf32>
      tpu.vector_store %arg12[%c0_31, %c0_32], %47 {strides = array<i32>} : memref<1x128xf32, #tpu.memory_space<vmem>>, vector<1x128xf32>,
    } else {
    }
    %c7_i32 = arith.constant 7 : i32
    %29 = arith.cmpi sgt, %7, %c7_i32 : i32
    %30 = arith.extui %29 : i1 to i32
    %c0_i32_11 = arith.constant 0 : i32
    %31 = arith.cmpi ne, %30, %c0_i32_11 : i32
    scf.if %31 {
      %c7 = arith.constant 7 : index
      %c0_14 = arith.constant 0 : index
      %35 = vector.load %arg2[%c7, %c0_14] : memref<8x128xf32, #tpu.memory_space<vmem>>, vector<1x128xf32>
      %c0_15 = arith.constant 0 : index
      %c0_16 = arith.constant 0 : index
      %36 = vector.load %arg12[%c0_15, %c0_16] : memref<1x128xf32, #tpu.memory_space<vmem>>, vector<1x128xf32>
      %c0_17 = arith.constant 0 : index
      %c0_18 = arith.constant 0 : index
      %37 = vector.load %arg10[%c0_17, %c0_18] : memref<128x128xf32, #tpu.memory_space<vmem>>, vector<128x128xf32>
      %cst = arith.constant dense<0.000000e+00> : vector<1x128xf32>
      %38 = tpu.matmul %36, %37, %cst {dimension_numbers = #tpu.dot_dimension_numbers<[1], [0], [0], [1], [0, 0, 1, 1], [], []>} : vector<1x128xf32>, vector<128x128xf32>, vector<1x128xf32> -> vector<1x128xf32>
      %c0_19 = arith.constant 0 : index
      %c0_20 = arith.constant 0 : index
      %39 = vector.load %arg11[%c0_19, %c0_20] : memref<128x128xf32, #tpu.memory_space<vmem>>, vector<128x128xf32>
      %cst_21 = arith.constant dense<0.000000e+00> : vector<1x128xf32>
      %40 = tpu.matmul %36, %39, %cst_21 {dimension_numbers = #tpu.dot_dimension_numbers<[1], [0], [0], [1], [0, 0, 1, 1], [], []>} : vector<1x128xf32>, vector<128x128xf32>, vector<1x128xf32> -> vector<1x128xf32>
      %41 = vector.broadcast %3 : f32 to vector<1x128xf32>
      %42 = arith.mulf %41, %40 : vector<1x128xf32>
      %43 = arith.addf %38, %42 : vector<1x128xf32>
      %cst_22 = arith.constant 0.000000e+00 : f32
      %44 = vector.broadcast %cst_22 : f32 to vector<1x128xf32>
      %45 = arith.cmpf one, %35, %44 : vector<1x128xf32>
      %46 = math.tanh %43 : vector<1x128xf32>
      %47 = arith.select %45, %35, %46 : vector<1x128xi1>, vector<1x128xf32>
      %c7_23 = arith.constant 7 : index
      %c0_24 = arith.constant 0 : index
      %48 = vector.load %arg8[%c7_23, %c0_24] : memref<8x128xf32, #tpu.memory_space<vmem>>, vector<1x128xf32>
      tpu.vector_store %arg8[%c7_23, %c0_24], %47 {strides = array<i32>} : memref<8x128xf32, #tpu.memory_space<vmem>>, vector<1x128xf32>,
      %cst_25 = arith.constant dense<0.000000e+00> : vector<128x128xf32>
      %49 = tpu.matmul %36, %47, %cst_25 {dimension_numbers = #tpu.dot_dimension_numbers<[0], [0], [1], [1], [0, 1, 1, 1], [], []>} : vector<1x128xf32>, vector<1x128xf32>, vector<128x128xf32> -> vector<128x128xf32>
      %cst_26 = arith.constant 1.000000e+00 : f32
      %50 = arith.subf %cst_26, %4 : f32
      %c0_27 = arith.constant 0 : index
      %c0_28 = arith.constant 0 : index
      %51 = vector.load %arg11[%c0_27, %c0_28] : memref<128x128xf32, #tpu.memory_space<vmem>>, vector<128x128xf32>
      %52 = vector.broadcast %50 : f32 to vector<128x128xf32>
      %53 = arith.mulf %52, %51 : vector<128x128xf32>
      %54 = vector.broadcast %4 : f32 to vector<128x128xf32>
      %55 = arith.mulf %54, %49 : vector<128x128xf32>
      %56 = arith.addf %53, %55 : vector<128x128xf32>
      %c0_29 = arith.constant 0 : index
      %c0_30 = arith.constant 0 : index
      %57 = vector.load %arg11[%c0_29, %c0_30] : memref<128x128xf32, #tpu.memory_space<vmem>>, vector<128x128xf32>
      tpu.vector_store %arg11[%c0_29, %c0_30], %56 {strides = array<i32>} : memref<128x128xf32, #tpu.memory_space<vmem>>, vector<128x128xf32>,
      %c0_31 = arith.constant 0 : index
      %c0_32 = arith.constant 0 : index
      %58 = vector.load %arg12[%c0_31, %c0_32] : memref<1x128xf32, #tpu.memory_space<vmem>>, vector<1x128xf32>
      tpu.vector_store %arg12[%c0_31, %c0_32], %47 {strides = array<i32>} : memref<1x128xf32, #tpu.memory_space<vmem>>, vector<1x128xf32>,
    } else {
    }
    %c1_i32_12 = arith.constant 1 : i32
    %32 = arith.cmpi eq, %arg0, %c1_i32_12 : i32
    %33 = arith.extui %32 : i1 to i32
    %c0_i32_13 = arith.constant 0 : i32
    %34 = arith.cmpi ne, %33, %c0_i32_13 : i32
    scf.if %34 {
      "tpu.region"() ({
        %35 = tpu.sem_alloc : memref<!tpu.dma_semaphore, #tpu.memory_space<semaphore_mem>>
        tpu.enqueue_dma source(%arg11 : memref<128x128xf32, #tpu.memory_space<vmem>>) target(%arg9 : memref<128x128xf32, #tpu.memory_space<any>>) target_semaphore(%35 : memref<!tpu.dma_semaphore, #tpu.memory_space<semaphore_mem>>)
        tpu.wait_dma2 semaphore(%35 : memref<!tpu.dma_semaphore, #tpu.memory_space<semaphore_mem>>) src(%arg11 : memref<128x128xf32, #tpu.memory_space<vmem>>) dst(%arg9 : memref<128x128xf32, #tpu.memory_space<any>>)
        tpu.yield
      }) : () -> ()
    } else {
    }
    return
  }
  func.func @transform_0(%arg0: i32) -> i32 {
    %c0_i32 = arith.constant 0 : i32
    %c0_i32_0 = arith.constant 0 : i32
    return %c0_i32 : i32
  }
  func.func @transform_1(%arg0: i32) -> (i32, i32) {
    %c0_i32 = arith.constant 0 : i32
    %c0_i32_0 = arith.constant 0 : i32
    return %arg0, %c0_i32 : i32, i32
  }
  func.func @transform_2(%arg0: i32) -> (i32, i32) {
    %c0_i32 = arith.constant 0 : i32
    %c0_i32_0 = arith.constant 0 : i32
    %c0_i32_1 = arith.constant 0 : i32
    return %c0_i32, %c0_i32_0 : i32, i32
  }
  func.func @transform_5(%arg0: i32) -> i32 {
    %c0_i32 = arith.constant 0 : i32
    %c0_i32_0 = arith.constant 0 : i32
    return %c0_i32 : i32
  }
  func.func @transform_6(%arg0: i32) -> i32 {
    %c0_i32 = arith.constant 0 : i32
    %c0_i32_0 = arith.constant 0 : i32
    return %c0_i32 : i32
  }
  func.func @transform_7(%arg0: i32) -> (i32, i32) {
    %c0_i32 = arith.constant 0 : i32
    %c0_i32_0 = arith.constant 0 : i32
    return %arg0, %c0_i32 : i32, i32
  }
}

</mosaic_0001>

<llo_original>
// kernel: plastic_rollout.1
$region0: #{plastic_rollout.1}
  #allocation0 [shape = 'u32[]', space=smem, size = 0x4, offset = 0x4, fixed_abs, tag = 'smem constant byte address 0x4 - core index']
  #allocation1 [shape = 'u32[72,128]{1,0:T(1,128)}', space=vmem, size = 0x9000, scoped, tag = 'internal scratch']
  #allocation2 [shape = 'f32[128,128]{1,0:T(8,128)}', space=vmem, size = 0x10000, scoped, tag = 'scratch operand']
  #allocation3 [shape = 'f32[128,128]{1,0:T(8,128)}', space=vmem, size = 0x10000, scoped, tag = 'scratch operand']
  #allocation4 [shape = 'f32[1,128]{1,0:T(1,128)}', space=vmem, size = 0x200, scoped, tag = 'scratch operand']
  #allocation5 [shape = 's32[1]{0:T(128)S(6)}', space=smem, size = 0x200, scoped, tag = 'scoped memory for plastic_rollout.1']
  #allocation6 [shape = 'f32[1]{0:T(128)S(6)}', space=smem, size = 0x200, scoped, tag = 'scoped memory for plastic_rollout.1']
  #allocation7 [shape = 'f32[1]{0:T(128)S(6)}', space=smem, size = 0x200, scoped, tag = 'scoped memory for plastic_rollout.1']
  #allocation11 [shape = 's32[]', space=sflag, size = 0x4, offset = 0, fixed_abs, tag = 'sflag constant byte address 0x0 - dummy sync flag']
  #allocation12 [shape = 's32[]', space=sflag, size = 0x4, offset = 0, fixed_abs, tag = 'sflag constant byte address 0x0 - dummy sync flag']
  #allocation13 [shape = 'u32[]', space=smem, size = 0x4, offset = 0x44, fixed_abs, tag = 'smem constant byte address 0x44 - assertion arg 0']
  #allocation14 [shape = 'u32[]', space=smem, size = 0x4, offset = 0x48, fixed_abs, tag = 'smem constant byte address 0x48 - assertion arg 1']
  #allocation16 [shape = 's32[]', space=sflag, size = 0x4, offset = 0, fixed_abs, tag = 'sflag constant byte address 0x0 - dummy sync flag']
  #allocation17 [shape = 's32[]', space=sflag, size = 0x4, offset = 0, fixed_abs, tag = 'sflag constant byte address 0x0 - dummy sync flag']
  #allocation19 [shape = 's32[]', space=sflag, size = 0x4, offset = 0, fixed_abs, tag = 'sflag constant byte address 0x0 - dummy sync flag']
  #allocation20 [shape = 's32[]', space=sflag, size = 0x4, offset = 0, fixed_abs, tag = 'sflag constant byte address 0x0 - dummy sync flag']
  %s0 = inlined_call_operand.<no memory space> [shape: s32[1], index: 0, kind: input, shape index: {}]
  %s1 = inlined_call_operand.vmem [shape: f32[16,128], index: 1, kind: input, shape index: {}]
  %s2 = inlined_call_operand.vmem [shape: f32[1,128], index: 2, kind: input, shape index: {}]
  %s3 = inlined_call_operand.hbm [shape: f32[128,128], index: 3, kind: input, shape index: {}]
  %s4 = inlined_call_operand.hbm [shape: f32[128,128], index: 4, kind: input, shape index: {}, may-alias: {4,8}]
  %s5 = inlined_call_operand.<no memory space> [shape: f32[1], index: 5, kind: input, shape index: {}]
  %s6 = inlined_call_operand.<no memory space> [shape: f32[1], index: 6, kind: input, shape index: {}]
  %s7 = inlined_call_operand.hbm [shape: f32[16,128], index: 7, kind: output, shape index: {0}]
  %s8 = inlined_call_operand.hbm [shape: f32[128,128], index: 8, kind: output, shape index: {1}, may-alias: {4,8}]
  %9 = xla_tuple %s7, %s8
  %s10 = sld [smem:[#allocation0]]
  $region108: #{plastic_rollout.1} parent=0
    _
  %s12 = ssub.s32 1, %s10
  %s13 = scalar_select 0, %s12, %s10
  %14 = sst [smem:[#allocation5]] %s0
  %15 = sst [smem:[#allocation6]] %s5
  %16 = sst [smem:[#allocation7]] %s6
  $region1: #{plastic_rollout.1} parent=0
    #allocation8 [shape = 'u8[8192]{0}', space=vmem, size = 0x2000, scoped, tag = 'output window, operand 0']
    #allocation9 [shape = 's32[2]{0}', space=sflag, size = 0x8, scoped, tag = 'scoped memory for plastic_rollout.1']
    %17 = vsyncpa [#allocation9], 0
    %s18 = scalar_lea.sflag [#allocation9], 1
    %19 = vsyncpa %s18, 0
    loop: start=0, step=1, limit=4
    $region2: #{plastic_rollout.1} parent=1 // loop_pre_header
      _
    $region3: #{plastic_rollout.1} parent=1 // loop_header
      %s21 = sphi 0, %s25
      %p22 = scmp.ge.s32.totalorder %s21, 4
      %s29 = sphi 0, %s29
      %s31 = sphi 0, %s29
      %s32 = sphi 0, %s31
      %s46 = sphi 0, %s32
      %s52 = sphi 0, %s54
      %s55 = sphi 0, %s52
      %s56 = sphi 0, %s55
      %s72 = sphi 0, %s56
      %s76 = sphi 0, %s76
      %s78 = sphi 0, %s76
      %s79 = sphi 0, %s78
      %s93 = sphi 0, %s79
      %s97 = sphi 0, %s97
      %s99 = sphi 0, %s97
      %s100 = sphi 0, %s99
      %s114 = sphi 0, %s100
      %s118 = sphi 0, %s118
      %s120 = sphi 0, %s118
      %s121 = sphi 0, %s120
      %s135 = sphi 0, %s121
      %s141 = sphi 0, %s143
      %s144 = sphi 0, %s141
      %s145 = sphi 0, %s144
      %s161 = sphi 0, %s145
    $region4: #{plastic_rollout.1} parent=1 // loop_header_branch
      %24 = sbr.rel (%p22) target = $region8
    $region5: #{plastic_rollout.1} parent=1 // loop_body
      %s26 = ssub.s32 %s21, 1
      %s27 = ssub.s32 %s21, 2
      %s28 = sadd.s32 %s21, 1
      %s30 = sadd.s32 %s29, 1
      %p33 = scmp.eq.s32.totalorder %s21, 1
      %p34 = scmp.ne.s32.totalorder %s29, %s31
      %p35 = scmp.eq.s32.totalorder %s21, 0
      %p36 = por %p34, %p35
      %p37 = scmp.ne.s32.totalorder %s29, %s31
      %p38 = scmp.eq.s32.totalorder %s26, 1
      %p39 = por %p37, %p38
      %p40 = scmp.ne.s32.totalorder %s31, %s32
      %p41 = scmp.eq.s32.totalorder %s26, 0
      %p42 = por %p40, %p41
      %p43 = scmp.ne.s32.totalorder %s31, %s32
      %p44 = scmp.eq.s32.totalorder %s27, 1
      %p45 = por %p43, %p44
      %p47 = scmp.ne.s32.totalorder %s32, %s46
      %p48 = scmp.eq.s32.totalorder %s27, 0
      %p49 = por %p47, %p48
      %s50 = ssub.s32 %s21, %s28
      %p51 = scmp.eq.s32.totalorder %s50, 0
      %s53 = sadd.s32 %s52, 1
      %s54 = scalar_select %p51, %s52, %s53
      %p57 = pneg %p51
      %p58 = scmp.eq.s32.totalorder %s21, 1
      %p59 = por %p57, %p58
      %p60 = scmp.ne.s32.totalorder %s52, %s55
      %p61 = scmp.eq.s32.totalorder %s21, 0
      %p62 = por %p60, %p61
      %p63 = scmp.ne.s32.totalorder %s52, %s55
      %p64 = scmp.eq.s32.totalorder %s26, 1
      %p65 = por %p63, %p64
      %p66 = scmp.ne.s32.totalorder %s55, %s56
      %p67 = scmp.eq.s32.totalorder %s26, 0
      %p68 = por %p66, %p67
      %p69 = scmp.ne.s32.totalorder %s55, %s56
      %p70 = scmp.eq.s32.totalorder %s27, 1
      %p71 = por %p69, %p70
      %p73 = scmp.ne.s32.totalorder %s56, %s72
      %p74 = scmp.eq.s32.totalorder %s27, 0
      %p75 = por %p73, %p74
      %s77 = sadd.s32 %s76, 1
      %p80 = scmp.eq.s32.totalorder %s21, 1
      %p81 = scmp.ne.s32.totalorder %s76, %s78
      %p82 = scmp.eq.s32.totalorder %s21, 0
      %p83 = por %p81, %p82
      %p84 = scmp.ne.s32.totalorder %s76, %s78
      %p85 = scmp.eq.s32.totalorder %s26, 1
      %p86 = por %p84, %p85
      %p87 = scmp.ne.s32.totalorder %s78, %s79
      %p88 = scmp.eq.s32.totalorder %s26, 0
      %p89 = por %p87, %p88
      %p90 = scmp.ne.s32.totalorder %s78, %s79
      %p91 = scmp.eq.s32.totalorder %s27, 1
      %p92 = por %p90, %p91
      %p94 = scmp.ne.s32.totalorder %s79, %s93
      %p95 = scmp.eq.s32.totalorder %s27, 0
      %p96 = por %p94, %p95
      %s98 = sadd.s32 %s97, 1
      %p101 = scmp.eq.s32.totalorder %s21, 1
      %p102 = scmp.ne.s32.totalorder %s97, %s99
      %p103 = scmp.eq.s32.totalorder %s21, 0
      %p104 = por %p102, %p103
      %p105 = scmp.ne.s32.totalorder %s97, %s99
      %p106 = scmp.eq.s32.totalorder %s26, 1
      %p107 = por %p105, %p106
      %p108 = scmp.ne.s32.totalorder %s99, %s100
      %p109 = scmp.eq.s32.totalorder %s26, 0
      %p110 = por %p108, %p109
      %p111 = scmp.ne.s32.totalorder %s99, %s100
      %p112 = scmp.eq.s32.totalorder %s27, 1
      %p113 = por %p111, %p112
      %p115 = scmp.ne.s32.totalorder %s100, %s114
      %p116 = scmp.eq.s32.totalorder %s27, 0
      %p117 = por %p115, %p116
      %s119 = sadd.s32 %s118, 1
      %p122 = scmp.eq.s32.totalorder %s21, 1
      %p123 = scmp.ne.s32.totalorder %s118, %s120
      %p124 = scmp.eq.s32.totalorder %s21, 0
      %p125 = por %p123, %p124
      %p126 = scmp.ne.s32.totalorder %s118, %s120
      %p127 = scmp.eq.s32.totalorder %s26, 1
      %p128 = por %p126, %p127
      %p129 = scmp.ne.s32.totalorder %s120, %s121
      %p130 = scmp.eq.s32.totalorder %s26, 0
      %p131 = por %p129, %p130
      %p132 = scmp.ne.s32.totalorder %s120, %s121
      %p133 = scmp.eq.s32.totalorder %s27, 1
      %p134 = por %p132, %p133
      %p136 = scmp.ne.s32.totalorder %s121, %s135
      %p137 = scmp.eq.s32.totalorder %s27, 0
      %p138 = por %p136, %p137
      %s139 = ssub.s32 %s21, %s28
      %p140 = scmp.eq.s32.totalorder %s139, 0
      %s142 = sadd.s32 %s141, 1
      %s143 = scalar_select %p140, %s141, %s142
      %p146 = pneg %p140
      %p147 = scmp.eq.s32.totalorder %s21, 1
      %p148 = por %p146, %p147
      %p149 = scmp.ne.s32.totalorder %s141, %s144
      %p150 = scmp.eq.s32.totalorder %s21, 0
      %p151 = por %p149, %p150
      %p152 = scmp.ne.s32.totalorder %s141, %s144
      %p153 = scmp.eq.s32.totalorder %s26, 1
      %p154 = por %p152, %p153
      %p155 = scmp.ne.s32.totalorder %s144, %s145
      %p156 = scmp.eq.s32.totalorder %s26, 0
      %p157 = por %p155, %p156
      %p158 = scmp.ne.s32.totalorder %s144, %s145
      %p159 = scmp.eq.s32.totalorder %s27, 1
      %p160 = por %p158, %p159
      %p162 = scmp.ne.s32.totalorder %s145, %s161
      %p163 = scmp.eq.s32.totalorder %s27, 0
      %p164 = por %p162, %p163
      %p165 = scmp.le.s32.totalorder 1, %s21
      %p166 = scmp.lt.s32.totalorder %s21, 3
      %p167 = pnand %p165, %p166
      %p168 = pneg %p167
      // Predicated region
      $region9: #{plastic_rollout.1} parent=5 // pred_check
        _
      $region10: #{plastic_rollout.1} parent=5 // pred_check_branch
        %170 = sbr.rel (%p167) target = $region12
      $region11: #{plastic_rollout.1} parent=5 // pred_region
        %s171 = ssub.s32 %s21, 1
        // Predicated region
        $region13: #{plastic_rollout.1} parent=11 // pred_check
          %p172 = pneg %p42
        $region14: #{plastic_rollout.1} parent=11 // pred_check_branch
          %174 = sbr.rel (%p172) target = $region16
        $region15: #{plastic_rollout.1} parent=11 // pred_region
          _
        $region16: #{plastic_rollout.1} parent=11 // pred_fallthru
          _
        // Predicated region
        $region17: #{plastic_rollout.1} parent=11 // pred_check
          %p175 = pneg %p89
        $region18: #{plastic_rollout.1} parent=11 // pred_check_branch
          %177 = sbr.rel (%p175) target = $region20
        $region19: #{plastic_rollout.1} parent=11 // pred_region
          _
        $region20: #{plastic_rollout.1} parent=11 // pred_fallthru
          _
        // Predicated region
        $region21: #{plastic_rollout.1} parent=11 // pred_check
          %p178 = pneg %p110
        $region22: #{plastic_rollout.1} parent=11 // pred_check_branch
          %180 = sbr.rel (%p178) target = $region24
        $region23: #{plastic_rollout.1} parent=11 // pred_region
          _
        $region24: #{plastic_rollout.1} parent=11 // pred_fallthru
          _
        // Predicated region
        $region25: #{plastic_rollout.1} parent=11 // pred_check
          %p181 = pneg %p131
        $region26: #{plastic_rollout.1} parent=11 // pred_check_branch
          %183 = sbr.rel (%p181) target = $region28
        $region27: #{plastic_rollout.1} parent=11 // pred_region
          _
        $region28: #{plastic_rollout.1} parent=11 // pred_fallthru
          _
      $region12: #{plastic_rollout.1} parent=5 // pred_fallthru
        _
      %p184 = scmp.lt.s32.totalorder %s21, 2
      // Predicated region
      $region29: #{plastic_rollout.1} parent=5 // pred_check
        %p185 = pneg %p184
      $region30: #{plastic_rollout.1} parent=5 // pred_check_branch
        %187 = sbr.rel (%p185) target = $region32
      $region31: #{plastic_rollout.1} parent=5 // pred_region
        // Predicated region
        $region33: #{plastic_rollout.1} parent=31 // pred_check
          %p188 = pneg %p62
        $region34: #{plastic_rollout.1} parent=31 // pred_check_branch
          %190 = sbr.rel (%p188) target = $region36
        $region35: #{plastic_rollout.1} parent=31 // pred_region
          %p191 = scmp.lt.s32.totalorder %s21, 1
          %s192 = scalar_select %p191, %s21, 1
          %s193 = smul.addr %s192, 8
          %s194 = scalar_lea.vmem %s1, %s193
        $region36: #{plastic_rollout.1} parent=31 // pred_fallthru
          _
      $region32: #{plastic_rollout.1} parent=5 // pred_fallthru
        _
      %p195 = scmp.le.s32.totalorder 1, %s21
      %p196 = scmp.lt.s32.totalorder %s21, 3
      %p197 = pnand %p195, %p196
      %p198 = pneg %p197
      // Predicated region
      $region37: #{plastic_rollout.1} parent=5 // pred_check
        _
      $region38: #{plastic_rollout.1} parent=5 // pred_check_branch
        %200 = sbr.rel (%p197) target = $region40
      $region39: #{plastic_rollout.1} parent=5 // pred_region
        %s201 = ssub.s32 %s21, 1
        %p202 = pneg %p42
        %p203 = pneg %p39
        %p204 = scmp.lt.s32.totalorder %s26, 1
        %s205 = scalar_select %p204, %s26, 1
        %s206 = smul.addr %s205, 8
        %s207 = scalar_lea.vmem %s1, %s206
        %p208 = pneg %p68
        %p209 = pneg %p65
        %p210 = pneg %p89
        %p211 = pneg %p86
        %p212 = pneg %p110
        %p213 = pneg %p107
        %p214 = pneg %p131
        %p215 = pneg %p128
        %p216 = pneg %p157
        %p217 = pneg %p154
        %s218 = sand.u32 %s144, 1
        %s219 = scalar_lea.sflag [#allocation9], %s218
        %s220 = sand.u32 %s144, 1
        %s221 = smul.addr %s220, 8
        %s222 = scalar_lea.vmem [#allocation8], %s221
        %p223 = scmp.lt.s32.totalorder %s26, 1
        %s224 = scalar_select %p223, %s26, 1
        %s225 = smul.addr %s224, 8
        %s226 = scalar_lea.vmem %s1, %s225
        %p227 = scmp.eq.s32.totalorder %s26, 0
        // Predicated region
        $region41: #{plastic_rollout.1} parent=39 // pred_check
          %p228 = pneg %p227
        $region42: #{plastic_rollout.1} parent=39 // pred_check_branch
          %230 = sbr.rel (%p228) target = $region44
        $region43: #{plastic_rollout.1} parent=39 // pred_region
          $region45: #{plastic_rollout.1} parent=43
            #allocation10 [shape = 's32[1]{0}', space=sflag, size = 0x4, scoped, tag = 'scoped memory for plastic_rollout.1']
            // Predicated region
            $region46: #{plastic_rollout.1} parent=45 // pred_check
              _
            $region47: #{plastic_rollout.1} parent=45 // pred_check_branch
              %232 = sbr.rel target = $region49
            $region48: #{plastic_rollout.1} parent=45 // pred_region
              %233 = sst [smem:[#allocation13]] [#allocation12]
              %234 = sst [smem:[#allocation14]] [#allocation11]
            $region49: #{plastic_rollout.1} parent=45 // pred_fallthru
              _
            %236 = shalt.err (0)
            %s238 = sshll.u32 %s3, 4
            %s239 = int_to_ptr.hbm [resolvable:$true] %s238
            %s240 = sshll.u32 [#allocation2], 4
            %s241 = int_to_ptr.vmem [resolvable:$true] %s240
            %243 = dma.hbm_to_vmem [thread:$0]  %s239, 2048, %s241, [#allocation10]
            %s244 = smul.u32 128, 1
            %s245 = sshll.u32 %s244, 4
            %246 = dma.done [#allocation10], %s245
          $region50: #{plastic_rollout.1} parent=43
            #allocation15 [shape = 's32[1]{0}', space=sflag, size = 0x4, scoped, tag = 'scoped memory for plastic_rollout.1']
            // Predicated region
            $region51: #{plastic_rollout.1} parent=50 // pred_check
              _
            $region52: #{plastic_rollout.1} parent=50 // pred_check_branch
              %248 = sbr.rel target = $region54
            $region53: #{plastic_rollout.1} parent=50 // pred_region
              %249 = sst [smem:[#allocation13]] [#allocation17]
              %250 = sst [smem:[#allocation14]] [#allocation16]
            $region54: #{plastic_rollout.1} parent=50 // pred_fallthru
              _
            %252 = shalt.err (0)
            %s254 = sshll.u32 %s4, 4
            %s255 = int_to_ptr.hbm [resolvable:$true] %s254
            %s256 = sshll.u32 [#allocation3], 4
            %s257 = int_to_ptr.vmem [resolvable:$true] %s256
            %259 = dma.hbm_to_vmem [thread:$0]  %s255, 2048, %s257, [#allocation15]
            %s260 = smul.u32 128, 1
            %s261 = sshll.u32 %s260, 4
            %262 = dma.done [#allocation15], %s261
          %v263 = vld [vmem:[%s2] sm:$0x1]
          %264 = vst [vmem:[#allocation4] sm:$0x1] %v263
        $region44: #{plastic_rollout.1} parent=39 // pred_fallthru
          _
        %s265 = sld [smem:[#allocation6]]
        %s266 = sld [smem:[#allocation7]]
        %s267 = sld [smem:[#allocation5]]
        %s268 = smul.u32 %s26, 8
        %s269 = ssub.s32 %s267, %s268
        %p270 = scmp.gt.s32.totalorder %s269, 0
        // Predicated region
        $region55: #{plastic_rollout.1} parent=39 // pred_check
          %p271 = pneg %p270
        $region56: #{plastic_rollout.1} parent=39 // pred_check_branch
          %273 = sbr.rel (%p271) target = $region58
        $region57: #{plastic_rollout.1} parent=39 // pred_region
          %v274 = vld [vmem:[%s226] sm:$0x1]
          %v275 = vld [vmem:[#allocation4] sm:$0x1]
          %v276 = vld [vmem:[#allocation2] sm:$0xff]
          %v277 = vld [vmem:[#allocation2 + $0x8] sm:$0xff]
          %v278 = vld [vmem:[#allocation2 + $0x10] sm:$0xff]
          %v279 = vld [vmem:[#allocation2 + $0x18] sm:$0xff]
          %v280 = vld [vmem:[#allocation2 + $0x20] sm:$0xff]
          %v281 = vld [vmem:[#allocation2 + $0x28] sm:$0xff]
          %v282 = vld [vmem:[#allocation2 + $0x30] sm:$0xff]
          %v283 = vld [vmem:[#allocation2 + $0x38] sm:$0xff]
          %v284 = vld [vmem:[#allocation2 + $0x40] sm:$0xff]
          %v285 = vld [vmem:[#allocation2 + $0x48] sm:$0xff]
          %v286 = vld [vmem:[#allocation2 + $0x50] sm:$0xff]
          %v287 = vld [vmem:[#allocation2 + $0x58] sm:$0xff]
          %v288 = vld [vmem:[#allocation2 + $0x60] sm:$0xff]
          %v289 = vld [vmem:[#allocation2 + $0x68] sm:$0xff]
          %v290 = vld [vmem:[#allocation2 + $0x70] sm:$0xff]
          %v291 = vld [vmem:[#allocation2 + $0x78] sm:$0xff]
          %v292 = vld [vmem:[#allocation3] sm:$0xff]
          %v293 = vld [vmem:[#allocation3 + $0x8] sm:$0xff]
          %v294 = vld [vmem:[#allocation3 + $0x10] sm:$0xff]
          %v295 = vld [vmem:[#allocation3 + $0x18] sm:$0xff]
          %v296 = vld [vmem:[#allocation3 + $0x20] sm:$0xff]
          %v297 = vld [vmem:[#allocation3 + $0x28] sm:$0xff]
          %v298 = vld [vmem:[#allocation3 + $0x30] sm:$0xff]
          %v299 = vld [vmem:[#allocation3 + $0x38] sm:$0xff]
          %v300 = vld [vmem:[#allocation3 + $0x40] sm:$0xff]
          %v301 = vld [vmem:[#allocation3 + $0x48] sm:$0xff]
          %v302 = vld [vmem:[#allocation3 + $0x50] sm:$0xff]
          %v303 = vld [vmem:[#allocation3 + $0x58] sm:$0xff]
          %v304 = vld [vmem:[#allocation3 + $0x60] sm:$0xff]
          %v305 = vld [vmem:[#allocation3 + $0x68] sm:$0xff]
          %v306 = vld [vmem:[#allocation3 + $0x70] sm:$0xff]
          %v307 = vld [vmem:[#allocation3 + $0x78] sm:$0xff]
          %308 = vmatpush.msra.mxu0 %v307
          %309 = vmatpush.msra.mxu0 %v306
          %310 = vmatpush.msra.mxu0 %v305
          %311 = vmatpush.msra.mxu0 %v304
          %312 = vmatpush.msra.mxu0 %v303
          %313 = vmatpush.msra.mxu0 %v302
          %314 = vmatpush.msra.mxu0 %v301
          %315 = vmatpush.msra.mxu0 %v300
          %316 = vmatpush.msra.mxu0 %v299
          %317 = vmatpush.msra.mxu0 %v298
          %318 = vmatpush.msra.mxu0 %v297
          %319 = vmatpush.msra.mxu0 %v296
          %320 = vmatpush.msra.mxu0 %v295
          %321 = vmatpush.msra.mxu0 %v294
          %322 = vmatpush.msra.mxu0 %v293
          %323 = vmatpush.msra.mxu0 %v292
          %324 = vmatmul.f32.gmra.mxu0 %v275
          %v325 = vpop.f32.mrf.mxu0
          %v326 = vadd.f32 0.0, %v325
          %327 = vdwg.mxu0
          %v328 = vstv %s265
          %v329 = vmul.f32 %v328, %v326
          %330 = vmatpush.msra.mxu0 %v291
          %331 = vmatpush.msra.mxu0 %v290
          %332 = vmatpush.msra.mxu0 %v289
          %333 = vmatpush.msra.mxu0 %v288
          %334 = vmatpush.msra.mxu0 %v287
          %335 = vmatpush.msra.mxu0 %v286
          %336 = vmatpush.msra.mxu0 %v285
          %337 = vmatpush.msra.mxu0 %v284
          %338 = vmatpush.msra.mxu0 %v283
          %339 = vmatpush.msra.mxu0 %v282
          %340 = vmatpush.msra.mxu0 %v281
          %341 = vmatpush.msra.mxu0 %v280
          %342 = vmatpush.msra.mxu0 %v279
          %343 = vmatpush.msra.mxu0 %v278
          %344 = vmatpush.msra.mxu0 %v277
          %345 = vmatpush.msra.mxu0 %v276
          %346 = vmatmul.f32.gmra.mxu0 %v275
          %v347 = vpop.f32.mrf.mxu0
          %v348 = vadd.f32 %v329, %v347
          %349 = vdwg.mxu0
          %vm350 = vcmp.ne.f32.partialorder %v274, 0.0
          %v351 = vtanh.pop %v348
          %v352 = vsel %vm350, %v274, %v351
          %353 = vst [vmem:[%s222] sm:$0x1] %v352
          %354 = vxpose.xlu0.b32.start [1/16] %v275, 128
          %355 = vxpose.xlu0.b32.cont [2/16] 0.0, 128
          %356 = vxpose.xlu0.b32.cont [3/16] 0.0, 128
          %357 = vxpose.xlu0.b32.cont [4/16] 0.0, 128
          %358 = vxpose.xlu0.b32.cont [5/16] 0.0, 128
          %359 = vxpose.xlu0.b32.cont [6/16] 0.0, 128
          %360 = vxpose.xlu0.b32.cont [7/16] 0.0, 128
          %361 = vxpose.xlu0.b32.cont [8/16] 0.0, 128
          %362 = vxpose.xlu0.b32.cont [9/16] 0.0, 128
          %363 = vxpose.xlu0.b32.cont [10/16] 0.0, 128
          %364 = vxpose.xlu0.b32.cont [11/16] 0.0, 128
          %365 = vxpose.xlu0.b32.cont [12/16] 0.0, 128
          %366 = vxpose.xlu0.b32.cont [13/16] 0.0, 128
          %367 = vxpose.xlu0.b32.cont [14/16] 0.0, 128
          %368 = vxpose.xlu0.b32.cont [15/16] 0.0, 128
          %369 = vxpose.xlu0.b32.end [16/16] 0.0, 128
          %v370 = vpop.trf.xlu0
          %v371 = vpop.trf.xlu0
          %v372 = vpop.trf.xlu0
          %v373 = vpop.trf.xlu0
          %v374 = vpop.trf.xlu0
          %v375 = vpop.trf.xlu0
          %v376 = vpop.trf.xlu0
          %v377 = vpop.trf.xlu0
          %v378 = vpop.trf.xlu0
          %v379 = vpop.trf.xlu0
          %v380 = vpop.trf.xlu0
          %v381 = vpop.trf.xlu0
          %v382 = vpop.trf.xlu0
          %v383 = vpop.trf.xlu0
          %v384 = vpop.trf.xlu0
          %v385 = vpop.trf.xlu0
          %vm386 = vcmask 7168
          %v388 = vsel %vm386, %v370, 0
          %v391 = vsel %vm386, %v371, 0
          %v394 = vsel %vm386, %v372, 0
          %v397 = vsel %vm386, %v373, 0
          %v400 = vsel %vm386, %v374, 0
          %v403 = vsel %vm386, %v375, 0
          %v406 = vsel %vm386, %v376, 0
          %v409 = vsel %vm386, %v377, 0
          %v412 = vsel %vm386, %v378, 0
          %v415 = vsel %vm386, %v379, 0
          %v418 = vsel %vm386, %v380, 0
          %v421 = vsel %vm386, %v381, 0
          %v424 = vsel %vm386, %v382, 0
          %v427 = vsel %vm386, %v383, 0
          %v430 = vsel %vm386, %v384, 0
          %v433 = vsel %vm386, %v385, 0
          %vm435 = vcmask 1040384
          %v437 = vsel %vm435, %v352, 0
          %439 = vmatpush.msra.mxu0 0.0
          %440 = vmatpush.msra.mxu0 0.0
          %441 = vmatpush.msra.mxu0 0.0
          %442 = vmatpush.msra.mxu0 0.0
          %443 = vmatpush.msra.mxu0 0.0
          %444 = vmatpush.msra.mxu0 0.0
          %445 = vmatpush.msra.mxu0 0.0
          %446 = vmatpush.msra.mxu0 0.0
          %447 = vmatpush.msra.mxu0 0.0
          %448 = vmatpush.msra.mxu0 0.0
          %449 = vmatpush.msra.mxu0 0.0
          %450 = vmatpush.msra.mxu0 0.0
          %451 = vmatpush.msra.mxu0 0.0
          %452 = vmatpush.msra.mxu0 0.0
          %453 = vmatpush.msra.mxu0 0.0
          %454 = vmatpush.msra.mxu0 %v437
          %455 = vmatmul.f32.gmra.mxu0 %v388
          %v456 = vpop.f32.mrf.mxu0
          %v457 = vadd.f32 0.0, %v456
          %458 = vmatmul.f32.gmra.mxu0 %v391
          %v459 = vpop.f32.mrf.mxu0
          %v460 = vadd.f32 0.0, %v459
          %461 = vmatmul.f32.gmra.mxu0 %v394
          %v462 = vpop.f32.mrf.mxu0
          %v463 = vadd.f32 0.0, %v462
          %464 = vmatmul.f32.gmra.mxu0 %v397
          %v465 = vpop.f32.mrf.mxu0
          %v466 = vadd.f32 0.0, %v465
          %467 = vmatmul.f32.gmra.mxu0 %v400
          %v468 = vpop.f32.mrf.mxu0
          %v469 = vadd.f32 0.0, %v468
          %470 = vmatmul.f32.gmra.mxu0 %v403
          %v471 = vpop.f32.mrf.mxu0
          %v472 = vadd.f32 0.0, %v471
          %473 = vmatmul.f32.gmra.mxu0 %v406
          %v474 = vpop.f32.mrf.mxu0
          %v475 = vadd.f32 0.0, %v474
          %476 = vmatmul.f32.gmra.mxu0 %v409
          %v477 = vpop.f32.mrf.mxu0
          %v478 = vadd.f32 0.0, %v477
          %479 = vmatmul.f32.gmra.mxu0 %v412
          %v480 = vpop.f32.mrf.mxu0
          %v481 = vadd.f32 0.0, %v480
          %482 = vmatmul.f32.gmra.mxu0 %v415
          %v483 = vpop.f32.mrf.mxu0
          %v484 = vadd.f32 0.0, %v483
          %485 = vmatmul.f32.gmra.mxu0 %v418
          %v486 = vpop.f32.mrf.mxu0
          %v487 = vadd.f32 0.0, %v486
          %488 = vmatmul.f32.gmra.mxu0 %v421
          %v489 = vpop.f32.mrf.mxu0
          %v490 = vadd.f32 0.0, %v489
          %491 = vmatmul.f32.gmra.mxu0 %v424
          %v492 = vpop.f32.mrf.mxu0
          %v493 = vadd.f32 0.0, %v492
          %494 = vmatmul.f32.gmra.mxu0 %v427
          %v495 = vpop.f32.mrf.mxu0
          %v496 = vadd.f32 0.0, %v495
          %497 = vmatmul.f32.gmra.mxu0 %v430
          %v498 = vpop.f32.mrf.mxu0
          %v499 = vadd.f32 0.0, %v498
          %500 = vmatmul.f32.gmra.mxu0 %v433
          %v501 = vpop.f32.mrf.mxu0
          %v502 = vadd.f32 0.0, %v501
          %503 = vdwg.mxu0
          %s504 = ssub.f32 1.0, %s266
          %v505 = vld [vmem:[#allocation3] sm:$0xff]
          %v506 = vld [vmem:[#allocation3 + $0x8] sm:$0xff]
          %v507 = vld [vmem:[#allocation3 + $0x10] sm:$0xff]
          %v508 = vld [vmem:[#allocation3 + $0x18] sm:$0xff]
          %v509 = vld [vmem:[#allocation3 + $0x20] sm:$0xff]
          %v510 = vld [vmem:[#allocation3 + $0x28] sm:$0xff]
          %v511 = vld [vmem:[#allocation3 + $0x30] sm:$0xff]
          %v512 = vld [vmem:[#allocation3 + $0x38] sm:$0xff]
          %v513 = vld [vmem:[#allocation3 + $0x40] sm:$0xff]
          %v514 = vld [vmem:[#allocation3 + $0x48] sm:$0xff]
          %v515 = vld [vmem:[#allocation3 + $0x50] sm:$0xff]
          %v516 = vld [vmem:[#allocation3 + $0x58] sm:$0xff]
          %v517 = vld [vmem:[#allocation3 + $0x60] sm:$0xff]
          %v518 = vld [vmem:[#allocation3 + $0x68] sm:$0xff]
          %v519 = vld [vmem:[#allocation3 + $0x70] sm:$0xff]
          %v520 = vld [vmem:[#allocation3 + $0x78] sm:$0xff]
          %v521 = vstv %s504
          %v522 = vmul.f32 %v521, %v505
          %v523 = vmul.f32 %v521, %v506
          %v524 = vmul.f32 %v521, %v507
          %v525 = vmul.f32 %v521, %v508
          %v526 = vmul.f32 %v521, %v509
          %v527 = vmul.f32 %v521, %v510
          %v528 = vmul.f32 %v521, %v511
          %v529 = vmul.f32 %v521, %v512
          %v530 = vmul.f32 %v521, %v513
          %v531 = vmul.f32 %v521, %v514
          %v532 = vmul.f32 %v521, %v515
          %v533 = vmul.f32 %v521, %v516
          %v534 = vmul.f32 %v521, %v517
          %v535 = vmul.f32 %v521, %v518
          %v536 = vmul.f32 %v521, %v519
          %v537 = vmul.f32 %v521, %v520
          %v538 = vstv %s266
          %v539 = vmul.f32 %v538, %v457
          %v540 = vmul.f32 %v538, %v460
          %v541 = vmul.f32 %v538, %v463
          %v542 = vmul.f32 %v538, %v466
          %v543 = vmul.f32 %v538, %v469
          %v544 = vmul.f32 %v538, %v472
          %v545 = vmul.f32 %v538, %v475
          %v546 = vmul.f32 %v538, %v478
          %v547 = vmul.f32 %v538, %v481
          %v548 = vmul.f32 %v538, %v484
          %v549 = vmul.f32 %v538, %v487
          %v550 = vmul.f32 %v538, %v490
          %v551 = vmul.f32 %v538, %v493
          %v552 = vmul.f32 %v538, %v496
          %v553 = vmul.f32 %v538, %v499
          %v554 = vmul.f32 %v538, %v502
          %v555 = vadd.f32 %v522, %v539
          %v556 = vadd.f32 %v523, %v540
          %v557 = vadd.f32 %v524, %v541
          %v558 = vadd.f32 %v525, %v542
          %v559 = vadd.f32 %v526, %v543
          %v560 = vadd.f32 %v527, %v544
          %v561 = vadd.f32 %v528, %v545
          %v562 = vadd.f32 %v529, %v546
          %v563 = vadd.f32 %v530, %v547
          %v564 = vadd.f32 %v531, %v548
          %v565 = vadd.f32 %v532, %v549
          %v566 = vadd.f32 %v533, %v550
          %v567 = vadd.f32 %v534, %v551
          %v568 = vadd.f32 %v535, %v552
          %v569 = vadd.f32 %v536, %v553
          %v570 = vadd.f32 %v537, %v554
          %571 = vst [vmem:[#allocation3] sm:$0xff] %v555
          %572 = vst [vmem:[#allocation3 + $0x8] sm:$0xff] %v556
          %573 = vst [vmem:[#allocation3 + $0x10] sm:$0xff] %v557
          %574 = vst [vmem:[#allocation3 + $0x18] sm:$0xff] %v558
          %575 = vst [vmem:[#allocation3 + $0x20] sm:$0xff] %v559
          %576 = vst [vmem:[#allocation3 + $0x28] sm:$0xff] %v560
          %577 = vst [vmem:[#allocation3 + $0x30] sm:$0xff] %v561
          %578 = vst [vmem:[#allocation3 + $0x38] sm:$0xff] %v562
          %579 = vst [vmem:[#allocation3 + $0x40] sm:$0xff] %v563
          %580 = vst [vmem:[#allocation3 + $0x48] sm:$0xff] %v564
          %581 = vst [vmem:[#allocation3 + $0x50] sm:$0xff] %v565
          %582 = vst [vmem:[#allocation3 + $0x58] sm:$0xff] %v566
          %583 = vst [vmem:[#allocation3 + $0x60] sm:$0xff] %v567
          %584 = vst [vmem:[#allocation3 + $0x68] sm:$0xff] %v568
          %585 = vst [vmem:[#allocation3 + $0x70] sm:$0xff] %v569
          %586 = vst [vmem:[#allocation3 + $0x78] sm:$0xff] %v570
          %587 = vst [vmem:[#allocation4] sm:$0x1] %v352
        $region58: #{plastic_rollout.1} parent=39 // pred_fallthru
          _
        %p588 = scmp.gt.s32.totalorder %s269, 1
        // Predicated region
        $region59: #{plastic_rollout.1} parent=39 // pred_check
          %p589 = pneg %p588
        $region60: #{plastic_rollout.1} parent=39 // pred_check_branch
          %591 = sbr.rel (%p589) target = $region62
        $region61: #{plastic_rollout.1} parent=39 // pred_region
          %v592 = vld [vmem:[%s226 + $0x1] sm:$0x1]
          %v593 = vld [vmem:[#allocation4] sm:$0x1]
          %v594 = vld [vmem:[#allocation2] sm:$0xff]
          %v595 = vld [vmem:[#allocation2 + $0x8] sm:$0xff]
          %v596 = vld [vmem:[#allocation2 + $0x10] sm:$0xff]
          %v597 = vld [vmem:[#allocation2 + $0x18] sm:$0xff]
          %v598 = vld [vmem:[#allocation2 + $0x20] sm:$0xff]
          %v599 = vld [vmem:[#allocation2 + $0x28] sm:$0xff]
          %v600 = vld [vmem:[#allocation2 + $0x30] sm:$0xff]
          %v601 = vld [vmem:[#allocation2 + $0x38] sm:$0xff]
          %v602 = vld [vmem:[#allocation2 + $0x40] sm:$0xff]
          %v603 = vld [vmem:[#allocation2 + $0x48] sm:$0xff]
          %v604 = vld [vmem:[#allocation2 + $0x50] sm:$0xff]
          %v605 = vld [vmem:[#allocation2 + $0x58] sm:$0xff]
          %v606 = vld [vmem:[#allocation2 + $0x60] sm:$0xff]
          %v607 = vld [vmem:[#allocation2 + $0x68] sm:$0xff]
          %v608 = vld [vmem:[#allocation2 + $0x70] sm:$0xff]
          %v609 = vld [vmem:[#allocation2 + $0x78] sm:$0xff]
          %v610 = vld [vmem:[#allocation3] sm:$0xff]
          %v611 = vld [vmem:[#allocation3 + $0x8] sm:$0xff]
          %v612 = vld [vmem:[#allocation3 + $0x10] sm:$0xff]
          %v613 = vld [vmem:[#allocation3 + $0x18] sm:$0xff]
          %v614 = vld [vmem:[#allocation3 + $0x20] sm:$0xff]
          %v615 = vld [vmem:[#allocation3 + $0x28] sm:$0xff]
          %v616 = vld [vmem:[#allocation3 + $0x30] sm:$0xff]
          %v617 = vld [vmem:[#allocation3 + $0x38] sm:$0xff]
          %v618 = vld [vmem:[#allocation3 + $0x40] sm:$0xff]
          %v619 = vld [vmem:[#allocation3 + $0x48] sm:$0xff]
          %v620 = vld [vmem:[#allocation3 + $0x50] sm:$0xff]
          %v621 = vld [vmem:[#allocation3 + $0x58] sm:$0xff]
          %v622 = vld [vmem:[#allocation3 + $0x60] sm:$0xff]
          %v623 = vld [vmem:[#allocation3 + $0x68] sm:$0xff]
          %v624 = vld [vmem:[#allocation3 + $0x70] sm:$0xff]
          %v625 = vld [vmem:[#allocation3 + $0x78] sm:$0xff]
          %626 = vmatpush.msra.mxu0 %v625
          %627 = vmatpush.msra.mxu0 %v624
          %628 = vmatpush.msra.mxu0 %v623
          %629 = vmatpush.msra.mxu0 %v622
          %630 = vmatpush.msra.mxu0 %v621
          %631 = vmatpush.msra.mxu0 %v620
          %632 = vmatpush.msra.mxu0 %v619
          %633 = vmatpush.msra.mxu0 %v618
          %634 = vmatpush.msra.mxu0 %v617
          %635 = vmatpush.msra.mxu0 %v616
          %636 = vmatpush.msra.mxu0 %v615
          %637 = vmatpush.msra.mxu0 %v614
          %638 = vmatpush.msra.mxu0 %v613
          %639 = vmatpush.msra.mxu0 %v612
          %640 = vmatpush.msra.mxu0 %v611
          %641 = vmatpush.msra.mxu0 %v610
          %642 = vmatmul.f32.gmra.mxu0 %v593
          %v643 = vpop.f32.mrf.mxu0
          %v644 = vadd.f32 0.0, %v643
          %645 = vdwg.mxu0
          %v646 = vstv %s265
          %v647 = vmul.f32 %v646, %v644
          %648 = vmatpush.msra.mxu0 %v609
          %649 = vmatpush.msra.mxu0 %v608
          %650 = vmatpush.msra.mxu0 %v607
          %651 = vmatpush.msra.mxu0 %v606
          %652 = vmatpush.msra.mxu0 %v605
          %653 = vmatpush.msra.mxu0 %v604
          %654 = vmatpush.msra.mxu0 %v603
          %655 = vmatpush.msra.mxu0 %v602
          %656 = vmatpush.msra.mxu0 %v601
          %657 = vmatpush.msra.mxu0 %v600
          %658 = vmatpush.msra.mxu0 %v599
          %659 = vmatpush.msra.mxu0 %v598
          %660 = vmatpush.msra.mxu0 %v597
          %661 = vmatpush.msra.mxu0 %v596
          %662 = vmatpush.msra.mxu0 %v595
          %663 = vmatpush.msra.mxu0 %v594
          %664 = vmatmul.f32.gmra.mxu0 %v593
          %v665 = vpop.f32.mrf.mxu0
          %v666 = vadd.f32 %v647, %v665
          %667 = vdwg.mxu0
          %vm668 = vcmp.ne.f32.partialorder %v592, 0.0
          %v669 = vtanh.pop %v666
          %v670 = vsel %vm668, %v592, %v669
          %671 = vst [vmem:[%s222 + $0x1] sm:$0x1] %v670
          %672 = vxpose.xlu0.b32.start [1/16] %v593, 128
          %673 = vxpose.xlu0.b32.cont [2/16] 0.0, 128
          %674 = vxpose.xlu0.b32.cont [3/16] 0.0, 128
          %675 = vxpose.xlu0.b32.cont [4/16] 0.0, 128
          %676 = vxpose.xlu0.b32.cont [5/16] 0.0, 128
          %677 = vxpose.xlu0.b32.cont [6/16] 0.0, 128
          %678 = vxpose.xlu0.b32.cont [7/16] 0.0, 128
          %679 = vxpose.xlu0.b32.cont [8/16] 0.0, 128
          %680 = vxpose.xlu0.b32.cont [9/16] 0.0, 128
          %681 = vxpose.xlu0.b32.cont [10/16] 0.0, 128
          %682 = vxpose.xlu0.b32.cont [11/16] 0.0, 128
          %683 = vxpose.xlu0.b32.cont [12/16] 0.0, 128
          %684 = vxpose.xlu0.b32.cont [13/16] 0.0, 128
          %685 = vxpose.xlu0.b32.cont [14/16] 0.0, 128
          %686 = vxpose.xlu0.b32.cont [15/16] 0.0, 128
          %687 = vxpose.xlu0.b32.end [16/16] 0.0, 128
          %v688 = vpop.trf.xlu0
          %v689 = vpop.trf.xlu0
          %v690 = vpop.trf.xlu0
          %v691 = vpop.trf.xlu0
          %v692 = vpop.trf.xlu0
          %v693 = vpop.trf.xlu0
          %v694 = vpop.trf.xlu0
          %v695 = vpop.trf.xlu0
          %v696 = vpop.trf.xlu0
          %v697 = vpop.trf.xlu0
          %v698 = vpop.trf.xlu0
          %v699 = vpop.trf.xlu0
          %v700 = vpop.trf.xlu0
          %v701 = vpop.trf.xlu0
          %v702 = vpop.trf.xlu0
          %v703 = vpop.trf.xlu0
          %vm704 = vcmask 7168
          %v706 = vsel %vm704, %v688, 0
          %v709 = vsel %vm704, %v689, 0
          %v712 = vsel %vm704, %v690, 0
          %v715 = vsel %vm704, %v691, 0
          %v718 = vsel %vm704, %v692, 0
          %v721 = vsel %vm704, %v693, 0
          %v724 = vsel %vm704, %v694, 0
          %v727 = vsel %vm704, %v695, 0
          %v730 = vsel %vm704, %v696, 0
          %v733 = vsel %vm704, %v697, 0
          %v736 = vsel %vm704, %v698, 0
          %v739 = vsel %vm704, %v699, 0
          %v742 = vsel %vm704, %v700, 0
          %v745 = vsel %vm704, %v701, 0
          %v748 = vsel %vm704, %v702, 0
          %v751 = vsel %vm704, %v703, 0
          %vm753 = vcmask 1040384
          %v755 = vsel %vm753, %v670, 0
          %757 = vmatpush.msra.mxu0 0.0
          %758 = vmatpush.msra.mxu0 0.0
          %759 = vmatpush.msra.mxu0 0.0
          %760 = vmatpush.msra.mxu0 0.0
          %761 = vmatpush.msra.mxu0 0.0
          %762 = vmatpush.msra.mxu0 0.0
          %763 = vmatpush.msra.mxu0 0.0
          %764 = vmatpush.msra.mxu0 0.0
          %765 = vmatpush.msra.mxu0 0.0
          %766 = vmatpush.msra.mxu0 0.0
          %767 = vmatpush.msra.mxu0 0.0
          %768 = vmatpush.msra.mxu0 0.0
          %769 = vmatpush.msra.mxu0 0.0
          %770 = vmatpush.msra.mxu0 0.0
          %771 = vmatpush.msra.mxu0 0.0
          %772 = vmatpush.msra.mxu0 %v755
          %773 = vmatmul.f32.gmra.mxu0 %v706
          %v774 = vpop.f32.mrf.mxu0
          %v775 = vadd.f32 0.0, %v774
          %776 = vmatmul.f32.gmra.mxu0 %v709
          %v777 = vpop.f32.mrf.mxu0
          %v778 = vadd.f32 0.0, %v777
          %779 = vmatmul.f32.gmra.mxu0 %v712
          %v780 = vpop.f32.mrf.mxu0
          %v781 = vadd.f32 0.0, %v780
          %782 = vmatmul.f32.gmra.mxu0 %v715
          %v783 = vpop.f32.mrf.mxu0
          %v784 = vadd.f32 0.0, %v783
          %785 = vmatmul.f32.gmra.mxu0 %v718
          %v786 = vpop.f32.mrf.mxu0
          %v787 = vadd.f32 0.0, %v786
          %788 = vmatmul.f32.gmra.mxu0 %v721
          %v789 = vpop.f32.mrf.mxu0
          %v790 = vadd.f32 0.0, %v789
          %791 = vmatmul.f32.gmra.mxu0 %v724
          %v792 = vpop.f32.mrf.mxu0
          %v793 = vadd.f32 0.0, %v792
          %794 = vmatmul.f32.gmra.mxu0 %v727
          %v795 = vpop.f32.mrf.mxu0
          %v796 = vadd.f32 0.0, %v795
          %797 = vmatmul.f32.gmra.mxu0 %v730
          %v798 = vpop.f32.mrf.mxu0
          %v799 = vadd.f32 0.0, %v798
          %800 = vmatmul.f32.gmra.mxu0 %v733
          %v801 = vpop.f32.mrf.mxu0
          %v802 = vadd.f32 0.0, %v801
          %803 = vmatmul.f32.gmra.mxu0 %v736
          %v804 = vpop.f32.mrf.mxu0
          %v805 = vadd.f32 0.0, %v804
          %806 = vmatmul.f32.gmra.mxu0 %v739
          %v807 = vpop.f32.mrf.mxu0
          %v808 = vadd.f32 0.0, %v807
          %809 = vmatmul.f32.gmra.mxu0 %v742
          %v810 = vpop.f32.mrf.mxu0
          %v811 = vadd.f32 0.0, %v810
          %812 = vmatmul.f32.gmra.mxu0 %v745
          %v813 = vpop.f32.mrf.mxu0
          %v814 = vadd.f32 0.0, %v813
          %815 = vmatmul.f32.gmra.mxu0 %v748
          %v816 = vpop.f32.mrf.mxu0
          %v817 = vadd.f32 0.0, %v816
          %818 = vmatmul.f32.gmra.mxu0 %v751
          %v819 = vpop.f32.mrf.mxu0
          %v820 = vadd.f32 0.0, %v819
          %821 = vdwg.mxu0
          %s822 = ssub.f32 1.0, %s266
          %v823 = vld [vmem:[#allocation3] sm:$0xff]
          %v824 = vld [vmem:[#allocation3 + $0x8] sm:$0xff]
          %v825 = vld [vmem:[#allocation3 + $0x10] sm:$0xff]
          %v826 = vld [vmem:[#allocation3 + $0x18] sm:$0xff]
          %v827 = vld [vmem:[#allocation3 + $0x20] sm:$0xff]
          %v828 = vld [vmem:[#allocation3 + $0x28] sm:$0xff]
          %v829 = vld [vmem:[#allocation3 + $0x30] sm:$0xff]
          %v830 = vld [vmem:[#allocation3 + $0x38] sm:$0xff]
          %v831 = vld [vmem:[#allocation3 + $0x40] sm:$0xff]
          %v832 = vld [vmem:[#allocation3 + $0x48] sm:$0xff]
          %v833 = vld [vmem:[#allocation3 + $0x50] sm:$0xff]
          %v834 = vld [vmem:[#allocation3 + $0x58] sm:$0xff]
          %v835 = vld [vmem:[#allocation3 + $0x60] sm:$0xff]
          %v836 = vld [vmem:[#allocation3 + $0x68] sm:$0xff]
          %v837 = vld [vmem:[#allocation3 + $0x70] sm:$0xff]
          %v838 = vld [vmem:[#allocation3 + $0x78] sm:$0xff]
          %v839 = vstv %s822
          %v840 = vmul.f32 %v839, %v823
          %v841 = vmul.f32 %v839, %v824
          %v842 = vmul.f32 %v839, %v825
          %v843 = vmul.f32 %v839, %v826
          %v844 = vmul.f32 %v839, %v827
          %v845 = vmul.f32 %v839, %v828
          %v846 = vmul.f32 %v839, %v829
          %v847 = vmul.f32 %v839, %v830
          %v848 = vmul.f32 %v839, %v831
          %v849 = vmul.f32 %v839, %v832
          %v850 = vmul.f32 %v839, %v833
          %v851 = vmul.f32 %v839, %v834
          %v852 = vmul.f32 %v839, %v835
          %v853 = vmul.f32 %v839, %v836
          %v854 = vmul.f32 %v839, %v837
          %v855 = vmul.f32 %v839, %v838
          %v856 = vstv %s266
          %v857 = vmul.f32 %v856, %v775
          %v858 = vmul.f32 %v856, %v778
          %v859 = vmul.f32 %v856, %v781
          %v860 = vmul.f32 %v856, %v784
          %v861 = vmul.f32 %v856, %v787
          %v862 = vmul.f32 %v856, %v790
          %v863 = vmul.f32 %v856, %v793
          %v864 = vmul.f32 %v856, %v796
          %v865 = vmul.f32 %v856, %v799
          %v866 = vmul.f32 %v856, %v802
          %v867 = vmul.f32 %v856, %v805
          %v868 = vmul.f32 %v856, %v808
          %v869 = vmul.f32 %v856, %v811
          %v870 = vmul.f32 %v856, %v814
          %v871 = vmul.f32 %v856, %v817
          %v872 = vmul.f32 %v856, %v820
          %v873 = vadd.f32 %v840, %v857
          %v874 = vadd.f32 %v841, %v858
          %v875 = vadd.f32 %v842, %v859
          %v876 = vadd.f32 %v843, %v860
          %v877 = vadd.f32 %v844, %v861
          %v878 = vadd.f32 %v845, %v862
          %v879 = vadd.f32 %v846, %v863
          %v880 = vadd.f32 %v847, %v864
          %v881 = vadd.f32 %v848, %v865
          %v882 = vadd.f32 %v849, %v866
          %v883 = vadd.f32 %v850, %v867
          %v884 = vadd.f32 %v851, %v868
          %v885 = vadd.f32 %v852, %v869
          %v886 = vadd.f32 %v853, %v870
          %v887 = vadd.f32 %v854, %v871
          %v888 = vadd.f32 %v855, %v872
          %889 = vst [vmem:[#allocation3] sm:$0xff] %v873
          %890 = vst [vmem:[#allocation3 + $0x8] sm:$0xff] %v874
          %891 = vst [vmem:[#allocation3 + $0x10] sm:$0xff] %v875
          %892 = vst [vmem:[#allocation3 + $0x18] sm:$0xff] %v876
          %893 = vst [vmem:[#allocation3 + $0x20] sm:$0xff] %v877
          %894 = vst [vmem:[#allocation3 + $0x28] sm:$0xff] %v878
          %895 = vst [vmem:[#allocation3 + $0x30] sm:$0xff] %v879
          %896 = vst [vmem:[#allocation3 + $0x38] sm:$0xff] %v880
          %897 = vst [vmem:[#allocation3 + $0x40] sm:$0xff] %v881
          %898 = vst [vmem:[#allocation3 + $0x48] sm:$0xff] %v882
          %899 = vst [vmem:[#allocation3 + $0x50] sm:$0xff] %v883
          %900 = vst [vmem:[#allocation3 + $0x58] sm:$0xff] %v884
          %901 = vst [vmem:[#allocation3 + $0x60] sm:$0xff] %v885
          %902 = vst [vmem:[#allocation3 + $0x68] sm:$0xff] %v886
          %903 = vst [vmem:[#allocation3 + $0x70] sm:$0xff] %v887
          %904 = vst [vmem:[#allocation3 + $0x78] sm:$0xff] %v888
          %905 = vst [vmem:[#allocation4] sm:$0x1] %v670
        $region62: #{plastic_rollout.1} parent=39 // pred_fallthru
          _
        %p906 = scmp.gt.s32.totalorder %s269, 2
        // Predicated region
        $region63: #{plastic_rollout.1} parent=39 // pred_check
          %p907 = pneg %p906
        $region64: #{plastic_rollout.1} parent=39 // pred_check_branch
          %909 = sbr.rel (%p907) target = $region66
        $region65: #{plastic_rollout.1} parent=39 // pred_region
          %v910 = vld [vmem:[%s226 + $0x2] sm:$0x1]
          %v911 = vld [vmem:[#allocation4] sm:$0x1]
          %v912 = vld [vmem:[#allocation2] sm:$0xff]
          %v913 = vld [vmem:[#allocation2 + $0x8] sm:$0xff]
          %v914 = vld [vmem:[#allocation2 + $0x10] sm:$0xff]
          %v915 = vld [vmem:[#allocation2 + $0x18] sm:$0xff]
          %v916 = vld [vmem:[#allocation2 + $0x20] sm:$0xff]
          %v917 = vld [vmem:[#allocation2 + $0x28] sm:$0xff]
          %v918 = vld [vmem:[#allocation2 + $0x30] sm:$0xff]
          %v919 = vld [vmem:[#allocation2 + $0x38] sm:$0xff]
          %v920 = vld [vmem:[#allocation2 + $0x40] sm:$0xff]
          %v921 = vld [vmem:[#allocation2 + $0x48] sm:$0xff]
          %v922 = vld [vmem:[#allocation2 + $0x50] sm:$0xff]
          %v923 = vld [vmem:[#allocation2 + $0x58] sm:$0xff]
          %v924 = vld [vmem:[#allocation2 + $0x60] sm:$0xff]
          %v925 = vld [vmem:[#allocation2 + $0x68] sm:$0xff]
          %v926 = vld [vmem:[#allocation2 + $0x70] sm:$0xff]
          %v927 = vld [vmem:[#allocation2 + $0x78] sm:$0xff]
          %v928 = vld [vmem:[#allocation3] sm:$0xff]
          %v929 = vld [vmem:[#allocation3 + $0x8] sm:$0xff]
          %v930 = vld [vmem:[#allocation3 + $0x10] sm:$0xff]
          %v931 = vld [vmem:[#allocation3 + $0x18] sm:$0xff]
          %v932 = vld [vmem:[#allocation3 + $0x20] sm:$0xff]
          %v933 = vld [vmem:[#allocation3 + $0x28] sm:$0xff]
          %v934 = vld [vmem:[#allocation3 + $0x30] sm:$0xff]
          %v935 = vld [vmem:[#allocation3 + $0x38] sm:$0xff]
          %v936 = vld [vmem:[#allocation3 + $0x40] sm:$0xff]
          %v937 = vld [vmem:[#allocation3 + $0x48] sm:$0xff]
          %v938 = vld [vmem:[#allocation3 + $0x50] sm:$0xff]
          %v939 = vld [vmem:[#allocation3 + $0x58] sm:$0xff]
          %v940 = vld [vmem:[#allocation3 + $0x60] sm:$0xff]
          %v941 = vld [vmem:[#allocation3 + $0x68] sm:$0xff]
          %v942 = vld [vmem:[#allocation3 + $0x70] sm:$0xff]
          %v943 = vld [vmem:[#allocation3 + $0x78] sm:$0xff]
          %944 = vmatpush.msra.mxu0 %v943
          %945 = vmatpush.msra.mxu0 %v942
          %946 = vmatpush.msra.mxu0 %v941
          %947 = vmatpush.msra.mxu0 %v940
          %948 = vmatpush.msra.mxu0 %v939
          %949 = vmatpush.msra.mxu0 %v938
          %950 = vmatpush.msra.mxu0 %v937
          %951 = vmatpush.msra.mxu0 %v936
          %952 = vmatpush.msra.mxu0 %v935
          %953 = vmatpush.msra.mxu0 %v934
          %954 = vmatpush.msra.mxu0 %v933
          %955 = vmatpush.msra.mxu0 %v932
          %956 = vmatpush.msra.mxu0 %v931
          %957 = vmatpush.msra.mxu0 %v930
          %958 = vmatpush.msra.mxu0 %v929
          %959 = vmatpush.msra.mxu0 %v928
          %960 = vmatmul.f32.gmra.mxu0 %v911
          %v961 = vpop.f32.mrf.mxu0
          %v962 = vadd.f32 0.0, %v961
          %963 = vdwg.mxu0
          %v964 = vstv %s265
          %v965 = vmul.f32 %v964, %v962
          %966 = vmatpush.msra.mxu0 %v927
          %967 = vmatpush.msra.mxu0 %v926
          %968 = vmatpush.msra.mxu0 %v925
          %969 = vmatpush.msra.mxu0 %v924
          %970 = vmatpush.msra.mxu0 %v923
          %971 = vmatpush.msra.mxu0 %v922
          %972 = vmatpush.msra.mxu0 %v921
          %973 = vmatpush.msra.mxu0 %v920
          %974 = vmatpush.msra.mxu0 %v919
          %975 = vmatpush.msra.mxu0 %v918
          %976 = vmatpush.msra.mxu0 %v917
          %977 = vmatpush.msra.mxu0 %v916
          %978 = vmatpush.msra.mxu0 %v915
          %979 = vmatpush.msra.mxu0 %v914
          %980 = vmatpush.msra.mxu0 %v913
          %981 = vmatpush.msra.mxu0 %v912
          %982 = vmatmul.f32.gmra.mxu0 %v911
          %v983 = vpop.f32.mrf.mxu0
          %v984 = vadd.f32 %v965, %v983
          %985 = vdwg.mxu0
          %vm986 = vcmp.ne.f32.partialorder %v910, 0.0
          %v987 = vtanh.pop %v984
          %v988 = vsel %vm986, %v910, %v987
          %989 = vst [vmem:[%s222 + $0x2] sm:$0x1] %v988
          %990 = vxpose.xlu0.b32.start [1/16] %v911, 128
          %991 = vxpose.xlu0.b32.cont [2/16] 0.0, 128
          %992 = vxpose.xlu0.b32.cont [3/16] 0.0, 128
          %993 = vxpose.xlu0.b32.cont [4/16] 0.0, 128
          %994 = vxpose.xlu0.b32.cont [5/16] 0.0, 128
          %995 = vxpose.xlu0.b32.cont [6/16] 0.0, 128
          %996 = vxpose.xlu0.b32.cont [7/16] 0.0, 128
          %997 = vxpose.xlu0.b32.cont [8/16] 0.0, 128
          %998 = vxpose.xlu0.b32.cont [9/16] 0.0, 128
          %999 = vxpose.xlu0.b32.cont [10/16] 0.0, 128
          %1000 = vxpose.xlu0.b32.cont [11/16] 0.0, 128
          %1001 = vxpose.xlu0.b32.cont [12/16] 0.0, 128
          %1002 = vxpose.xlu0.b32.cont [13/16] 0.0, 128
          %1003 = vxpose.xlu0.b32.cont [14/16] 0.0, 128
          %1004 = vxpose.xlu0.b32.cont [15/16] 0.0, 128
          %1005 = vxpose.xlu0.b32.end [16/16] 0.0, 128
          %v1006 = vpop.trf.xlu0
          %v1007 = vpop.trf.xlu0
          %v1008 = vpop.trf.xlu0
          %v1009 = vpop.trf.xlu0
          %v1010 = vpop.trf.xlu0
          %v1011 = vpop.trf.xlu0
          %v1012 = vpop.trf.xlu0
          %v1013 = vpop.trf.xlu0
          %v1014 = vpop.trf.xlu0
          %v1015 = vpop.trf.xlu0
          %v1016 = vpop.trf.xlu0
          %v1017 = vpop.trf.xlu0
          %v1018 = vpop.trf.xlu0
          %v1019 = vpop.trf.xlu0
          %v1020 = vpop.trf.xlu0
          %v1021 = vpop.trf.xlu0
          %vm1022 = vcmask 7168
          %v1024 = vsel %vm1022, %v1006, 0
          %v1027 = vsel %vm1022, %v1007, 0
          %v1030 = vsel %vm1022, %v1008, 0
          %v1033 = vsel %vm1022, %v1009, 0
          %v1036 = vsel %vm1022, %v1010, 0
          %v1039 = vsel %vm1022, %v1011, 0
          %v1042 = vsel %vm1022, %v1012, 0
          %v1045 = vsel %vm1022, %v1013, 0
          %v1048 = vsel %vm1022, %v1014, 0
          %v1051 = vsel %vm1022, %v1015, 0
          %v1054 = vsel %vm1022, %v1016, 0
          %v1057 = vsel %vm1022, %v1017, 0
          %v1060 = vsel %vm1022, %v1018, 0
          %v1063 = vsel %vm1022, %v1019, 0
          %v1066 = vsel %vm1022, %v1020, 0
          %v1069 = vsel %vm1022, %v1021, 0
          %vm1071 = vcmask 1040384
          %v1073 = vsel %vm1071, %v988, 0
          %1075 = vmatpush.msra.mxu0 0.0
          %1076 = vmatpush.msra.mxu0 0.0
          %1077 = vmatpush.msra.mxu0 0.0
          %1078 = vmatpush.msra.mxu0 0.0
          %1079 = vmatpush.msra.mxu0 0.0
          %1080 = vmatpush.msra.mxu0 0.0
          %1081 = vmatpush.msra.mxu0 0.0
          %1082 = vmatpush.msra.mxu0 0.0
          %1083 = vmatpush.msra.mxu0 0.0
          %1084 = vmatpush.msra.mxu0 0.0
          %1085 = vmatpush.msra.mxu0 0.0
          %1086 = vmatpush.msra.mxu0 0.0
          %1087 = vmatpush.msra.mxu0 0.0
          %1088 = vmatpush.msra.mxu0 0.0
          %1089 = vmatpush.msra.mxu0 0.0
          %1090 = vmatpush.msra.mxu0 %v1073
          %1091 = vmatmul.f32.gmra.mxu0 %v1024
          %v1092 = vpop.f32.mrf.mxu0
          %v1093 = vadd.f32 0.0, %v1092
          %1094 = vmatmul.f32.gmra.mxu0 %v1027
          %v1095 = vpop.f32.mrf.mxu0
          %v1096 = vadd.f32 0.0, %v1095
          %1097 = vmatmul.f32.gmra.mxu0 %v1030
          %v1098 = vpop.f32.mrf.mxu0
          %v1099 = vadd.f32 0.0, %v1098
          %1100 = vmatmul.f32.gmra.mxu0 %v1033
          %v1101 = vpop.f32.mrf.mxu0
          %v1102 = vadd.f32 0.0, %v1101
          %1103 = vmatmul.f32.gmra.mxu0 %v1036
          %v1104 = vpop.f32.mrf.mxu0
          %v1105 = vadd.f32 0.0, %v1104
          %1106 = vmatmul.f32.gmra.mxu0 %v1039
          %v1107 = vpop.f32.mrf.mxu0
          %v1108 = vadd.f32 0.0, %v1107
          %1109 = vmatmul.f32.gmra.mxu0 %v1042
          %v1110 = vpop.f32.mrf.mxu0
          %v1111 = vadd.f32 0.0, %v1110
          %1112 = vmatmul.f32.gmra.mxu0 %v1045
          %v1113 = vpop.f32.mrf.mxu0
          %v1114 = vadd.f32 0.0, %v1113
          %1115 = vmatmul.f32.gmra.mxu0 %v1048
          %v1116 = vpop.f32.mrf.mxu0
          %v1117 = vadd.f32 0.0, %v1116
          %1118 = vmatmul.f32.gmra.mxu0 %v1051
          %v1119 = vpop.f32.mrf.mxu0
          %v1120 = vadd.f32 0.0, %v1119
          %1121 = vmatmul.f32.gmra.mxu0 %v1054
          %v1122 = vpop.f32.mrf.mxu0
          %v1123 = vadd.f32 0.0, %v1122
          %1124 = vmatmul.f32.gmra.mxu0 %v1057
          %v1125 = vpop.f32.mrf.mxu0
          %v1126 = vadd.f32 0.0, %v1125
          %1127 = vmatmul.f32.gmra.mxu0 %v1060
          %v1128 = vpop.f32.mrf.mxu0
          %v1129 = vadd.f32 0.0, %v1128
          %1130 = vmatmul.f32.gmra.mxu0 %v1063
          %v1131 = vpop.f32.mrf.mxu0
          %v1132 = vadd.f32 0.0, %v1131
          %1133 = vmatmul.f32.gmra.mxu0 %v1066
          %v1134 = vpop.f32.mrf.mxu0
          %v1135 = vadd.f32 0.0, %v1134
          %1136 = vmatmul.f32.gmra.mxu0 %v1069
          %v1137 = vpop.f32.mrf.mxu0
          %v1138 = vadd.f32 0.0, %v1137
          %1139 = vdwg.mxu0
          %s1140 = ssub.f32 1.0, %s266
          %v1141 = vld [vmem:[#allocation3] sm:$0xff]
          %v1142 = vld [vmem:[#allocation3 + $0x8] sm:$0xff]
          %v1143 = vld [vmem:[#allocation3 + $0x10] sm:$0xff]
          %v1144 = vld [vmem:[#allocation3 + $0x18] sm:$0xff]
          %v1145 = vld [vmem:[#allocation3 + $0x20] sm:$0xff]
          %v1146 = vld [vmem:[#allocation3 + $0x28] sm:$0xff]
          %v1147 = vld [vmem:[#allocation3 + $0x30] sm:$0xff]
          %v1148 = vld [vmem:[#allocation3 + $0x38] sm:$0xff]
          %v1149 = vld [vmem:[#allocation3 + $0x40] sm:$0xff]
          %v1150 = vld [vmem:[#allocation3 + $0x48] sm:$0xff]
          %v1151 = vld [vmem:[#allocation3 + $0x50] sm:$0xff]
          %v1152 = vld [vmem:[#allocation3 + $0x58] sm:$0xff]
          %v1153 = vld [vmem:[#allocation3 + $0x60] sm:$0xff]
          %v1154 = vld [vmem:[#allocation3 + $0x68] sm:$0xff]
          %v1155 = vld [vmem:[#allocation3 + $0x70] sm:$0xff]
          %v1156 = vld [vmem:[#allocation3 + $0x78] sm:$0xff]
          %v1157 = vstv %s1140
          %v1158 = vmul.f32 %v1157, %v1141
          %v1159 = vmul.f32 %v1157, %v1142
          %v1160 = vmul.f32 %v1157, %v1143
          %v1161 = vmul.f32 %v1157, %v1144
          %v1162 = vmul.f32 %v1157, %v1145
          %v1163 = vmul.f32 %v1157, %v1146
          %v1164 = vmul.f32 %v1157, %v1147
          %v1165 = vmul.f32 %v1157, %v1148
          %v1166 = vmul.f32 %v1157, %v1149
          %v1167 = vmul.f32 %v1157, %v1150
          %v1168 = vmul.f32 %v1157, %v1151
          %v1169 = vmul.f32 %v1157, %v1152
          %v1170 = vmul.f32 %v1157, %v1153
          %v1171 = vmul.f32 %v1157, %v1154
          %v1172 = vmul.f32 %v1157, %v1155
          %v1173 = vmul.f32 %v1157, %v1156
          %v1174 = vstv %s266
          %v1175 = vmul.f32 %v1174, %v1093
          %v1176 = vmul.f32 %v1174, %v1096
          %v1177 = vmul.f32 %v1174, %v1099
          %v1178 = vmul.f32 %v1174, %v1102
          %v1179 = vmul.f32 %v1174, %v1105
          %v1180 = vmul.f32 %v1174, %v1108
          %v1181 = vmul.f32 %v1174, %v1111
          %v1182 = vmul.f32 %v1174, %v1114
          %v1183 = vmul.f32 %v1174, %v1117
          %v1184 = vmul.f32 %v1174, %v1120
          %v1185 = vmul.f32 %v1174, %v1123
          %v1186 = vmul.f32 %v1174, %v1126
          %v1187 = vmul.f32 %v1174, %v1129
          %v1188 = vmul.f32 %v1174, %v1132
          %v1189 = vmul.f32 %v1174, %v1135
          %v1190 = vmul.f32 %v1174, %v1138
          %v1191 = vadd.f32 %v1158, %v1175
          %v1192 = vadd.f32 %v1159, %v1176
          %v1193 = vadd.f32 %v1160, %v1177
          %v1194 = vadd.f32 %v1161, %v1178
          %v1195 = vadd.f32 %v1162, %v1179
          %v1196 = vadd.f32 %v1163, %v1180
          %v1197 = vadd.f32 %v1164, %v1181
          %v1198 = vadd.f32 %v1165, %v1182
          %v1199 = vadd.f32 %v1166, %v1183
          %v1200 = vadd.f32 %v1167, %v1184
          %v1201 = vadd.f32 %v1168, %v1185
          %v1202 = vadd.f32 %v1169, %v1186
          %v1203 = vadd.f32 %v1170, %v1187
          %v1204 = vadd.f32 %v1171, %v1188
          %v1205 = vadd.f32 %v1172, %v1189
          %v1206 = vadd.f32 %v1173, %v1190
          %1207 = vst [vmem:[#allocation3] sm:$0xff] %v1191
          %1208 = vst [vmem:[#allocation3 + $0x8] sm:$0xff] %v1192
          %1209 = vst [vmem:[#allocation3 + $0x10] sm:$0xff] %v1193
          %1210 = vst [vmem:[#allocation3 + $0x18] sm:$0xff] %v1194
          %1211 = vst [vmem:[#allocation3 + $0x20] sm:$0xff] %v1195
          %1212 = vst [vmem:[#allocation3 + $0x28] sm:$0xff] %v1196
          %1213 = vst [vmem:[#allocation3 + $0x30] sm:$0xff] %v1197
          %1214 = vst [vmem:[#allocation3 + $0x38] sm:$0xff] %v1198
          %1215 = vst [vmem:[#allocation3 + $0x40] sm:$0xff] %v1199
          %1216 = vst [vmem:[#allocation3 + $0x48] sm:$0xff] %v1200
          %1217 = vst [vmem:[#allocation3 + $0x50] sm:$0xff] %v1201
          %1218 = vst [vmem:[#allocation3 + $0x58] sm:$0xff] %v1202
          %1219 = vst [vmem:[#allocation3 + $0x60] sm:$0xff] %v1203
          %1220 = vst [vmem:[#allocation3 + $0x68] sm:$0xff] %v1204
          %1221 = vst [vmem:[#allocation3 + $0x70] sm:$0xff] %v1205
          %1222 = vst [vmem:[#allocation3 + $0x78] sm:$0xff] %v1206
          %1223 = vst [vmem:[#allocation4] sm:$0x1] %v988
        $region66: #{plastic_rollout.1} parent=39 // pred_fallthru
          _
        %p1224 = scmp.gt.s32.totalorder %s269, 3
        // Predicated region
        $region67: #{plastic_rollout.1} parent=39 // pred_check
          %p1225 = pneg %p1224
        $region68: #{plastic_rollout.1} parent=39 // pred_check_branch
          %1227 = sbr.rel (%p1225) target = $region70
        $region69: #{plastic_rollout.1} parent=39 // pred_region
          %v1228 = vld [vmem:[%s226 + $0x3] sm:$0x1]
          %v1229 = vld [vmem:[#allocation4] sm:$0x1]
          %v1230 = vld [vmem:[#allocation2] sm:$0xff]
          %v1231 = vld [vmem:[#allocation2 + $0x8] sm:$0xff]
          %v1232 = vld [vmem:[#allocation2 + $0x10] sm:$0xff]
          %v1233 = vld [vmem:[#allocation2 + $0x18] sm:$0xff]
          %v1234 = vld [vmem:[#allocation2 + $0x20] sm:$0xff]
          %v1235 = vld [vmem:[#allocation2 + $0x28] sm:$0xff]
          %v1236 = vld [vmem:[#allocation2 + $0x30] sm:$0xff]
          %v1237 = vld [vmem:[#allocation2 + $0x38] sm:$0xff]
          %v1238 = vld [vmem:[#allocation2 + $0x40] sm:$0xff]
          %v1239 = vld [vmem:[#allocation2 + $0x48] sm:$0xff]
          %v1240 = vld [vmem:[#allocation2 + $0x50] sm:$0xff]
          %v1241 = vld [vmem:[#allocation2 + $0x58] sm:$0xff]
          %v1242 = vld [vmem:[#allocation2 + $0x60] sm:$0xff]
          %v1243 = vld [vmem:[#allocation2 + $0x68] sm:$0xff]
          %v1244 = vld [vmem:[#allocation2 + $0x70] sm:$0xff]
          %v1245 = vld [vmem:[#allocation2 + $0x78] sm:$0xff]
          %v1246 = vld [vmem:[#allocation3] sm:$0xff]
          %v1247 = vld [vmem:[#allocation3 + $0x8] sm:$0xff]
          %v1248 = vld [vmem:[#allocation3 + $0x10] sm:$0xff]
          %v1249 = vld [vmem:[#allocation3 + $0x18] sm:$0xff]
          %v1250 = vld [vmem:[#allocation3 + $0x20] sm:$0xff]
          %v1251 = vld [vmem:[#allocation3 + $0x28] sm:$0xff]
          %v1252 = vld [vmem:[#allocation3 + $0x30] sm:$0xff]
          %v1253 = vld [vmem:[#allocation3 + $0x38] sm:$0xff]
          %v1254 = vld [vmem:[#allocation3 + $0x40] sm:$0xff]
          %v1255 = vld [vmem:[#allocation3 + $0x48] sm:$0xff]
          %v1256 = vld [vmem:[#allocation3 + $0x50] sm:$0xff]
          %v1257 = vld [vmem:[#allocation3 + $0x58] sm:$0xff]
          %v1258 = vld [vmem:[#allocation3 + $0x60] sm:$0xff]
          %v1259 = vld [vmem:[#allocation3 + $0x68] sm:$0xff]
          %v1260 = vld [vmem:[#allocation3 + $0x70] sm:$0xff]
          %v1261 = vld [vmem:[#allocation3 + $0x78] sm:$0xff]
          %1262 = vmatpush.msra.mxu0 %v1261
          %1263 = vmatpush.msra.mxu0 %v1260
          %1264 = vmatpush.msra.mxu0 %v1259
          %1265 = vmatpush.msra.mxu0 %v1258
          %1266 = vmatpush.msra.mxu0 %v1257
          %1267 = vmatpush.msra.mxu0 %v1256
          %1268 = vmatpush.msra.mxu0 %v1255
          %1269 = vmatpush.msra.mxu0 %v1254
          %1270 = vmatpush.msra.mxu0 %v1253
          %1271 = vmatpush.msra.mxu0 %v1252
          %1272 = vmatpush.msra.mxu0 %v1251
          %1273 = vmatpush.msra.mxu0 %v1250
          %1274 = vmatpush.msra.mxu0 %v1249
          %1275 = vmatpush.msra.mxu0 %v1248
          %1276 = vmatpush.msra.mxu0 %v1247
          %1277 = vmatpush.msra.mxu0 %v1246
          %1278 = vmatmul.f32.gmra.mxu0 %v1229
          %v1279 = vpop.f32.mrf.mxu0
          %v1280 = vadd.f32 0.0, %v1279
          %1281 = vdwg.mxu0
          %v1282 = vstv %s265
          %v1283 = vmul.f32 %v1282, %v1280
          %1284 = vmatpush.msra.mxu0 %v1245
          %1285 = vmatpush.msra.mxu0 %v1244
          %1286 = vmatpush.msra.mxu0 %v1243
          %1287 = vmatpush.msra.mxu0 %v1242
          %1288 = vmatpush.msra.mxu0 %v1241
          %1289 = vmatpush.msra.mxu0 %v1240
          %1290 = vmatpush.msra.mxu0 %v1239
          %1291 = vmatpush.msra.mxu0 %v1238
          %1292 = vmatpush.msra.mxu0 %v1237
          %1293 = vmatpush.msra.mxu0 %v1236
          %1294 = vmatpush.msra.mxu0 %v1235
          %1295 = vmatpush.msra.mxu0 %v1234
          %1296 = vmatpush.msra.mxu0 %v1233
          %1297 = vmatpush.msra.mxu0 %v1232
          %1298 = vmatpush.msra.mxu0 %v1231
          %1299 = vmatpush.msra.mxu0 %v1230
          %1300 = vmatmul.f32.gmra.mxu0 %v1229
          %v1301 = vpop.f32.mrf.mxu0
          %v1302 = vadd.f32 %v1283, %v1301
          %1303 = vdwg.mxu0
          %vm1304 = vcmp.ne.f32.partialorder %v1228, 0.0
          %v1305 = vtanh.pop %v1302
          %v1306 = vsel %vm1304, %v1228, %v1305
          %1307 = vst [vmem:[%s222 + $0x3] sm:$0x1] %v1306
          %1308 = vxpose.xlu0.b32.start [1/16] %v1229, 128
          %1309 = vxpose.xlu0.b32.cont [2/16] 0.0, 128
          %1310 = vxpose.xlu0.b32.cont [3/16] 0.0, 128
          %1311 = vxpose.xlu0.b32.cont [4/16] 0.0, 128
          %1312 = vxpose.xlu0.b32.cont [5/16] 0.0, 128
          %1313 = vxpose.xlu0.b32.cont [6/16] 0.0, 128
          %1314 = vxpose.xlu0.b32.cont [7/16] 0.0, 128
          %1315 = vxpose.xlu0.b32.cont [8/16] 0.0, 128
          %1316 = vxpose.xlu0.b32.cont [9/16] 0.0, 128
          %1317 = vxpose.xlu0.b32.cont [10/16] 0.0, 128
          %1318 = vxpose.xlu0.b32.cont [11/16] 0.0, 128
          %1319 = vxpose.xlu0.b32.cont [12/16] 0.0, 128
          %1320 = vxpose.xlu0.b32.cont [13/16] 0.0, 128
          %1321 = vxpose.xlu0.b32.cont [14/16] 0.0, 128
          %1322 = vxpose.xlu0.b32.cont [15/16] 0.0, 128
          %1323 = vxpose.xlu0.b32.end [16/16] 0.0, 128
          %v1324 = vpop.trf.xlu0
          %v1325 = vpop.trf.xlu0
          %v1326 = vpop.trf.xlu0
          %v1327 = vpop.trf.xlu0
          %v1328 = vpop.trf.xlu0
          %v1329 = vpop.trf.xlu0
          %v1330 = vpop.trf.xlu0
          %v1331 = vpop.trf.xlu0
          %v1332 = vpop.trf.xlu0
          %v1333 = vpop.trf.xlu0
          %v1334 = vpop.trf.xlu0
          %v1335 = vpop.trf.xlu0
          %v1336 = vpop.trf.xlu0
          %v1337 = vpop.trf.xlu0
          %v1338 = vpop.trf.xlu0
          %v1339 = vpop.trf.xlu0
          %vm1340 = vcmask 7168
          %v1342 = vsel %vm1340, %v1324, 0
          %v1345 = vsel %vm1340, %v1325, 0
          %v1348 = vsel %vm1340, %v1326, 0
          %v1351 = vsel %vm1340, %v1327, 0
          %v1354 = vsel %vm1340, %v1328, 0
          %v1357 = vsel %vm1340, %v1329, 0
          %v1360 = vsel %vm1340, %v1330, 0
          %v1363 = vsel %vm1340, %v1331, 0
          %v1366 = vsel %vm1340, %v1332, 0
          %v1369 = vsel %vm1340, %v1333, 0
          %v1372 = vsel %vm1340, %v1334, 0
          %v1375 = vsel %vm1340, %v1335, 0
          %v1378 = vsel %vm1340, %v1336, 0
          %v1381 = vsel %vm1340, %v1337, 0
          %v1384 = vsel %vm1340, %v1338, 0
          %v1387 = vsel %vm1340, %v1339, 0
          %vm1389 = vcmask 1040384
          %v1391 = vsel %vm1389, %v1306, 0
          %1393 = vmatpush.msra.mxu0 0.0
          %1394 = vmatpush.msra.mxu0 0.0
          %1395 = vmatpush.msra.mxu0 0.0
          %1396 = vmatpush.msra.mxu0 0.0
          %1397 = vmatpush.msra.mxu0 0.0
          %1398 = vmatpush.msra.mxu0 0.0
          %1399 = vmatpush.msra.mxu0 0.0
          %1400 = vmatpush.msra.mxu0 0.0
          %1401 = vmatpush.msra.mxu0 0.0
          %1402 = vmatpush.msra.mxu0 0.0
          %1403 = vmatpush.msra.mxu0 0.0
          %1404 = vmatpush.msra.mxu0 0.0
          %1405 = vmatpush.msra.mxu0 0.0
          %1406 = vmatpush.msra.mxu0 0.0
          %1407 = vmatpush.msra.mxu0 0.0
          %1408 = vmatpush.msra.mxu0 %v1391
          %1409 = vmatmul.f32.gmra.mxu0 %v1342
          %v1410 = vpop.f32.mrf.mxu0
          %v1411 = vadd.f32 0.0, %v1410
          %1412 = vmatmul.f32.gmra.mxu0 %v1345
          %v1413 = vpop.f32.mrf.mxu0
          %v1414 = vadd.f32 0.0, %v1413
          %1415 = vmatmul.f32.gmra.mxu0 %v1348
          %v1416 = vpop.f32.mrf.mxu0
          %v1417 = vadd.f32 0.0, %v1416
          %1418 = vmatmul.f32.gmra.mxu0 %v1351
          %v1419 = vpop.f32.mrf.mxu0
          %v1420 = vadd.f32 0.0, %v1419
          %1421 = vmatmul.f32.gmra.mxu0 %v1354
          %v1422 = vpop.f32.mrf.mxu0
          %v1423 = vadd.f32 0.0, %v1422
          %1424 = vmatmul.f32.gmra.mxu0 %v1357
          %v1425 = vpop.f32.mrf.mxu0
          %v1426 = vadd.f32 0.0, %v1425
          %1427 = vmatmul.f32.gmra.mxu0 %v1360
          %v1428 = vpop.f32.mrf.mxu0
          %v1429 = vadd.f32 0.0, %v1428
          %1430 = vmatmul.f32.gmra.mxu0 %v1363
          %v1431 = vpop.f32.mrf.mxu0
          %v1432 = vadd.f32 0.0, %v1431
          %1433 = vmatmul.f32.gmra.mxu0 %v1366
          %v1434 = vpop.f32.mrf.mxu0
          %v1435 = vadd.f32 0.0, %v1434
          %1436 = vmatmul.f32.gmra.mxu0 %v1369
          %v1437 = vpop.f32.mrf.mxu0
          %v1438 = vadd.f32 0.0, %v1437
          %1439 = vmatmul.f32.gmra.mxu0 %v1372
          %v1440 = vpop.f32.mrf.mxu0
          %v1441 = vadd.f32 0.0, %v1440
          %1442 = vmatmul.f32.gmra.mxu0 %v1375
          %v1443 = vpop.f32.mrf.mxu0
          %v1444 = vadd.f32 0.0, %v1443
          %1445 = vmatmul.f32.gmra.mxu0 %v1378
          %v1446 = vpop.f32.mrf.mxu0
          %v1447 = vadd.f32 0.0, %v1446
          %1448 = vmatmul.f32.gmra.mxu0 %v1381
          %v1449 = vpop.f32.mrf.mxu0
          %v1450 = vadd.f32 0.0, %v1449
          %1451 = vmatmul.f32.gmra.mxu0 %v1384
          %v1452 = vpop.f32.mrf.mxu0
          %v1453 = vadd.f32 0.0, %v1452
          %1454 = vmatmul.f32.gmra.mxu0 %v1387
          %v1455 = vpop.f32.mrf.mxu0
          %v1456 = vadd.f32 0.0, %v1455
          %1457 = vdwg.mxu0
          %s1458 = ssub.f32 1.0, %s266
          %v1459 = vld [vmem:[#allocation3] sm:$0xff]
          %v1460 = vld [vmem:[#allocation3 + $0x8] sm:$0xff]
          %v1461 = vld [vmem:[#allocation3 + $0x10] sm:$0xff]
          %v1462 = vld [vmem:[#allocation3 + $0x18] sm:$0xff]
          %v1463 = vld [vmem:[#allocation3 + $0x20] sm:$0xff]
          %v1464 = vld [vmem:[#allocation3 + $0x28] sm:$0xff]
          %v1465 = vld [vmem:[#allocation3 + $0x30] sm:$0xff]
          %v1466 = vld [vmem:[#allocation3 + $0x38] sm:$0xff]
          %v1467 = vld [vmem:[#allocation3 + $0x40] sm:$0xff]
          %v1468 = vld [vmem:[#allocation3 + $0x48] sm:$0xff]
          %v1469 = vld [vmem:[#allocation3 + $0x50] sm:$0xff]
          %v1470 = vld [vmem:[#allocation3 + $0x58] sm:$0xff]
          %v1471 = vld [vmem:[#allocation3 + $0x60] sm:$0xff]
          %v1472 = vld [vmem:[#allocation3 + $0x68] sm:$0xff]
          %v1473 = vld [vmem:[#allocation3 + $0x70] sm:$0xff]
          %v1474 = vld [vmem:[#allocation3 + $0x78] sm:$0xff]
          %v1475 = vstv %s1458
          %v1476 = vmul.f32 %v1475, %v1459
          %v1477 = vmul.f32 %v1475, %v1460
          %v1478 = vmul.f32 %v1475, %v1461
          %v1479 = vmul.f32 %v1475, %v1462
          %v1480 = vmul.f32 %v1475, %v1463
          %v1481 = vmul.f32 %v1475, %v1464
          %v1482 = vmul.f32 %v1475, %v1465
          %v1483 = vmul.f32 %v1475, %v1466
          %v1484 = vmul.f32 %v1475, %v1467
          %v1485 = vmul.f32 %v1475, %v1468
          %v1486 = vmul.f32 %v1475, %v1469
          %v1487 = vmul.f32 %v1475, %v1470
          %v1488 = vmul.f32 %v1475, %v1471
          %v1489 = vmul.f32 %v1475, %v1472
          %v1490 = vmul.f32 %v1475, %v1473
          %v1491 = vmul.f32 %v1475, %v1474
          %v1492 = vstv %s266
          %v1493 = vmul.f32 %v1492, %v1411
          %v1494 = vmul.f32 %v1492, %v1414
          %v1495 = vmul.f32 %v1492, %v1417
          %v1496 = vmul.f32 %v1492, %v1420
          %v1497 = vmul.f32 %v1492, %v1423
          %v1498 = vmul.f32 %v1492, %v1426
          %v1499 = vmul.f32 %v1492, %v1429
          %v1500 = vmul.f32 %v1492, %v1432
          %v1501 = vmul.f32 %v1492, %v1435
          %v1502 = vmul.f32 %v1492, %v1438
          %v1503 = vmul.f32 %v1492, %v1441
          %v1504 = vmul.f32 %v1492, %v1444
          %v1505 = vmul.f32 %v1492, %v1447
          %v1506 = vmul.f32 %v1492, %v1450
          %v1507 = vmul.f32 %v1492, %v1453
          %v1508 = vmul.f32 %v1492, %v1456
          %v1509 = vadd.f32 %v1476, %v1493
          %v1510 = vadd.f32 %v1477, %v1494
          %v1511 = vadd.f32 %v1478, %v1495
          %v1512 = vadd.f32 %v1479, %v1496
          %v1513 = vadd.f32 %v1480, %v1497
          %v1514 = vadd.f32 %v1481, %v1498
          %v1515 = vadd.f32 %v1482, %v1499
          %v1516 = vadd.f32 %v1483, %v1500
          %v1517 = vadd.f32 %v1484, %v1501
          %v1518 = vadd.f32 %v1485, %v1502
          %v1519 = vadd.f32 %v1486, %v1503
          %v1520 = vadd.f32 %v1487, %v1504
          %v1521 = vadd.f32 %v1488, %v1505
          %v1522 = vadd.f32 %v1489, %v1506
          %v1523 = vadd.f32 %v1490, %v1507
          %v1524 = vadd.f32 %v1491, %v1508
          %1525 = vst [vmem:[#allocation3] sm:$0xff] %v1509
          %1526 = vst [vmem:[#allocation3 + $0x8] sm:$0xff] %v1510
          %1527 = vst [vmem:[#allocation3 + $0x10] sm:$0xff] %v1511
          %1528 = vst [vmem:[#allocation3 + $0x18] sm:$0xff] %v1512
          %1529 = vst [vmem:[#allocation3 + $0x20] sm:$0xff] %v1513
          %1530 = vst [vmem:[#allocation3 + $0x28] sm:$0xff] %v1514
          %1531 = vst [vmem:[#allocation3 + $0x30] sm:$0xff] %v1515
          %1532 = vst [vmem:[#allocation3 + $0x38] sm:$0xff] %v1516
          %1533 = vst [vmem:[#allocation3 + $0x40] sm:$0xff] %v1517
          %1534 = vst [vmem:[#allocation3 + $0x48] sm:$0xff] %v1518
          %1535 = vst [vmem:[#allocation3 + $0x50] sm:$0xff] %v1519
          %1536 = vst [vmem:[#allocation3 + $0x58] sm:$0xff] %v1520
          %1537 = vst [vmem:[#allocation3 + $0x60] sm:$0xff] %v1521
          %1538 = vst [vmem:[#allocation3 + $0x68] sm:$0xff] %v1522
          %1539 = vst [vmem:[#allocation3 + $0x70] sm:$0xff] %v1523
          %1540 = vst [vmem:[#allocation3 + $0x78] sm:$0xff] %v1524
          %1541 = vst [vmem:[#allocation4] sm:$0x1] %v1306
        $region70: #{plastic_rollout.1} parent=39 // pred_fallthru
          _
        %p1542 = scmp.gt.s32.totalorder %s269, 4
        // Predicated region
        $region71: #{plastic_rollout.1} parent=39 // pred_check
          %p1543 = pneg %p1542
        $region72: #{plastic_rollout.1} parent=39 // pred_check_branch
          %1545 = sbr.rel (%p1543) target = $region74
        $region73: #{plastic_rollout.1} parent=39 // pred_region
          %v1546 = vld [vmem:[%s226 + $0x4] sm:$0x1]
          %v1547 = vld [vmem:[#allocation4] sm:$0x1]
          %v1548 = vld [vmem:[#allocation2] sm:$0xff]
          %v1549 = vld [vmem:[#allocation2 + $0x8] sm:$0xff]
          %v1550 = vld [vmem:[#allocation2 + $0x10] sm:$0xff]
          %v1551 = vld [vmem:[#allocation2 + $0x18] sm:$0xff]
          %v1552 = vld [vmem:[#allocation2 + $0x20] sm:$0xff]
          %v1553 = vld [vmem:[#allocation2 + $0x28] sm:$0xff]
          %v1554 = vld [vmem:[#allocation2 + $0x30] sm:$0xff]
          %v1555 = vld [vmem:[#allocation2 + $0x38] sm:$0xff]
          %v1556 = vld [vmem:[#allocation2 + $0x40] sm:$0xff]
          %v1557 = vld [vmem:[#allocation2 + $0x48] sm:$0xff]
          %v1558 = vld [vmem:[#allocation2 + $0x50] sm:$0xff]
          %v1559 = vld [vmem:[#allocation2 + $0x58] sm:$0xff]
          %v1560 = vld [vmem:[#allocation2 + $0x60] sm:$0xff]
          %v1561 = vld [vmem:[#allocation2 + $0x68] sm:$0xff]
          %v1562 = vld [vmem:[#allocation2 + $0x70] sm:$0xff]
          %v1563 = vld [vmem:[#allocation2 + $0x78] sm:$0xff]
          %v1564 = vld [vmem:[#allocation3] sm:$0xff]
          %v1565 = vld [vmem:[#allocation3 + $0x8] sm:$0xff]
          %v1566 = vld [vmem:[#allocation3 + $0x10] sm:$0xff]
          %v1567 = vld [vmem:[#allocation3 + $0x18] sm:$0xff]
          %v1568 = vld [vmem:[#allocation3 + $0x20] sm:$0xff]
          %v1569 = vld [vmem:[#allocation3 + $0x28] sm:$0xff]
          %v1570 = vld [vmem:[#allocation3 + $0x30] sm:$0xff]
          %v1571 = vld [vmem:[#allocation3 + $0x38] sm:$0xff]
          %v1572 = vld [vmem:[#allocation3 + $0x40] sm:$0xff]
          %v1573 = vld [vmem:[#allocation3 + $0x48] sm:$0xff]
          %v1574 = vld [vmem:[#allocation3 + $0x50] sm:$0xff]
          %v1575 = vld [vmem:[#allocation3 + $0x58] sm:$0xff]
          %v1576 = vld [vmem:[#allocation3 + $0x60] sm:$0xff]
          %v1577 = vld [vmem:[#allocation3 + $0x68] sm:$0xff]
          %v1578 = vld [vmem:[#allocation3 + $0x70] sm:$0xff]
          %v1579 = vld [vmem:[#allocation3 + $0x78] sm:$0xff]
          %1580 = vmatpush.msra.mxu0 %v1579
          %1581 = vmatpush.msra.mxu0 %v1578
          %1582 = vmatpush.msra.mxu0 %v1577
          %1583 = vmatpush.msra.mxu0 %v1576
          %1584 = vmatpush.msra.mxu0 %v1575
          %1585 = vmatpush.msra.mxu0 %v1574
          %1586 = vmatpush.msra.mxu0 %v1573
          %1587 = vmatpush.msra.mxu0 %v1572
          %1588 = vmatpush.msra.mxu0 %v1571
          %1589 = vmatpush.msra.mxu0 %v1570
          %1590 = vmatpush.msra.mxu0 %v1569
          %1591 = vmatpush.msra.mxu0 %v1568
          %1592 = vmatpush.msra.mxu0 %v1567
          %1593 = vmatpush.msra.mxu0 %v1566
          %1594 = vmatpush.msra.mxu0 %v1565
          %1595 = vmatpush.msra.mxu0 %v1564
          %1596 = vmatmul.f32.gmra.mxu0 %v1547
          %v1597 = vpop.f32.mrf.mxu0
          %v1598 = vadd.f32 0.0, %v1597
          %1599 = vdwg.mxu0
          %v1600 = vstv %s265
          %v1601 = vmul.f32 %v1600, %v1598
          %1602 = vmatpush.msra.mxu0 %v1563
          %1603 = vmatpush.msra.mxu0 %v1562
          %1604 = vmatpush.msra.mxu0 %v1561
          %1605 = vmatpush.msra.mxu0 %v1560
          %1606 = vmatpush.msra.mxu0 %v1559
          %1607 = vmatpush.msra.mxu0 %v1558
          %1608 = vmatpush.msra.mxu0 %v1557
          %1609 = vmatpush.msra.mxu0 %v1556
          %1610 = vmatpush.msra.mxu0 %v1555
          %1611 = vmatpush.msra.mxu0 %v1554
          %1612 = vmatpush.msra.mxu0 %v1553
          %1613 = vmatpush.msra.mxu0 %v1552
          %1614 = vmatpush.msra.mxu0 %v1551
          %1615 = vmatpush.msra.mxu0 %v1550
          %1616 = vmatpush.msra.mxu0 %v1549
          %1617 = vmatpush.msra.mxu0 %v1548
          %1618 = vmatmul.f32.gmra.mxu0 %v1547
          %v1619 = vpop.f32.mrf.mxu0
          %v1620 = vadd.f32 %v1601, %v1619
          %1621 = vdwg.mxu0
          %vm1622 = vcmp.ne.f32.partialorder %v1546, 0.0
          %v1623 = vtanh.pop %v1620
          %v1624 = vsel %vm1622, %v1546, %v1623
          %1625 = vst [vmem:[%s222 + $0x4] sm:$0x1] %v1624
          %1626 = vxpose.xlu0.b32.start [1/16] %v1547, 128
          %1627 = vxpose.xlu0.b32.cont [2/16] 0.0, 128
          %1628 = vxpose.xlu0.b32.cont [3/16] 0.0, 128
          %1629 = vxpose.xlu0.b32.cont [4/16] 0.0, 128
          %1630 = vxpose.xlu0.b32.cont [5/16] 0.0, 128
          %1631 = vxpose.xlu0.b32.cont [6/16] 0.0, 128
          %1632 = vxpose.xlu0.b32.cont [7/16] 0.0, 128
          %1633 = vxpose.xlu0.b32.cont [8/16] 0.0, 128
          %1634 = vxpose.xlu0.b32.cont [9/16] 0.0, 128
          %1635 = vxpose.xlu0.b32.cont [10/16] 0.0, 128
          %1636 = vxpose.xlu0.b32.cont [11/16] 0.0, 128
          %1637 = vxpose.xlu0.b32.cont [12/16] 0.0, 128
          %1638 = vxpose.xlu0.b32.cont [13/16] 0.0, 128
          %1639 = vxpose.xlu0.b32.cont [14/16] 0.0, 128
          %1640 = vxpose.xlu0.b32.cont [15/16] 0.0, 128
          %1641 = vxpose.xlu0.b32.end [16/16] 0.0, 128
          %v1642 = vpop.trf.xlu0
          %v1643 = vpop.trf.xlu0
          %v1644 = vpop.trf.xlu0
          %v1645 = vpop.trf.xlu0
          %v1646 = vpop.trf.xlu0
          %v1647 = vpop.trf.xlu0
          %v1648 = vpop.trf.xlu0
          %v1649 = vpop.trf.xlu0
          %v1650 = vpop.trf.xlu0
          %v1651 = vpop.trf.xlu0
          %v1652 = vpop.trf.xlu0
          %v1653 = vpop.trf.xlu0
          %v1654 = vpop.trf.xlu0
          %v1655 = vpop.trf.xlu0
          %v1656 = vpop.trf.xlu0
          %v1657 = vpop.trf.xlu0
          %vm1658 = vcmask 7168
          %v1660 = vsel %vm1658, %v1642, 0
          %v1663 = vsel %vm1658, %v1643, 0
          %v1666 = vsel %vm1658, %v1644, 0
          %v1669 = vsel %vm1658, %v1645, 0
          %v1672 = vsel %vm1658, %v1646, 0
          %v1675 = vsel %vm1658, %v1647, 0
          %v1678 = vsel %vm1658, %v1648, 0
          %v1681 = vsel %vm1658, %v1649, 0
          %v1684 = vsel %vm1658, %v1650, 0
          %v1687 = vsel %vm1658, %v1651, 0
          %v1690 = vsel %vm1658, %v1652, 0
          %v1693 = vsel %vm1658, %v1653, 0
          %v1696 = vsel %vm1658, %v1654, 0
          %v1699 = vsel %vm1658, %v1655, 0
          %v1702 = vsel %vm1658, %v1656, 0
          %v1705 = vsel %vm1658, %v1657, 0
          %vm1707 = vcmask 1040384
          %v1709 = vsel %vm1707, %v1624, 0
          %1711 = vmatpush.msra.mxu0 0.0
          %1712 = vmatpush.msra.mxu0 0.0
          %1713 = vmatpush.msra.mxu0 0.0
          %1714 = vmatpush.msra.mxu0 0.0
          %1715 = vmatpush.msra.mxu0 0.0
          %1716 = vmatpush.msra.mxu0 0.0
          %1717 = vmatpush.msra.mxu0 0.0
          %1718 = vmatpush.msra.mxu0 0.0
          %1719 = vmatpush.msra.mxu0 0.0
          %1720 = vmatpush.msra.mxu0 0.0
          %1721 = vmatpush.msra.mxu0 0.0
          %1722 = vmatpush.msra.mxu0 0.0
          %1723 = vmatpush.msra.mxu0 0.0
          %1724 = vmatpush.msra.mxu0 0.0
          %1725 = vmatpush.msra.mxu0 0.0
          %1726 = vmatpush.msra.mxu0 %v1709
          %1727 = vmatmul.f32.gmra.mxu0 %v1660
          %v1728 = vpop.f32.mrf.mxu0
          %v1729 = vadd.f32 0.0, %v1728
          %1730 = vmatmul.f32.gmra.mxu0 %v1663
          %v1731 = vpop.f32.mrf.mxu0
          %v1732 = vadd.f32 0.0, %v1731
          %1733 = vmatmul.f32.gmra.mxu0 %v1666
          %v1734 = vpop.f32.mrf.mxu0
          %v1735 = vadd.f32 0.0, %v1734
          %1736 = vmatmul.f32.gmra.mxu0 %v1669
          %v1737 = vpop.f32.mrf.mxu0
          %v1738 = vadd.f32 0.0, %v1737
          %1739 = vmatmul.f32.gmra.mxu0 %v1672
          %v1740 = vpop.f32.mrf.mxu0
          %v1741 = vadd.f32 0.0, %v1740
          %1742 = vmatmul.f32.gmra.mxu0 %v1675
          %v1743 = vpop.f32.mrf.mxu0
          %v1744 = vadd.f32 0.0, %v1743
          %1745 = vmatmul.f32.gmra.mxu0 %v1678
          %v1746 = vpop.f32.mrf.mxu0
          %v1747 = vadd.f32 0.0, %v1746
          %1748 = vmatmul.f32.gmra.mxu0 %v1681
          %v1749 = vpop.f32.mrf.mxu0
          %v1750 = vadd.f32 0.0, %v1749
          %1751 = vmatmul.f32.gmra.mxu0 %v1684
          %v1752 = vpop.f32.mrf.mxu0
          %v1753 = vadd.f32 0.0, %v1752
          %1754 = vmatmul.f32.gmra.mxu0 %v1687
          %v1755 = vpop.f32.mrf.mxu0
          %v1756 = vadd.f32 0.0, %v1755
          %1757 = vmatmul.f32.gmra.mxu0 %v1690
          %v1758 = vpop.f32.mrf.mxu0
          %v1759 = vadd.f32 0.0, %v1758
          %1760 = vmatmul.f32.gmra.mxu0 %v1693
          %v1761 = vpop.f32.mrf.mxu0
          %v1762 = vadd.f32 0.0, %v1761
          %1763 = vmatmul.f32.gmra.mxu0 %v1696
          %v1764 = vpop.f32.mrf.mxu0
          %v1765 = vadd.f32 0.0, %v1764
          %1766 = vmatmul.f32.gmra.mxu0 %v1699
          %v1767 = vpop.f32.mrf.mxu0
          %v1768 = vadd.f32 0.0, %v1767
          %1769 = vmatmul.f32.gmra.mxu0 %v1702
          %v1770 = vpop.f32.mrf.mxu0
          %v1771 = vadd.f32 0.0, %v1770
          %1772 = vmatmul.f32.gmra.mxu0 %v1705
          %v1773 = vpop.f32.mrf.mxu0
          %v1774 = vadd.f32 0.0, %v1773
          %1775 = vdwg.mxu0
          %s1776 = ssub.f32 1.0, %s266
          %v1777 = vld [vmem:[#allocation3] sm:$0xff]
          %v1778 = vld [vmem:[#allocation3 + $0x8] sm:$0xff]
          %v1779 = vld [vmem:[#allocation3 + $0x10] sm:$0xff]
          %v1780 = vld [vmem:[#allocation3 + $0x18] sm:$0xff]
          %v1781 = vld [vmem:[#allocation3 + $0x20] sm:$0xff]
          %v1782 = vld [vmem:[#allocation3 + $0x28] sm:$0xff]
          %v1783 = vld [vmem:[#allocation3 + $0x30] sm:$0xff]
          %v1784 = vld [vmem:[#allocation3 + $0x38] sm:$0xff]
          %v1785 = vld [vmem:[#allocation3 + $0x40] sm:$0xff]
          %v1786 = vld [vmem:[#allocation3 + $0x48] sm:$0xff]
          %v1787 = vld [vmem:[#allocation3 + $0x50] sm:$0xff]
          %v1788 = vld [vmem:[#allocation3 + $0x58] sm:$0xff]
          %v1789 = vld [vmem:[#allocation3 + $0x60] sm:$0xff]
          %v1790 = vld [vmem:[#allocation3 + $0x68] sm:$0xff]
          %v1791 = vld [vmem:[#allocation3 + $0x70] sm:$0xff]
          %v1792 = vld [vmem:[#allocation3 + $0x78] sm:$0xff]
          %v1793 = vstv %s1776
          %v1794 = vmul.f32 %v1793, %v1777
          %v1795 = vmul.f32 %v1793, %v1778
          %v1796 = vmul.f32 %v1793, %v1779
          %v1797 = vmul.f32 %v1793, %v1780
          %v1798 = vmul.f32 %v1793, %v1781
          %v1799 = vmul.f32 %v1793, %v1782
          %v1800 = vmul.f32 %v1793, %v1783
          %v1801 = vmul.f32 %v1793, %v1784
          %v1802 = vmul.f32 %v1793, %v1785
          %v1803 = vmul.f32 %v1793, %v1786
          %v1804 = vmul.f32 %v1793, %v1787
          %v1805 = vmul.f32 %v1793, %v1788
          %v1806 = vmul.f32 %v1793, %v1789
          %v1807 = vmul.f32 %v1793, %v1790
          %v1808 = vmul.f32 %v1793, %v1791
          %v1809 = vmul.f32 %v1793, %v1792
          %v1810 = vstv %s266
          %v1811 = vmul.f32 %v1810, %v1729
          %v1812 = vmul.f32 %v1810, %v1732
          %v1813 = vmul.f32 %v1810, %v1735
          %v1814 = vmul.f32 %v1810, %v1738
          %v1815 = vmul.f32 %v1810, %v1741
          %v1816 = vmul.f32 %v1810, %v1744
          %v1817 = vmul.f32 %v1810, %v1747
          %v1818 = vmul.f32 %v1810, %v1750
          %v1819 = vmul.f32 %v1810, %v1753
          %v1820 = vmul.f32 %v1810, %v1756
          %v1821 = vmul.f32 %v1810, %v1759
          %v1822 = vmul.f32 %v1810, %v1762
          %v1823 = vmul.f32 %v1810, %v1765
          %v1824 = vmul.f32 %v1810, %v1768
          %v1825 = vmul.f32 %v1810, %v1771
          %v1826 = vmul.f32 %v1810, %v1774
          %v1827 = vadd.f32 %v1794, %v1811
          %v1828 = vadd.f32 %v1795, %v1812
          %v1829 = vadd.f32 %v1796, %v1813
          %v1830 = vadd.f32 %v1797, %v1814
          %v1831 = vadd.f32 %v1798, %v1815
          %v1832 = vadd.f32 %v1799, %v1816
          %v1833 = vadd.f32 %v1800, %v1817
          %v1834 = vadd.f32 %v1801, %v1818
          %v1835 = vadd.f32 %v1802, %v1819
          %v1836 = vadd.f32 %v1803, %v1820
          %v1837 = vadd.f32 %v1804, %v1821
          %v1838 = vadd.f32 %v1805, %v1822
          %v1839 = vadd.f32 %v1806, %v1823
          %v1840 = vadd.f32 %v1807, %v1824
          %v1841 = vadd.f32 %v1808, %v1825
          %v1842 = vadd.f32 %v1809, %v1826
          %1843 = vst [vmem:[#allocation3] sm:$0xff] %v1827
          %1844 = vst [vmem:[#allocation3 + $0x8] sm:$0xff] %v1828
          %1845 = vst [vmem:[#allocation3 + $0x10] sm:$0xff] %v1829
          %1846 = vst [vmem:[#allocation3 + $0x18] sm:$0xff] %v1830
          %1847 = vst [vmem:[#allocation3 + $0x20] sm:$0xff] %v1831
          %1848 = vst [vmem:[#allocation3 + $0x28] sm:$0xff] %v1832
          %1849 = vst [vmem:[#allocation3 + $0x30] sm:$0xff] %v1833
          %1850 = vst [vmem:[#allocation3 + $0x38] sm:$0xff] %v1834
          %1851 = vst [vmem:[#allocation3 + $0x40] sm:$0xff] %v1835
          %1852 = vst [vmem:[#allocation3 + $0x48] sm:$0xff] %v1836
          %1853 = vst [vmem:[#allocation3 + $0x50] sm:$0xff] %v1837
          %1854 = vst [vmem:[#allocation3 + $0x58] sm:$0xff] %v1838
          %1855 = vst [vmem:[#allocation3 + $0x60] sm:$0xff] %v1839
          %1856 = vst [vmem:[#allocation3 + $0x68] sm:$0xff] %v1840
          %1857 = vst [vmem:[#allocation3 + $0x70] sm:$0xff] %v1841
          %1858 = vst [vmem:[#allocation3 + $0x78] sm:$0xff] %v1842
          %1859 = vst [vmem:[#allocation4] sm:$0x1] %v1624
        $region74: #{plastic_rollout.1} parent=39 // pred_fallthru
          _
        %p1860 = scmp.gt.s32.totalorder %s269, 5
        // Predicated region
        $region75: #{plastic_rollout.1} parent=39 // pred_check
          %p1861 = pneg %p1860
        $region76: #{plastic_rollout.1} parent=39 // pred_check_branch
          %1863 = sbr.rel (%p1861) target = $region78
        $region77: #{plastic_rollout.1} parent=39 // pred_region
          %v1864 = vld [vmem:[%s226 + $0x5] sm:$0x1]
          %v1865 = vld [vmem:[#allocation4] sm:$0x1]
          %v1866 = vld [vmem:[#allocation2] sm:$0xff]
          %v1867 = vld [vmem:[#allocation2 + $0x8] sm:$0xff]
          %v1868 = vld [vmem:[#allocation2 + $0x10] sm:$0xff]
          %v1869 = vld [vmem:[#allocation2 + $0x18] sm:$0xff]
          %v1870 = vld [vmem:[#allocation2 + $0x20] sm:$0xff]
          %v1871 = vld [vmem:[#allocation2 + $0x28] sm:$0xff]
          %v1872 = vld [vmem:[#allocation2 + $0x30] sm:$0xff]
          %v1873 = vld [vmem:[#allocation2 + $0x38] sm:$0xff]
          %v1874 = vld [vmem:[#allocation2 + $0x40] sm:$0xff]
          %v1875 = vld [vmem:[#allocation2 + $0x48] sm:$0xff]
          %v1876 = vld [vmem:[#allocation2 + $0x50] sm:$0xff]
          %v1877 = vld [vmem:[#allocation2 + $0x58] sm:$0xff]
          %v1878 = vld [vmem:[#allocation2 + $0x60] sm:$0xff]
          %v1879 = vld [vmem:[#allocation2 + $0x68] sm:$0xff]
          %v1880 = vld [vmem:[#allocation2 + $0x70] sm:$0xff]
          %v1881 = vld [vmem:[#allocation2 + $0x78] sm:$0xff]
          %v1882 = vld [vmem:[#allocation3] sm:$0xff]
          %v1883 = vld [vmem:[#allocation3 + $0x8] sm:$0xff]
          %v1884 = vld [vmem:[#allocation3 + $0x10] sm:$0xff]
          %v1885 = vld [vmem:[#allocation3 + $0x18] sm:$0xff]
          %v1886 = vld [vmem:[#allocation3 + $0x20] sm:$0xff]
          %v1887 = vld [vmem:[#allocation3 + $0x28] sm:$0xff]
          %v1888 = vld [vmem:[#allocation3 + $0x30] sm:$0xff]
          %v1889 = vld [vmem:[#allocation3 + $0x38] sm:$0xff]
          %v1890 = vld [vmem:[#allocation3 + $0x40] sm:$0xff]
          %v1891 = vld [vmem:[#allocation3 + $0x48] sm:$0xff]
          %v1892 = vld [vmem:[#allocation3 + $0x50] sm:$0xff]
          %v1893 = vld [vmem:[#allocation3 + $0x58] sm:$0xff]
          %v1894 = vld [vmem:[#allocation3 + $0x60] sm:$0xff]
          %v1895 = vld [vmem:[#allocation3 + $0x68] sm:$0xff]
          %v1896 = vld [vmem:[#allocation3 + $0x70] sm:$0xff]
          %v1897 = vld [vmem:[#allocation3 + $0x78] sm:$0xff]
          %1898 = vmatpush.msra.mxu0 %v1897
          %1899 = vmatpush.msra.mxu0 %v1896
          %1900 = vmatpush.msra.mxu0 %v1895
          %1901 = vmatpush.msra.mxu0 %v1894
          %1902 = vmatpush.msra.mxu0 %v1893
          %1903 = vmatpush.msra.mxu0 %v1892
          %1904 = vmatpush.msra.mxu0 %v1891
          %1905 = vmatpush.msra.mxu0 %v1890
          %1906 = vmatpush.msra.mxu0 %v1889
          %1907 = vmatpush.msra.mxu0 %v1888
          %1908 = vmatpush.msra.mxu0 %v1887
          %1909 = vmatpush.msra.mxu0 %v1886
          %1910 = vmatpush.msra.mxu0 %v1885
          %1911 = vmatpush.msra.mxu0 %v1884
          %1912 = vmatpush.msra.mxu0 %v1883
          %1913 = vmatpush.msra.mxu0 %v1882
          %1914 = vmatmul.f32.gmra.mxu0 %v1865
          %v1915 = vpop.f32.mrf.mxu0
          %v1916 = vadd.f32 0.0, %v1915
          %1917 = vdwg.mxu0
          %v1918 = vstv %s265
          %v1919 = vmul.f32 %v1918, %v1916
          %1920 = vmatpush.msra.mxu0 %v1881
          %1921 = vmatpush.msra.mxu0 %v1880
          %1922 = vmatpush.msra.mxu0 %v1879
          %1923 = vmatpush.msra.mxu0 %v1878
          %1924 = vmatpush.msra.mxu0 %v1877
          %1925 = vmatpush.msra.mxu0 %v1876
          %1926 = vmatpush.msra.mxu0 %v1875
          %1927 = vmatpush.msra.mxu0 %v1874
          %1928 = vmatpush.msra.mxu0 %v1873
          %1929 = vmatpush.msra.mxu0 %v1872
          %1930 = vmatpush.msra.mxu0 %v1871
          %1931 = vmatpush.msra.mxu0 %v1870
          %1932 = vmatpush.msra.mxu0 %v1869
          %1933 = vmatpush.msra.mxu0 %v1868
          %1934 = vmatpush.msra.mxu0 %v1867
          %1935 = vmatpush.msra.mxu0 %v1866
          %1936 = vmatmul.f32.gmra.mxu0 %v1865
          %v1937 = vpop.f32.mrf.mxu0
          %v1938 = vadd.f32 %v1919, %v1937
          %1939 = vdwg.mxu0
          %vm1940 = vcmp.ne.f32.partialorder %v1864, 0.0
          %v1941 = vtanh.pop %v1938
          %v1942 = vsel %vm1940, %v1864, %v1941
          %1943 = vst [vmem:[%s222 + $0x5] sm:$0x1] %v1942
          %1944 = vxpose.xlu0.b32.start [1/16] %v1865, 128
          %1945 = vxpose.xlu0.b32.cont [2/16] 0.0, 128
          %1946 = vxpose.xlu0.b32.cont [3/16] 0.0, 128
          %1947 = vxpose.xlu0.b32.cont [4/16] 0.0, 128
          %1948 = vxpose.xlu0.b32.cont [5/16] 0.0, 128
          %1949 = vxpose.xlu0.b32.cont [6/16] 0.0, 128
          %1950 = vxpose.xlu0.b32.cont [7/16] 0.0, 128
          %1951 = vxpose.xlu0.b32.cont [8/16] 0.0, 128
          %1952 = vxpose.xlu0.b32.cont [9/16] 0.0, 128
          %1953 = vxpose.xlu0.b32.cont [10/16] 0.0, 128
          %1954 = vxpose.xlu0.b32.cont [11/16] 0.0, 128
          %1955 = vxpose.xlu0.b32.cont [12/16] 0.0, 128
          %1956 = vxpose.xlu0.b32.cont [13/16] 0.0, 128
          %1957 = vxpose.xlu0.b32.cont [14/16] 0.0, 128
          %1958 = vxpose.xlu0.b32.cont [15/16] 0.0, 128
          %1959 = vxpose.xlu0.b32.end [16/16] 0.0, 128
          %v1960 = vpop.trf.xlu0
          %v1961 = vpop.trf.xlu0
          %v1962 = vpop.trf.xlu0
          %v1963 = vpop.trf.xlu0
          %v1964 = vpop.trf.xlu0
          %v1965 = vpop.trf.xlu0
          %v1966 = vpop.trf.xlu0
          %v1967 = vpop.trf.xlu0
          %v1968 = vpop.trf.xlu0
          %v1969 = vpop.trf.xlu0
          %v1970 = vpop.trf.xlu0
          %v1971 = vpop.trf.xlu0
          %v1972 = vpop.trf.xlu0
          %v1973 = vpop.trf.xlu0
          %v1974 = vpop.trf.xlu0
          %v1975 = vpop.trf.xlu0
          %vm1976 = vcmask 7168
          %v1978 = vsel %vm1976, %v1960, 0
          %v1981 = vsel %vm1976, %v1961, 0
          %v1984 = vsel %vm1976, %v1962, 0
          %v1987 = vsel %vm1976, %v1963, 0
          %v1990 = vsel %vm1976, %v1964, 0
          %v1993 = vsel %vm1976, %v1965, 0
          %v1996 = vsel %vm1976, %v1966, 0
          %v1999 = vsel %vm1976, %v1967, 0
          %v2002 = vsel %vm1976, %v1968, 0
          %v2005 = vsel %vm1976, %v1969, 0
          %v2008 = vsel %vm1976, %v1970, 0
          %v2011 = vsel %vm1976, %v1971, 0
          %v2014 = vsel %vm1976, %v1972, 0
          %v2017 = vsel %vm1976, %v1973, 0
          %v2020 = vsel %vm1976, %v1974, 0
          %v2023 = vsel %vm1976, %v1975, 0
          %vm2025 = vcmask 1040384
          %v2027 = vsel %vm2025, %v1942, 0
          %2029 = vmatpush.msra.mxu0 0.0
          %2030 = vmatpush.msra.mxu0 0.0
          %2031 = vmatpush.msra.mxu0 0.0
          %2032 = vmatpush.msra.mxu0 0.0
          %2033 = vmatpush.msra.mxu0 0.0
          %2034 = vmatpush.msra.mxu0 0.0
          %2035 = vmatpush.msra.mxu0 0.0
          %2036 = vmatpush.msra.mxu0 0.0
          %2037 = vmatpush.msra.mxu0 0.0
          %2038 = vmatpush.msra.mxu0 0.0
          %2039 = vmatpush.msra.mxu0 0.0
          %2040 = vmatpush.msra.mxu0 0.0
          %2041 = vmatpush.msra.mxu0 0.0
          %2042 = vmatpush.msra.mxu0 0.0
          %2043 = vmatpush.msra.mxu0 0.0
          %2044 = vmatpush.msra.mxu0 %v2027
          %2045 = vmatmul.f32.gmra.mxu0 %v1978
          %v2046 = vpop.f32.mrf.mxu0
          %v2047 = vadd.f32 0.0, %v2046
          %2048 = vmatmul.f32.gmra.mxu0 %v1981
          %v2049 = vpop.f32.mrf.mxu0
          %v2050 = vadd.f32 0.0, %v2049
          %2051 = vmatmul.f32.gmra.mxu0 %v1984
          %v2052 = vpop.f32.mrf.mxu0
          %v2053 = vadd.f32 0.0, %v2052
          %2054 = vmatmul.f32.gmra.mxu0 %v1987
          %v2055 = vpop.f32.mrf.mxu0
          %v2056 = vadd.f32 0.0, %v2055
          %2057 = vmatmul.f32.gmra.mxu0 %v1990
          %v2058 = vpop.f32.mrf.mxu0
          %v2059 = vadd.f32 0.0, %v2058
          %2060 = vmatmul.f32.gmra.mxu0 %v1993
          %v2061 = vpop.f32.mrf.mxu0
          %v2062 = vadd.f32 0.0, %v2061
          %2063 = vmatmul.f32.gmra.mxu0 %v1996
          %v2064 = vpop.f32.mrf.mxu0
          %v2065 = vadd.f32 0.0, %v2064
          %2066 = vmatmul.f32.gmra.mxu0 %v1999
          %v2067 = vpop.f32.mrf.mxu0
          %v2068 = vadd.f32 0.0, %v2067
          %2069 = vmatmul.f32.gmra.mxu0 %v2002
          %v2070 = vpop.f32.mrf.mxu0
          %v2071 = vadd.f32 0.0, %v2070
          %2072 = vmatmul.f32.gmra.mxu0 %v2005
          %v2073 = vpop.f32.mrf.mxu0
          %v2074 = vadd.f32 0.0, %v2073
          %2075 = vmatmul.f32.gmra.mxu0 %v2008
          %v2076 = vpop.f32.mrf.mxu0
          %v2077 = vadd.f32 0.0, %v2076
          %2078 = vmatmul.f32.gmra.mxu0 %v2011
          %v2079 = vpop.f32.mrf.mxu0
          %v2080 = vadd.f32 0.0, %v2079
          %2081 = vmatmul.f32.gmra.mxu0 %v2014
          %v2082 = vpop.f32.mrf.mxu0
          %v2083 = vadd.f32 0.0, %v2082
          %2084 = vmatmul.f32.gmra.mxu0 %v2017
          %v2085 = vpop.f32.mrf.mxu0
          %v2086 = vadd.f32 0.0, %v2085
          %2087 = vmatmul.f32.gmra.mxu0 %v2020
          %v2088 = vpop.f32.mrf.mxu0
          %v2089 = vadd.f32 0.0, %v2088
          %2090 = vmatmul.f32.gmra.mxu0 %v2023
          %v2091 = vpop.f32.mrf.mxu0
          %v2092 = vadd.f32 0.0, %v2091
          %2093 = vdwg.mxu0
          %s2094 = ssub.f32 1.0, %s266
          %v2095 = vld [vmem:[#allocation3] sm:$0xff]
          %v2096 = vld [vmem:[#allocation3 + $0x8] sm:$0xff]
          %v2097 = vld [vmem:[#allocation3 + $0x10] sm:$0xff]
          %v2098 = vld [vmem:[#allocation3 + $0x18] sm:$0xff]
          %v2099 = vld [vmem:[#allocation3 + $0x20] sm:$0xff]
          %v2100 = vld [vmem:[#allocation3 + $0x28] sm:$0xff]
          %v2101 = vld [vmem:[#allocation3 + $0x30] sm:$0xff]
          %v2102 = vld [vmem:[#allocation3 + $0x38] sm:$0xff]
          %v2103 = vld [vmem:[#allocation3 + $0x40] sm:$0xff]
          %v2104 = vld [vmem:[#allocation3 + $0x48] sm:$0xff]
          %v2105 = vld [vmem:[#allocation3 + $0x50] sm:$0xff]
          %v2106 = vld [vmem:[#allocation3 + $0x58] sm:$0xff]
          %v2107 = vld [vmem:[#allocation3 + $0x60] sm:$0xff]
          %v2108 = vld [vmem:[#allocation3 + $0x68] sm:$0xff]
          %v2109 = vld [vmem:[#allocation3 + $0x70] sm:$0xff]
          %v2110 = vld [vmem:[#allocation3 + $0x78] sm:$0xff]
          %v2111 = vstv %s2094
          %v2112 = vmul.f32 %v2111, %v2095
          %v2113 = vmul.f32 %v2111, %v2096
          %v2114 = vmul.f32 %v2111, %v2097
          %v2115 = vmul.f32 %v2111, %v2098
          %v2116 = vmul.f32 %v2111, %v2099
          %v2117 = vmul.f32 %v2111, %v2100
          %v2118 = vmul.f32 %v2111, %v2101
          %v2119 = vmul.f32 %v2111, %v2102
          %v2120 = vmul.f32 %v2111, %v2103
          %v2121 = vmul.f32 %v2111, %v2104
          %v2122 = vmul.f32 %v2111, %v2105
          %v2123 = vmul.f32 %v2111, %v2106
          %v2124 = vmul.f32 %v2111, %v2107
          %v2125 = vmul.f32 %v2111, %v2108
          %v2126 = vmul.f32 %v2111, %v2109
          %v2127 = vmul.f32 %v2111, %v2110
          %v2128 = vstv %s266
          %v2129 = vmul.f32 %v2128, %v2047
          %v2130 = vmul.f32 %v2128, %v2050
          %v2131 = vmul.f32 %v2128, %v2053
          %v2132 = vmul.f32 %v2128, %v2056
          %v2133 = vmul.f32 %v2128, %v2059
          %v2134 = vmul.f32 %v2128, %v2062
          %v2135 = vmul.f32 %v2128, %v2065
          %v2136 = vmul.f32 %v2128, %v2068
          %v2137 = vmul.f32 %v2128, %v2071
          %v2138 = vmul.f32 %v2128, %v2074
          %v2139 = vmul.f32 %v2128, %v2077
          %v2140 = vmul.f32 %v2128, %v2080
          %v2141 = vmul.f32 %v2128, %v2083
          %v2142 = vmul.f32 %v2128, %v2086
          %v2143 = vmul.f32 %v2128, %v2089
          %v2144 = vmul.f32 %v2128, %v2092
          %v2145 = vadd.f32 %v2112, %v2129
          %v2146 = vadd.f32 %v2113, %v2130
          %v2147 = vadd.f32 %v2114, %v2131
          %v2148 = vadd.f32 %v2115, %v2132
          %v2149 = vadd.f32 %v2116, %v2133
          %v2150 = vadd.f32 %v2117, %v2134
          %v2151 = vadd.f32 %v2118, %v2135
          %v2152 = vadd.f32 %v2119, %v2136
          %v2153 = vadd.f32 %v2120, %v2137
          %v2154 = vadd.f32 %v2121, %v2138
          %v2155 = vadd.f32 %v2122, %v2139
          %v2156 = vadd.f32 %v2123, %v2140
          %v2157 = vadd.f32 %v2124, %v2141
          %v2158 = vadd.f32 %v2125, %v2142
          %v2159 = vadd.f32 %v2126, %v2143
          %v2160 = vadd.f32 %v2127, %v2144
          %2161 = vst [vmem:[#allocation3] sm:$0xff] %v2145
          %2162 = vst [vmem:[#allocation3 + $0x8] sm:$0xff] %v2146
          %2163 = vst [vmem:[#allocation3 + $0x10] sm:$0xff] %v2147
          %2164 = vst [vmem:[#allocation3 + $0x18] sm:$0xff] %v2148
          %2165 = vst [vmem:[#allocation3 + $0x20] sm:$0xff] %v2149
          %2166 = vst [vmem:[#allocation3 + $0x28] sm:$0xff] %v2150
          %2167 = vst [vmem:[#allocation3 + $0x30] sm:$0xff] %v2151
          %2168 = vst [vmem:[#allocation3 + $0x38] sm:$0xff] %v2152
          %2169 = vst [vmem:[#allocation3 + $0x40] sm:$0xff] %v2153
          %2170 = vst [vmem:[#allocation3 + $0x48] sm:$0xff] %v2154
          %2171 = vst [vmem:[#allocation3 + $0x50] sm:$0xff] %v2155
          %2172 = vst [vmem:[#allocation3 + $0x58] sm:$0xff] %v2156
          %2173 = vst [vmem:[#allocation3 + $0x60] sm:$0xff] %v2157
          %2174 = vst [vmem:[#allocation3 + $0x68] sm:$0xff] %v2158
          %2175 = vst [vmem:[#allocation3 + $0x70] sm:$0xff] %v2159
          %2176 = vst [vmem:[#allocation3 + $0x78] sm:$0xff] %v2160
          %2177 = vst [vmem:[#allocation4] sm:$0x1] %v1942
        $region78: #{plastic_rollout.1} parent=39 // pred_fallthru
          _
        %p2178 = scmp.gt.s32.totalorder %s269, 6
        // Predicated region
        $region79: #{plastic_rollout.1} parent=39 // pred_check
          %p2179 = pneg %p2178
        $region80: #{plastic_rollout.1} parent=39 // pred_check_branch
          %2181 = sbr.rel (%p2179) target = $region82
        $region81: #{plastic_rollout.1} parent=39 // pred_region
          %v2182 = vld [vmem:[%s226 + $0x6] sm:$0x1]
          %v2183 = vld [vmem:[#allocation4] sm:$0x1]
          %v2184 = vld [vmem:[#allocation2] sm:$0xff]
          %v2185 = vld [vmem:[#allocation2 + $0x8] sm:$0xff]
          %v2186 = vld [vmem:[#allocation2 + $0x10] sm:$0xff]
          %v2187 = vld [vmem:[#allocation2 + $0x18] sm:$0xff]
          %v2188 = vld [vmem:[#allocation2 + $0x20] sm:$0xff]
          %v2189 = vld [vmem:[#allocation2 + $0x28] sm:$0xff]
          %v2190 = vld [vmem:[#allocation2 + $0x30] sm:$0xff]
          %v2191 = vld [vmem:[#allocation2 + $0x38] sm:$0xff]
          %v2192 = vld [vmem:[#allocation2 + $0x40] sm:$0xff]
          %v2193 = vld [vmem:[#allocation2 + $0x48] sm:$0xff]
          %v2194 = vld [vmem:[#allocation2 + $0x50] sm:$0xff]
          %v2195 = vld [vmem:[#allocation2 + $0x58] sm:$0xff]
          %v2196 = vld [vmem:[#allocation2 + $0x60] sm:$0xff]
          %v2197 = vld [vmem:[#allocation2 + $0x68] sm:$0xff]
          %v2198 = vld [vmem:[#allocation2 + $0x70] sm:$0xff]
          %v2199 = vld [vmem:[#allocation2 + $0x78] sm:$0xff]
          %v2200 = vld [vmem:[#allocation3] sm:$0xff]
          %v2201 = vld [vmem:[#allocation3 + $0x8] sm:$0xff]
          %v2202 = vld [vmem:[#allocation3 + $0x10] sm:$0xff]
          %v2203 = vld [vmem:[#allocation3 + $0x18] sm:$0xff]
          %v2204 = vld [vmem:[#allocation3 + $0x20] sm:$0xff]
          %v2205 = vld [vmem:[#allocation3 + $0x28] sm:$0xff]
          %v2206 = vld [vmem:[#allocation3 + $0x30] sm:$0xff]
          %v2207 = vld [vmem:[#allocation3 + $0x38] sm:$0xff]
          %v2208 = vld [vmem:[#allocation3 + $0x40] sm:$0xff]
          %v2209 = vld [vmem:[#allocation3 + $0x48] sm:$0xff]
          %v2210 = vld [vmem:[#allocation3 + $0x50] sm:$0xff]
          %v2211 = vld [vmem:[#allocation3 + $0x58] sm:$0xff]
          %v2212 = vld [vmem:[#allocation3 + $0x60] sm:$0xff]
          %v2213 = vld [vmem:[#allocation3 + $0x68] sm:$0xff]
          %v2214 = vld [vmem:[#allocation3 + $0x70] sm:$0xff]
          %v2215 = vld [vmem:[#allocation3 + $0x78] sm:$0xff]
          %2216 = vmatpush.msra.mxu0 %v2215
          %2217 = vmatpush.msra.mxu0 %v2214
          %2218 = vmatpush.msra.mxu0 %v2213
          %2219 = vmatpush.msra.mxu0 %v2212
          %2220 = vmatpush.msra.mxu0 %v2211
          %2221 = vmatpush.msra.mxu0 %v2210
          %2222 = vmatpush.msra.mxu0 %v2209
          %2223 = vmatpush.msra.mxu0 %v2208
          %2224 = vmatpush.msra.mxu0 %v2207
          %2225 = vmatpush.msra.mxu0 %v2206
          %2226 = vmatpush.msra.mxu0 %v2205
          %2227 = vmatpush.msra.mxu0 %v2204
          %2228 = vmatpush.msra.mxu0 %v2203
          %2229 = vmatpush.msra.mxu0 %v2202
          %2230 = vmatpush.msra.mxu0 %v2201
          %2231 = vmatpush.msra.mxu0 %v2200
          %2232 = vmatmul.f32.gmra.mxu0 %v2183
          %v2233 = vpop.f32.mrf.mxu0
          %v2234 = vadd.f32 0.0, %v2233
          %2235 = vdwg.mxu0
          %v2236 = vstv %s265
          %v2237 = vmul.f32 %v2236, %v2234
          %2238 = vmatpush.msra.mxu0 %v2199
          %2239 = vmatpush.msra.mxu0 %v2198
          %2240 = vmatpush.msra.mxu0 %v2197
          %2241 = vmatpush.msra.mxu0 %v2196
          %2242 = vmatpush.msra.mxu0 %v2195
          %2243 = vmatpush.msra.mxu0 %v2194
          %2244 = vmatpush.msra.mxu0 %v2193
          %2245 = vmatpush.msra.mxu0 %v2192
          %2246 = vmatpush.msra.mxu0 %v2191
          %2247 = vmatpush.msra.mxu0 %v2190
          %2248 = vmatpush.msra.mxu0 %v2189
          %2249 = vmatpush.msra.mxu0 %v2188
          %2250 = vmatpush.msra.mxu0 %v2187
          %2251 = vmatpush.msra.mxu0 %v2186
          %2252 = vmatpush.msra.mxu0 %v2185
          %2253 = vmatpush.msra.mxu0 %v2184
          %2254 = vmatmul.f32.gmra.mxu0 %v2183
          %v2255 = vpop.f32.mrf.mxu0
          %v2256 = vadd.f32 %v2237, %v2255
          %2257 = vdwg.mxu0
          %vm2258 = vcmp.ne.f32.partialorder %v2182, 0.0
          %v2259 = vtanh.pop %v2256
          %v2260 = vsel %vm2258, %v2182, %v2259
          %2261 = vst [vmem:[%s222 + $0x6] sm:$0x1] %v2260
          %2262 = vxpose.xlu0.b32.start [1/16] %v2183, 128
          %2263 = vxpose.xlu0.b32.cont [2/16] 0.0, 128
          %2264 = vxpose.xlu0.b32.cont [3/16] 0.0, 128
          %2265 = vxpose.xlu0.b32.cont [4/16] 0.0, 128
          %2266 = vxpose.xlu0.b32.cont [5/16] 0.0, 128
          %2267 = vxpose.xlu0.b32.cont [6/16] 0.0, 128
          %2268 = vxpose.xlu0.b32.cont [7/16] 0.0, 128
          %2269 = vxpose.xlu0.b32.cont [8/16] 0.0, 128
          %2270 = vxpose.xlu0.b32.cont [9/16] 0.0, 128
          %2271 = vxpose.xlu0.b32.cont [10/16] 0.0, 128
          %2272 = vxpose.xlu0.b32.cont [11/16] 0.0, 128
          %2273 = vxpose.xlu0.b32.cont [12/16] 0.0, 128
          %2274 = vxpose.xlu0.b32.cont [13/16] 0.0, 128
          %2275 = vxpose.xlu0.b32.cont [14/16] 0.0, 128
          %2276 = vxpose.xlu0.b32.cont [15/16] 0.0, 128
          %2277 = vxpose.xlu0.b32.end [16/16] 0.0, 128
          %v2278 = vpop.trf.xlu0
          %v2279 = vpop.trf.xlu0
          %v2280 = vpop.trf.xlu0
          %v2281 = vpop.trf.xlu0
          %v2282 = vpop.trf.xlu0
          %v2283 = vpop.trf.xlu0
          %v2284 = vpop.trf.xlu0
          %v2285 = vpop.trf.xlu0
          %v2286 = vpop.trf.xlu0
          %v2287 = vpop.trf.xlu0
          %v2288 = vpop.trf.xlu0
          %v2289 = vpop.trf.xlu0
          %v2290 = vpop.trf.xlu0
          %v2291 = vpop.trf.xlu0
          %v2292 = vpop.trf.xlu0
          %v2293 = vpop.trf.xlu0
          %vm2294 = vcmask 7168
          %v2296 = vsel %vm2294, %v2278, 0
          %v2299 = vsel %vm2294, %v2279, 0
          %v2302 = vsel %vm2294, %v2280, 0
          %v2305 = vsel %vm2294, %v2281, 0
          %v2308 = vsel %vm2294, %v2282, 0
          %v2311 = vsel %vm2294, %v2283, 0
          %v2314 = vsel %vm2294, %v2284, 0
          %v2317 = vsel %vm2294, %v2285, 0
          %v2320 = vsel %vm2294, %v2286, 0
          %v2323 = vsel %vm2294, %v2287, 0
          %v2326 = vsel %vm2294, %v2288, 0
          %v2329 = vsel %vm2294, %v2289, 0
          %v2332 = vsel %vm2294, %v2290, 0
          %v2335 = vsel %vm2294, %v2291, 0
          %v2338 = vsel %vm2294, %v2292, 0
          %v2341 = vsel %vm2294, %v2293, 0
          %vm2343 = vcmask 1040384
          %v2345 = vsel %vm2343, %v2260, 0
          %2347 = vmatpush.msra.mxu0 0.0
          %2348 = vmatpush.msra.mxu0 0.0
          %2349 = vmatpush.msra.mxu0 0.0
          %2350 = vmatpush.msra.mxu0 0.0
          %2351 = vmatpush.msra.mxu0 0.0
          %2352 = vmatpush.msra.mxu0 0.0
          %2353 = vmatpush.msra.mxu0 0.0
          %2354 = vmatpush.msra.mxu0 0.0
          %2355 = vmatpush.msra.mxu0 0.0
          %2356 = vmatpush.msra.mxu0 0.0
          %2357 = vmatpush.msra.mxu0 0.0
          %2358 = vmatpush.msra.mxu0 0.0
          %2359 = vmatpush.msra.mxu0 0.0
          %2360 = vmatpush.msra.mxu0 0.0
          %2361 = vmatpush.msra.mxu0 0.0
          %2362 = vmatpush.msra.mxu0 %v2345
          %2363 = vmatmul.f32.gmra.mxu0 %v2296
          %v2364 = vpop.f32.mrf.mxu0
          %v2365 = vadd.f32 0.0, %v2364
          %2366 = vmatmul.f32.gmra.mxu0 %v2299
          %v2367 = vpop.f32.mrf.mxu0
          %v2368 = vadd.f32 0.0, %v2367
          %2369 = vmatmul.f32.gmra.mxu0 %v2302
          %v2370 = vpop.f32.mrf.mxu0
          %v2371 = vadd.f32 0.0, %v2370
          %2372 = vmatmul.f32.gmra.mxu0 %v2305
          %v2373 = vpop.f32.mrf.mxu0
          %v2374 = vadd.f32 0.0, %v2373
          %2375 = vmatmul.f32.gmra.mxu0 %v2308
          %v2376 = vpop.f32.mrf.mxu0
          %v2377 = vadd.f32 0.0, %v2376
          %2378 = vmatmul.f32.gmra.mxu0 %v2311
          %v2379 = vpop.f32.mrf.mxu0
          %v2380 = vadd.f32 0.0, %v2379
          %2381 = vmatmul.f32.gmra.mxu0 %v2314
          %v2382 = vpop.f32.mrf.mxu0
          %v2383 = vadd.f32 0.0, %v2382
          %2384 = vmatmul.f32.gmra.mxu0 %v2317
          %v2385 = vpop.f32.mrf.mxu0
          %v2386 = vadd.f32 0.0, %v2385
          %2387 = vmatmul.f32.gmra.mxu0 %v2320
          %v2388 = vpop.f32.mrf.mxu0
          %v2389 = vadd.f32 0.0, %v2388
          %2390 = vmatmul.f32.gmra.mxu0 %v2323
          %v2391 = vpop.f32.mrf.mxu0
          %v2392 = vadd.f32 0.0, %v2391
          %2393 = vmatmul.f32.gmra.mxu0 %v2326
          %v2394 = vpop.f32.mrf.mxu0
          %v2395 = vadd.f32 0.0, %v2394
          %2396 = vmatmul.f32.gmra.mxu0 %v2329
          %v2397 = vpop.f32.mrf.mxu0
          %v2398 = vadd.f32 0.0, %v2397
          %2399 = vmatmul.f32.gmra.mxu0 %v2332
          %v2400 = vpop.f32.mrf.mxu0
          %v2401 = vadd.f32 0.0, %v2400
          %2402 = vmatmul.f32.gmra.mxu0 %v2335
          %v2403 = vpop.f32.mrf.mxu0
          %v2404 = vadd.f32 0.0, %v2403
          %2405 = vmatmul.f32.gmra.mxu0 %v2338
          %v2406 = vpop.f32.mrf.mxu0
          %v2407 = vadd.f32 0.0, %v2406
          %2408 = vmatmul.f32.gmra.mxu0 %v2341
          %v2409 = vpop.f32.mrf.mxu0
          %v2410 = vadd.f32 0.0, %v2409
          %2411 = vdwg.mxu0
          %s2412 = ssub.f32 1.0, %s266
          %v2413 = vld [vmem:[#allocation3] sm:$0xff]
          %v2414 = vld [vmem:[#allocation3 + $0x8] sm:$0xff]
          %v2415 = vld [vmem:[#allocation3 + $0x10] sm:$0xff]
          %v2416 = vld [vmem:[#allocation3 + $0x18] sm:$0xff]
          %v2417 = vld [vmem:[#allocation3 + $0x20] sm:$0xff]
          %v2418 = vld [vmem:[#allocation3 + $0x28] sm:$0xff]
          %v2419 = vld [vmem:[#allocation3 + $0x30] sm:$0xff]
          %v2420 = vld [vmem:[#allocation3 + $0x38] sm:$0xff]
          %v2421 = vld [vmem:[#allocation3 + $0x40] sm:$0xff]
          %v2422 = vld [vmem:[#allocation3 + $0x48] sm:$0xff]
          %v2423 = vld [vmem:[#allocation3 + $0x50] sm:$0xff]
          %v2424 = vld [vmem:[#allocation3 + $0x58] sm:$0xff]
          %v2425 = vld [vmem:[#allocation3 + $0x60] sm:$0xff]
          %v2426 = vld [vmem:[#allocation3 + $0x68] sm:$0xff]
          %v2427 = vld [vmem:[#allocation3 + $0x70] sm:$0xff]
          %v2428 = vld [vmem:[#allocation3 + $0x78] sm:$0xff]
          %v2429 = vstv %s2412
          %v2430 = vmul.f32 %v2429, %v2413
          %v2431 = vmul.f32 %v2429, %v2414
          %v2432 = vmul.f32 %v2429, %v2415
          %v2433 = vmul.f32 %v2429, %v2416
          %v2434 = vmul.f32 %v2429, %v2417
          %v2435 = vmul.f32 %v2429, %v2418
          %v2436 = vmul.f32 %v2429, %v2419
          %v2437 = vmul.f32 %v2429, %v2420
          %v2438 = vmul.f32 %v2429, %v2421
          %v2439 = vmul.f32 %v2429, %v2422
          %v2440 = vmul.f32 %v2429, %v2423
          %v2441 = vmul.f32 %v2429, %v2424
          %v2442 = vmul.f32 %v2429, %v2425
          %v2443 = vmul.f32 %v2429, %v2426
          %v2444 = vmul.f32 %v2429, %v2427
          %v2445 = vmul.f32 %v2429, %v2428
          %v2446 = vstv %s266
          %v2447 = vmul.f32 %v2446, %v2365
          %v2448 = vmul.f32 %v2446, %v2368
          %v2449 = vmul.f32 %v2446, %v2371
          %v2450 = vmul.f32 %v2446, %v2374
          %v2451 = vmul.f32 %v2446, %v2377
          %v2452 = vmul.f32 %v2446, %v2380
          %v2453 = vmul.f32 %v2446, %v2383
          %v2454 = vmul.f32 %v2446, %v2386
          %v2455 = vmul.f32 %v2446, %v2389
          %v2456 = vmul.f32 %v2446, %v2392
          %v2457 = vmul.f32 %v2446, %v2395
          %v2458 = vmul.f32 %v2446, %v2398
          %v2459 = vmul.f32 %v2446, %v2401
          %v2460 = vmul.f32 %v2446, %v2404
          %v2461 = vmul.f32 %v2446, %v2407
          %v2462 = vmul.f32 %v2446, %v2410
          %v2463 = vadd.f32 %v2430, %v2447
          %v2464 = vadd.f32 %v2431, %v2448
          %v2465 = vadd.f32 %v2432, %v2449
          %v2466 = vadd.f32 %v2433, %v2450
          %v2467 = vadd.f32 %v2434, %v2451
          %v2468 = vadd.f32 %v2435, %v2452
          %v2469 = vadd.f32 %v2436, %v2453
          %v2470 = vadd.f32 %v2437, %v2454
          %v2471 = vadd.f32 %v2438, %v2455
          %v2472 = vadd.f32 %v2439, %v2456
          %v2473 = vadd.f32 %v2440, %v2457
          %v2474 = vadd.f32 %v2441, %v2458
          %v2475 = vadd.f32 %v2442, %v2459
          %v2476 = vadd.f32 %v2443, %v2460
          %v2477 = vadd.f32 %v2444, %v2461
          %v2478 = vadd.f32 %v2445, %v2462
          %2479 = vst [vmem:[#allocation3] sm:$0xff] %v2463
          %2480 = vst [vmem:[#allocation3 + $0x8] sm:$0xff] %v2464
          %2481 = vst [vmem:[#allocation3 + $0x10] sm:$0xff] %v2465
          %2482 = vst [vmem:[#allocation3 + $0x18] sm:$0xff] %v2466
          %2483 = vst [vmem:[#allocation3 + $0x20] sm:$0xff] %v2467
          %2484 = vst [vmem:[#allocation3 + $0x28] sm:$0xff] %v2468
          %2485 = vst [vmem:[#allocation3 + $0x30] sm:$0xff] %v2469
          %2486 = vst [vmem:[#allocation3 + $0x38] sm:$0xff] %v2470
          %2487 = vst [vmem:[#allocation3 + $0x40] sm:$0xff] %v2471
          %2488 = vst [vmem:[#allocation3 + $0x48] sm:$0xff] %v2472
          %2489 = vst [vmem:[#allocation3 + $0x50] sm:$0xff] %v2473
          %2490 = vst [vmem:[#allocation3 + $0x58] sm:$0xff] %v2474
          %2491 = vst [vmem:[#allocation3 + $0x60] sm:$0xff] %v2475
          %2492 = vst [vmem:[#allocation3 + $0x68] sm:$0xff] %v2476
          %2493 = vst [vmem:[#allocation3 + $0x70] sm:$0xff] %v2477
          %2494 = vst [vmem:[#allocation3 + $0x78] sm:$0xff] %v2478
          %2495 = vst [vmem:[#allocation4] sm:$0x1] %v2260
        $region82: #{plastic_rollout.1} parent=39 // pred_fallthru
          _
        %p2496 = scmp.gt.s32.totalorder %s269, 7
        // Predicated region
        $region83: #{plastic_rollout.1} parent=39 // pred_check
          %p2497 = pneg %p2496
        $region84: #{plastic_rollout.1} parent=39 // pred_check_branch
          %2499 = sbr.rel (%p2497) target = $region86
        $region85: #{plastic_rollout.1} parent=39 // pred_region
          %v2500 = vld [vmem:[%s226 + $0x7] sm:$0x1]
          %v2501 = vld [vmem:[#allocation4] sm:$0x1]
          %v2502 = vld [vmem:[#allocation2] sm:$0xff]
          %v2503 = vld [vmem:[#allocation2 + $0x8] sm:$0xff]
          %v2504 = vld [vmem:[#allocation2 + $0x10] sm:$0xff]
          %v2505 = vld [vmem:[#allocation2 + $0x18] sm:$0xff]
          %v2506 = vld [vmem:[#allocation2 + $0x20] sm:$0xff]
          %v2507 = vld [vmem:[#allocation2 + $0x28] sm:$0xff]
          %v2508 = vld [vmem:[#allocation2 + $0x30] sm:$0xff]
          %v2509 = vld [vmem:[#allocation2 + $0x38] sm:$0xff]
          %v2510 = vld [vmem:[#allocation2 + $0x40] sm:$0xff]
          %v2511 = vld [vmem:[#allocation2 + $0x48] sm:$0xff]
          %v2512 = vld [vmem:[#allocation2 + $0x50] sm:$0xff]
          %v2513 = vld [vmem:[#allocation2 + $0x58] sm:$0xff]
          %v2514 = vld [vmem:[#allocation2 + $0x60] sm:$0xff]
          %v2515 = vld [vmem:[#allocation2 + $0x68] sm:$0xff]
          %v2516 = vld [vmem:[#allocation2 + $0x70] sm:$0xff]
          %v2517 = vld [vmem:[#allocation2 + $0x78] sm:$0xff]
          %v2518 = vld [vmem:[#allocation3] sm:$0xff]
          %v2519 = vld [vmem:[#allocation3 + $0x8] sm:$0xff]
          %v2520 = vld [vmem:[#allocation3 + $0x10] sm:$0xff]
          %v2521 = vld [vmem:[#allocation3 + $0x18] sm:$0xff]
          %v2522 = vld [vmem:[#allocation3 + $0x20] sm:$0xff]
          %v2523 = vld [vmem:[#allocation3 + $0x28] sm:$0xff]
          %v2524 = vld [vmem:[#allocation3 + $0x30] sm:$0xff]
          %v2525 = vld [vmem:[#allocation3 + $0x38] sm:$0xff]
          %v2526 = vld [vmem:[#allocation3 + $0x40] sm:$0xff]
          %v2527 = vld [vmem:[#allocation3 + $0x48] sm:$0xff]
          %v2528 = vld [vmem:[#allocation3 + $0x50] sm:$0xff]
          %v2529 = vld [vmem:[#allocation3 + $0x58] sm:$0xff]
          %v2530 = vld [vmem:[#allocation3 + $0x60] sm:$0xff]
          %v2531 = vld [vmem:[#allocation3 + $0x68] sm:$0xff]
          %v2532 = vld [vmem:[#allocation3 + $0x70] sm:$0xff]
          %v2533 = vld [vmem:[#allocation3 + $0x78] sm:$0xff]
          %2534 = vmatpush.msra.mxu0 %v2533
          %2535 = vmatpush.msra.mxu0 %v2532
          %2536 = vmatpush.msra.mxu0 %v2531
          %2537 = vmatpush.msra.mxu0 %v2530
          %2538 = vmatpush.msra.mxu0 %v2529
          %2539 = vmatpush.msra.mxu0 %v2528
          %2540 = vmatpush.msra.mxu0 %v2527
          %2541 = vmatpush.msra.mxu0 %v2526
          %2542 = vmatpush.msra.mxu0 %v2525
          %2543 = vmatpush.msra.mxu0 %v2524
          %2544 = vmatpush.msra.mxu0 %v2523
          %2545 = vmatpush.msra.mxu0 %v2522
          %2546 = vmatpush.msra.mxu0 %v2521
          %2547 = vmatpush.msra.mxu0 %v2520
          %2548 = vmatpush.msra.mxu0 %v2519
          %2549 = vmatpush.msra.mxu0 %v2518
          %2550 = vmatmul.f32.gmra.mxu0 %v2501
          %v2551 = vpop.f32.mrf.mxu0
          %v2552 = vadd.f32 0.0, %v2551
          %2553 = vdwg.mxu0
          %v2554 = vstv %s265
          %v2555 = vmul.f32 %v2554, %v2552
          %2556 = vmatpush.msra.mxu0 %v2517
          %2557 = vmatpush.msra.mxu0 %v2516
          %2558 = vmatpush.msra.mxu0 %v2515
          %2559 = vmatpush.msra.mxu0 %v2514
          %2560 = vmatpush.msra.mxu0 %v2513
          %2561 = vmatpush.msra.mxu0 %v2512
          %2562 = vmatpush.msra.mxu0 %v2511
          %2563 = vmatpush.msra.mxu0 %v2510
          %2564 = vmatpush.msra.mxu0 %v2509
          %2565 = vmatpush.msra.mxu0 %v2508
          %2566 = vmatpush.msra.mxu0 %v2507
          %2567 = vmatpush.msra.mxu0 %v2506
          %2568 = vmatpush.msra.mxu0 %v2505
          %2569 = vmatpush.msra.mxu0 %v2504
          %2570 = vmatpush.msra.mxu0 %v2503
          %2571 = vmatpush.msra.mxu0 %v2502
          %2572 = vmatmul.f32.gmra.mxu0 %v2501
          %v2573 = vpop.f32.mrf.mxu0
          %v2574 = vadd.f32 %v2555, %v2573
          %2575 = vdwg.mxu0
          %vm2576 = vcmp.ne.f32.partialorder %v2500, 0.0
          %v2577 = vtanh.pop %v2574
          %v2578 = vsel %vm2576, %v2500, %v2577
          %2579 = vst [vmem:[%s222 + $0x7] sm:$0x1] %v2578
          %2580 = vxpose.xlu0.b32.start [1/16] %v2501, 128
          %2581 = vxpose.xlu0.b32.cont [2/16] 0.0, 128
          %2582 = vxpose.xlu0.b32.cont [3/16] 0.0, 128
          %2583 = vxpose.xlu0.b32.cont [4/16] 0.0, 128
          %2584 = vxpose.xlu0.b32.cont [5/16] 0.0, 128
          %2585 = vxpose.xlu0.b32.cont [6/16] 0.0, 128
          %2586 = vxpose.xlu0.b32.cont [7/16] 0.0, 128
          %2587 = vxpose.xlu0.b32.cont [8/16] 0.0, 128
          %2588 = vxpose.xlu0.b32.cont [9/16] 0.0, 128
          %2589 = vxpose.xlu0.b32.cont [10/16] 0.0, 128
          %2590 = vxpose.xlu0.b32.cont [11/16] 0.0, 128
          %2591 = vxpose.xlu0.b32.cont [12/16] 0.0, 128
          %2592 = vxpose.xlu0.b32.cont [13/16] 0.0, 128
          %2593 = vxpose.xlu0.b32.cont [14/16] 0.0, 128
          %2594 = vxpose.xlu0.b32.cont [15/16] 0.0, 128
          %2595 = vxpose.xlu0.b32.end [16/16] 0.0, 128
          %v2596 = vpop.trf.xlu0
          %v2597 = vpop.trf.xlu0
          %v2598 = vpop.trf.xlu0
          %v2599 = vpop.trf.xlu0
          %v2600 = vpop.trf.xlu0
          %v2601 = vpop.trf.xlu0
          %v2602 = vpop.trf.xlu0
          %v2603 = vpop.trf.xlu0
          %v2604 = vpop.trf.xlu0
          %v2605 = vpop.trf.xlu0
          %v2606 = vpop.trf.xlu0
          %v2607 = vpop.trf.xlu0
          %v2608 = vpop.trf.xlu0
          %v2609 = vpop.trf.xlu0
          %v2610 = vpop.trf.xlu0
          %v2611 = vpop.trf.xlu0
          %vm2612 = vcmask 7168
          %v2614 = vsel %vm2612, %v2596, 0
          %v2617 = vsel %vm2612, %v2597, 0
          %v2620 = vsel %vm2612, %v2598, 0
          %v2623 = vsel %vm2612, %v2599, 0
          %v2626 = vsel %vm2612, %v2600, 0
          %v2629 = vsel %vm2612, %v2601, 0
          %v2632 = vsel %vm2612, %v2602, 0
          %v2635 = vsel %vm2612, %v2603, 0
          %v2638 = vsel %vm2612, %v2604, 0
          %v2641 = vsel %vm2612, %v2605, 0
          %v2644 = vsel %vm2612, %v2606, 0
          %v2647 = vsel %vm2612, %v2607, 0
          %v2650 = vsel %vm2612, %v2608, 0
          %v2653 = vsel %vm2612, %v2609, 0
          %v2656 = vsel %vm2612, %v2610, 0
          %v2659 = vsel %vm2612, %v2611, 0
          %vm2661 = vcmask 1040384
          %v2663 = vsel %vm2661, %v2578, 0
          %2665 = vmatpush.msra.mxu0 0.0
          %2666 = vmatpush.msra.mxu0 0.0
          %2667 = vmatpush.msra.mxu0 0.0
          %2668 = vmatpush.msra.mxu0 0.0
          %2669 = vmatpush.msra.mxu0 0.0
          %2670 = vmatpush.msra.mxu0 0.0
          %2671 = vmatpush.msra.mxu0 0.0
          %2672 = vmatpush.msra.mxu0 0.0
          %2673 = vmatpush.msra.mxu0 0.0
          %2674 = vmatpush.msra.mxu0 0.0
          %2675 = vmatpush.msra.mxu0 0.0
          %2676 = vmatpush.msra.mxu0 0.0
          %2677 = vmatpush.msra.mxu0 0.0
          %2678 = vmatpush.msra.mxu0 0.0
          %2679 = vmatpush.msra.mxu0 0.0
          %2680 = vmatpush.msra.mxu0 %v2663
          %2681 = vmatmul.f32.gmra.mxu0 %v2614
          %v2682 = vpop.f32.mrf.mxu0
          %v2683 = vadd.f32 0.0, %v2682
          %2684 = vmatmul.f32.gmra.mxu0 %v2617
          %v2685 = vpop.f32.mrf.mxu0
          %v2686 = vadd.f32 0.0, %v2685
          %2687 = vmatmul.f32.gmra.mxu0 %v2620
          %v2688 = vpop.f32.mrf.mxu0
          %v2689 = vadd.f32 0.0, %v2688
          %2690 = vmatmul.f32.gmra.mxu0 %v2623
          %v2691 = vpop.f32.mrf.mxu0
          %v2692 = vadd.f32 0.0, %v2691
          %2693 = vmatmul.f32.gmra.mxu0 %v2626
          %v2694 = vpop.f32.mrf.mxu0
          %v2695 = vadd.f32 0.0, %v2694
          %2696 = vmatmul.f32.gmra.mxu0 %v2629
          %v2697 = vpop.f32.mrf.mxu0
          %v2698 = vadd.f32 0.0, %v2697
          %2699 = vmatmul.f32.gmra.mxu0 %v2632
          %v2700 = vpop.f32.mrf.mxu0
          %v2701 = vadd.f32 0.0, %v2700
          %2702 = vmatmul.f32.gmra.mxu0 %v2635
          %v2703 = vpop.f32.mrf.mxu0
          %v2704 = vadd.f32 0.0, %v2703
          %2705 = vmatmul.f32.gmra.mxu0 %v2638
          %v2706 = vpop.f32.mrf.mxu0
          %v2707 = vadd.f32 0.0, %v2706
          %2708 = vmatmul.f32.gmra.mxu0 %v2641
          %v2709 = vpop.f32.mrf.mxu0
          %v2710 = vadd.f32 0.0, %v2709
          %2711 = vmatmul.f32.gmra.mxu0 %v2644
          %v2712 = vpop.f32.mrf.mxu0
          %v2713 = vadd.f32 0.0, %v2712
          %2714 = vmatmul.f32.gmra.mxu0 %v2647
          %v2715 = vpop.f32.mrf.mxu0
          %v2716 = vadd.f32 0.0, %v2715
          %2717 = vmatmul.f32.gmra.mxu0 %v2650
          %v2718 = vpop.f32.mrf.mxu0
          %v2719 = vadd.f32 0.0, %v2718
          %2720 = vmatmul.f32.gmra.mxu0 %v2653
          %v2721 = vpop.f32.mrf.mxu0
          %v2722 = vadd.f32 0.0, %v2721
          %2723 = vmatmul.f32.gmra.mxu0 %v2656
          %v2724 = vpop.f32.mrf.mxu0
          %v2725 = vadd.f32 0.0, %v2724
          %2726 = vmatmul.f32.gmra.mxu0 %v2659
          %v2727 = vpop.f32.mrf.mxu0
          %v2728 = vadd.f32 0.0, %v2727
          %2729 = vdwg.mxu0
          %s2730 = ssub.f32 1.0, %s266
          %v2731 = vld [vmem:[#allocation3] sm:$0xff]
          %v2732 = vld [vmem:[#allocation3 + $0x8] sm:$0xff]
          %v2733 = vld [vmem:[#allocation3 + $0x10] sm:$0xff]
          %v2734 = vld [vmem:[#allocation3 + $0x18] sm:$0xff]
          %v2735 = vld [vmem:[#allocation3 + $0x20] sm:$0xff]
          %v2736 = vld [vmem:[#allocation3 + $0x28] sm:$0xff]
          %v2737 = vld [vmem:[#allocation3 + $0x30] sm:$0xff]
          %v2738 = vld [vmem:[#allocation3 + $0x38] sm:$0xff]
          %v2739 = vld [vmem:[#allocation3 + $0x40] sm:$0xff]
          %v2740 = vld [vmem:[#allocation3 + $0x48] sm:$0xff]
          %v2741 = vld [vmem:[#allocation3 + $0x50] sm:$0xff]
          %v2742 = vld [vmem:[#allocation3 + $0x58] sm:$0xff]
          %v2743 = vld [vmem:[#allocation3 + $0x60] sm:$0xff]
          %v2744 = vld [vmem:[#allocation3 + $0x68] sm:$0xff]
          %v2745 = vld [vmem:[#allocation3 + $0x70] sm:$0xff]
          %v2746 = vld [vmem:[#allocation3 + $0x78] sm:$0xff]
          %v2747 = vstv %s2730
          %v2748 = vmul.f32 %v2747, %v2731
          %v2749 = vmul.f32 %v2747, %v2732
          %v2750 = vmul.f32 %v2747, %v2733
          %v2751 = vmul.f32 %v2747, %v2734
          %v2752 = vmul.f32 %v2747, %v2735
          %v2753 = vmul.f32 %v2747, %v2736
          %v2754 = vmul.f32 %v2747, %v2737
          %v2755 = vmul.f32 %v2747, %v2738
          %v2756 = vmul.f32 %v2747, %v2739
          %v2757 = vmul.f32 %v2747, %v2740
          %v2758 = vmul.f32 %v2747, %v2741
          %v2759 = vmul.f32 %v2747, %v2742
          %v2760 = vmul.f32 %v2747, %v2743
          %v2761 = vmul.f32 %v2747, %v2744
          %v2762 = vmul.f32 %v2747, %v2745
          %v2763 = vmul.f32 %v2747, %v2746
          %v2764 = vstv %s266
          %v2765 = vmul.f32 %v2764, %v2683
          %v2766 = vmul.f32 %v2764, %v2686
          %v2767 = vmul.f32 %v2764, %v2689
          %v2768 = vmul.f32 %v2764, %v2692
          %v2769 = vmul.f32 %v2764, %v2695
          %v2770 = vmul.f32 %v2764, %v2698
          %v2771 = vmul.f32 %v2764, %v2701
          %v2772 = vmul.f32 %v2764, %v2704
          %v2773 = vmul.f32 %v2764, %v2707
          %v2774 = vmul.f32 %v2764, %v2710
          %v2775 = vmul.f32 %v2764, %v2713
          %v2776 = vmul.f32 %v2764, %v2716
          %v2777 = vmul.f32 %v2764, %v2719
          %v2778 = vmul.f32 %v2764, %v2722
          %v2779 = vmul.f32 %v2764, %v2725
          %v2780 = vmul.f32 %v2764, %v2728
          %v2781 = vadd.f32 %v2748, %v2765
          %v2782 = vadd.f32 %v2749, %v2766
          %v2783 = vadd.f32 %v2750, %v2767
          %v2784 = vadd.f32 %v2751, %v2768
          %v2785 = vadd.f32 %v2752, %v2769
          %v2786 = vadd.f32 %v2753, %v2770
          %v2787 = vadd.f32 %v2754, %v2771
          %v2788 = vadd.f32 %v2755, %v2772
          %v2789 = vadd.f32 %v2756, %v2773
          %v2790 = vadd.f32 %v2757, %v2774
          %v2791 = vadd.f32 %v2758, %v2775
          %v2792 = vadd.f32 %v2759, %v2776
          %v2793 = vadd.f32 %v2760, %v2777
          %v2794 = vadd.f32 %v2761, %v2778
          %v2795 = vadd.f32 %v2762, %v2779
          %v2796 = vadd.f32 %v2763, %v2780
          %2797 = vst [vmem:[#allocation3] sm:$0xff] %v2781
          %2798 = vst [vmem:[#allocation3 + $0x8] sm:$0xff] %v2782
          %2799 = vst [vmem:[#allocation3 + $0x10] sm:$0xff] %v2783
          %2800 = vst [vmem:[#allocation3 + $0x18] sm:$0xff] %v2784
          %2801 = vst [vmem:[#allocation3 + $0x20] sm:$0xff] %v2785
          %2802 = vst [vmem:[#allocation3 + $0x28] sm:$0xff] %v2786
          %2803 = vst [vmem:[#allocation3 + $0x30] sm:$0xff] %v2787
          %2804 = vst [vmem:[#allocation3 + $0x38] sm:$0xff] %v2788
          %2805 = vst [vmem:[#allocation3 + $0x40] sm:$0xff] %v2789
          %2806 = vst [vmem:[#allocation3 + $0x48] sm:$0xff] %v2790
          %2807 = vst [vmem:[#allocation3 + $0x50] sm:$0xff] %v2791
          %2808 = vst [vmem:[#allocation3 + $0x58] sm:$0xff] %v2792
          %2809 = vst [vmem:[#allocation3 + $0x60] sm:$0xff] %v2793
          %2810 = vst [vmem:[#allocation3 + $0x68] sm:$0xff] %v2794
          %2811 = vst [vmem:[#allocation3 + $0x70] sm:$0xff] %v2795
          %2812 = vst [vmem:[#allocation3 + $0x78] sm:$0xff] %v2796
          %2813 = vst [vmem:[#allocation4] sm:$0x1] %v2578
        $region86: #{plastic_rollout.1} parent=39 // pred_fallthru
          _
        %p2814 = scmp.eq.s32.totalorder %s26, 1
        // Predicated region
        $region87: #{plastic_rollout.1} parent=39 // pred_check
          %p2815 = pneg %p2814
        $region88: #{plastic_rollout.1} parent=39 // pred_check_branch
          %2817 = sbr.rel (%p2815) target = $region90
        $region89: #{plastic_rollout.1} parent=39 // pred_region
          $region91: #{plastic_rollout.1} parent=89
            #allocation18 [shape = 's32[1]{0}', space=sflag, size = 0x4, scoped, tag = 'scoped memory for plastic_rollout.1']
            // Predicated region
            $region92: #{plastic_rollout.1} parent=91 // pred_check
              _
            $region93: #{plastic_rollout.1} parent=91 // pred_check_branch
              %2819 = sbr.rel target = $region95
            $region94: #{plastic_rollout.1} parent=91 // pred_region
              %2820 = sst [smem:[#allocation13]] [#allocation20]
              %2821 = sst [smem:[#allocation14]] [#allocation19]
            $region95: #{plastic_rollout.1} parent=91 // pred_fallthru
              _
            %2823 = shalt.err (0)
            %s2825 = sshll.u32 [#allocation3], 4
            %s2826 = int_to_ptr.vmem [resolvable:$true] %s2825
            %s2827 = sshll.u32 %s8, 4
            %s2828 = int_to_ptr.hbm [resolvable:$true] %s2827
            %2830 = dma.vmem_to_hbm [thread:$0]  %s2826, 2048, %s2828, [#allocation18]
            %s2831 = smul.u32 128, 1
            %s2832 = sshll.u32 %s2831, 4
            %2833 = dma.done [#allocation18], %s2832
        $region90: #{plastic_rollout.1} parent=39 // pred_fallthru
          _
        %s2834 = sand.u32 %s144, 1
        %s2835 = scalar_lea.sflag [#allocation9], %s2834
        %s2836 = sand.u32 %s144, 1
        %s2837 = smul.addr %s2836, 8
        %s2838 = scalar_lea.vmem [#allocation8], %s2837
        // Predicated region
        $region96: #{plastic_rollout.1} parent=39 // pred_check
          %p2839 = pneg %p154
        $region97: #{plastic_rollout.1} parent=39 // pred_check_branch
          %2841 = sbr.rel (%p2839) target = $region99
        $region98: #{plastic_rollout.1} parent=39 // pred_region
          %2843 = vsyncadd %s2835, 0
          %s2844 = smul.addr %s26, 8
          %s2845 = scalar_lea.hbm %s7, %s2844
          %s2847 = sshll.u32 %s2838, 4
          %s2848 = int_to_ptr.vmem [resolvable:$true] %s2847
          %s2849 = sshll.u32 %s2845, 4
          %s2850 = int_to_ptr.hbm [resolvable:$true] %s2849
          %2852 = dma.vmem_to_hbm [thread:$0]  %s2848, 128, %s2850, %s2835
        $region99: #{plastic_rollout.1} parent=39 // pred_fallthru
          _
      $region40: #{plastic_rollout.1} parent=5 // pred_fallthru
        _
      %p2853 = scmp.le.s32.totalorder 2, %s21
      // Predicated region
      $region100: #{plastic_rollout.1} parent=5 // pred_check
        %p2854 = pneg %p2853
      $region101: #{plastic_rollout.1} parent=5 // pred_check_branch
        %2856 = sbr.rel (%p2854) target = $region103
      $region102: #{plastic_rollout.1} parent=5 // pred_region
        %s2857 = ssub.s32 %s21, 2
        // Predicated region
        $region104: #{plastic_rollout.1} parent=102 // pred_check
          %p2858 = pneg %p160
        $region105: #{plastic_rollout.1} parent=102 // pred_check_branch
          %2860 = sbr.rel (%p2858) target = $region107
        $region106: #{plastic_rollout.1} parent=102 // pred_region
          %s2861 = sand.u32 %s145, 1
          %s2862 = scalar_lea.sflag [#allocation9], %s2861
          %s2863 = sand.u32 %s145, 1
          %s2864 = smul.addr %s2863, 8
          %s2865 = scalar_lea.vmem [#allocation8], %s2864
          %2867 = dma.done %s2862, 128
        $region107: #{plastic_rollout.1} parent=102 // pred_fallthru
          _
      $region103: #{plastic_rollout.1} parent=5 // pred_fallthru
        _
    $region6: #{plastic_rollout.1} parent=1 // loop_footer
      %s25 = sadd.s32 1, %s21
    $region7: #{plastic_rollout.1} parent=1 // loop_footer_branch
      %20 = sbr.rel target = $region3
    $region8: #{plastic_rollout.1} parent=1 // loop_exit
      _
    %2868 = vsyncpa [#allocation9], 1
    %s2869 = scalar_lea.sflag [#allocation9], 1
    %2870 = vsyncpa %s2869, 1

</llo_original>
